<compile_context>
chip_gen: v5e
topology: v5e:2x2
jax: 0.10.0
libtpu: 0.0.40
codegen_flags: <defaults>
</compile_context>

<pallas_src>
import functools

import jax
import jax.numpy as jnp
from jax.experimental import pallas as pl
from jax.experimental.pallas import tpu as pltpu

F32 = jnp.float32
BF16 = jnp.bfloat16


# ----------------------------------------------------------------------------
# In-kernel helpers
# ----------------------------------------------------------------------------

def _bdot(a, b):
    # bf16 operands into the MXU, f32 accumulation.
    return jnp.dot(a.astype(BF16), b.astype(BF16), preferred_element_type=F32)


def _erf_f32(x):
    # float32 erf (Eigen/XLA rational approximation) — matches XLA's f32 erf to rounding.
    x = jnp.clip(x, -4.0, 4.0)
    x2 = x * x
    p = jnp.float32(-2.72614225801306e-10)
    p = p * x2 + jnp.float32(2.77068142495902e-08)
    p = p * x2 + jnp.float32(-2.10102402082508e-06)
    p = p * x2 + jnp.float32(-5.69250639462346e-05)
    p = p * x2 + jnp.float32(-7.34990630326855e-04)
    p = p * x2 + jnp.float32(-2.95459980854025e-03)
    p = p * x2 + jnp.float32(-1.60960333262415e-02)
    q = jnp.float32(-1.45660718464996e-05)
    q = q * x2 + jnp.float32(-2.13374055278905e-04)
    q = q * x2 + jnp.float32(-1.68282697438203e-03)
    q = q * x2 + jnp.float32(-7.37332916720468e-03)
    q = q * x2 + jnp.float32(-1.42647390514189e-02)
    return x * p / q


def _gelu_exact(x):
    return 0.5 * x * (1.0 + _erf_f32(x * jnp.float32(0.7071067811865476)))


def _layernorm(x, eps=1e-5):
    mean = jnp.mean(x, axis=-1, keepdims=True)
    c = x - mean
    var = jnp.mean(c * c, axis=-1, keepdims=True)
    return c * jax.lax.rsqrt(var + eps)


# explicit vmem limit: safe on every generation (v7x physical VMEM is 64 MiB/TC)
_PARALLEL_B = pltpu.CompilerParams(
    dimension_semantics=("parallel",),
    vmem_limit_bytes=32 * 1024 * 1024,
)


# ----------------------------------------------------------------------------
# Fused attention block (all modalities, one pallas_call per transformer block)
# ----------------------------------------------------------------------------

def _attn_block_kernel(*refs, dims, seq_lens, heads, dim_head, scale):
    # refs layout: [tokens]*M, [attn_mod]*M, [post_gamma]*M, [W_qkv]*M, [W_out]*M, [out]*M
    m = len(dims)
    tok_refs = refs[0 * m:1 * m]
    mod_refs = refs[1 * m:2 * m]
    post_refs = refs[2 * m:3 * m]
    wqkv_refs = refs[3 * m:4 * m]
    wout_refs = refs[4 * m:5 * m]
    out_refs = refs[5 * m:6 * m]

    inner = heads * dim_head

    # --- adaptive LayerNorm + QKV projection per modality (trace-time unrolled) ---
    qkv_parts = []
    for i, d in enumerate(dims):
        t = tok_refs[i][0]                                   # (Ni, d) f32
        mod = mod_refs[i][0]                                 # (1, 2d) f32 (precomputed)
        gamma = mod[:, :d]
        beta = mod[:, d:]
        x = _layernorm(t) * gamma + beta
        qkv_parts.append(_bdot(x, wqkv_refs[i][...]))        # (Ni, 3*inner) f32
    qkv = qkv_parts[0] if m == 1 else jnp.concatenate(qkv_parts, axis=0)   # (Ntot, 3*inner)

    # --- joint attention over the concatenated sequence, all heads unrolled ---
    head_outs = []
    for h in range(heads):
        lo = h * dim_head
        hi = lo + dim_head
        q = (qkv[:, lo:hi] * jnp.float32(scale)).astype(BF16)          # scale folded into q
        k = qkv[:, inner + lo:inner + hi].astype(BF16)
        v = qkv[:, 2 * inner + lo:2 * inner + hi].astype(BF16)
        s = jax.lax.dot_general(
            q, k, dimension_numbers=(((1,), (1,)), ((), ())),
            preferred_element_type=F32)                                # (Ntot, Ntot)
        s = s - jnp.max(s, axis=-1, keepdims=True)
        p = jnp.exp(s)
        l = jnp.sum(p, axis=-1, keepdims=True)
        # fold the softmax normalization after p @ v (O(N*Dh) instead of O(N^2) divides)
        o_h = _bdot(p, v) * pl.reciprocal(l, approx=False)             # (Ntot, Dh)
        head_outs.append(o_h)
    o = head_outs[0] if heads == 1 else jnp.concatenate(head_outs, axis=-1)  # (Ntot, inner)

    # --- per-modality out-projection + post-branch gamma + residual add ---
    off = 0
    for i, (d, n) in enumerate(zip(dims, seq_lens)):
        o_i = o[off:off + n]                                 # static sublane slice
        off += n
        y = _bdot(o_i, wout_refs[i][...])                    # (n, d)
        out_refs[i][0] = y * post_refs[i][0] + tok_refs[i][0]


def attn_block(tokens, attn_mods, attn_postgs, wqkvs, wouts, *, heads, dim_head, scale):
    B = tokens[0].shape[0]
    dims = tuple(int(t.shape[-1]) for t in tokens)
    seq_lens = tuple(int(t.shape[1]) for t in tokens)

    in_specs, args = [], []
    for t in tokens:
        _, n, d = t.shape
        in_specs.append(pl.BlockSpec((1, n, d), lambda b: (b, 0, 0)))
        args.append(t)
    for mm in attn_mods:
        in_specs.append(pl.BlockSpec((1, 1, mm.shape[-1]), lambda b: (b, 0, 0)))
        args.append(mm)
    for g in attn_postgs:
        in_specs.append(pl.BlockSpec((1, 1, g.shape[-1]), lambda b: (b, 0, 0)))
        args.append(g)
    for w in wqkvs:
        in_specs.append(pl.BlockSpec(w.shape, lambda b: (0, 0)))
        args.append(w)
    for w in wouts:
        in_specs.append(pl.BlockSpec(w.shape, lambda b: (0, 0)))
        args.append(w)

    out_specs = [pl.BlockSpec((1, n, d), lambda b: (b, 0, 0))
                 for n, d in zip(seq_lens, dims)]
    out_shapes = tuple(jax.ShapeDtypeStruct((B, n, d), F32)
                       for n, d in zip(seq_lens, dims))

    kernel = functools.partial(_attn_block_kernel, dims=dims, seq_lens=seq_lens,
                               heads=heads, dim_head=dim_head, scale=scale)
    outs = pl.pallas_call(
        kernel,
        grid=(B,),
        in_specs=in_specs,
        out_specs=out_specs,
        out_shape=out_shapes,
        compiler_params=_PARALLEL_B,
    )(*args)
    return list(outs)


# ----------------------------------------------------------------------------
# Fused feedforward branch (adaLN -> Linear -> GELU -> Linear -> gamma -> residual)
# ----------------------------------------------------------------------------

def _ff_kernel(t_ref, mod_ref, postg_ref, w1_ref, b1_ref, w2_ref, b2_ref, out_ref):
    d = t_ref.shape[-1]
    t = t_ref[0]                                             # (N, d) f32
    mod = mod_ref[0]                                         # (1, 2d) f32 (precomputed)
    gamma = mod[:, :d]
    beta = mod[:, d:]
    x = _layernorm(t) * gamma + beta
    h = _bdot(x, w1_ref[...]) + b1_ref[...]                  # (N, 4d)
    h = _gelu_exact(h)
    y = _bdot(h, w2_ref[...]) + b2_ref[...]                  # (N, d)
    out_ref[0] = y * postg_ref[0] + t


def ff_fused(tokens, ff_mod, ff_postg, w1, b1, w2, b2):
    B, N, D = tokens.shape
    H = w1.shape[1]
    return pl.pallas_call(
        _ff_kernel,
        grid=(B,),
        in_specs=[
            pl.BlockSpec((1, N, D), lambda b: (b, 0, 0)),
            pl.BlockSpec((1, 1, 2 * D), lambda b: (b, 0, 0)),
            pl.BlockSpec((1, 1, D), lambda b: (b, 0, 0)),
            pl.BlockSpec(w1.shape, lambda b: (0, 0)),
            pl.BlockSpec((1, H), lambda b: (0, 0)),
            pl.BlockSpec(w2.shape, lambda b: (0, 0)),
            pl.BlockSpec((1, D), lambda b: (0, 0)),
        ],
        out_specs=pl.BlockSpec((1, N, D), lambda b: (b, 0, 0)),
        out_shape=jax.ShapeDtypeStruct((B, N, D), F32),
        compiler_params=_PARALLEL_B,
    )(tokens, ff_mod, ff_postg, w1, b1.reshape(1, H), w2, b2.reshape(1, D))


# ----------------------------------------------------------------------------
# Final RMSNorm
# ----------------------------------------------------------------------------

def _rmsnorm_kernel(x_ref, g_ref, o_ref, *, scale):
    # F.normalize(x, dim=-1) * sqrt(D) * (gamma + 1); gamma broadcast inside the kernel.
    x = x_ref[0]
    n = jnp.sqrt(jnp.sum(x * x, axis=-1, keepdims=True))
    n = jnp.maximum(n, 1e-12)
    o_ref[0] = (x / n) * jnp.float32(scale) * (g_ref[...] + 1.0)


def rmsnorm(x, gamma):
    B, N, D = x.shape
    return pl.pallas_call(
        functools.partial(_rmsnorm_kernel, scale=float(D) ** 0.5),
        grid=(B,),
        in_specs=[
            pl.BlockSpec((1, N, D), lambda b: (b, 0, 0)),
            pl.BlockSpec((1, D), lambda b: (0, 0)),
        ],
        out_specs=pl.BlockSpec((1, N, D), lambda b: (b, 0, 0)),
        out_shape=jax.ShapeDtypeStruct((B, N, D), F32),
        compiler_params=_PARALLEL_B,
    )(x, gamma.reshape(1, D))


# ----------------------------------------------------------------------------
# Parameters (deterministic, synthetic). Matmul weights stored in bf16 once.
# ----------------------------------------------------------------------------

def init_params(key, depth, dims, dim_cond, heads, dim_head, ff_mult=4):
    dim_inner = heads * dim_head
    keys = iter(jax.random.split(key, 4096))

    def nrm(shape, scale=0.05):
        return scale * jax.random.normal(next(keys), shape, dtype=F32)

    params = {"blocks": [], "rms_gammas": []}
    for _ in range(depth):
        blk = {"mods": []}
        for d in dims:
            blk["mods"].append(dict(
                # conditioning projections stay f32 (used in tiny XLA matmuls, once/block)
                W_aln=nrm((dim_cond, 2 * d)), b_aln=nrm((2 * d,)),
                W_fln=nrm((dim_cond, 2 * d)), b_fln=nrm((2 * d,)),
                # per-modality column slices of the block-level post-branch-gamma linear
                W_ga=nrm((dim_cond, d)), b_ga=nrm((d,)),
                W_gf=nrm((dim_cond, d)), b_gf=nrm((d,)),
                # MXU weights stored bf16 (halves weight DMA / VMEM; same numerics as the
                # previous in-kernel f32->bf16 cast)
                W_qkv=nrm((d, 3 * dim_inner)).astype(BF16),     # no bias (as in torch)
                W_out=nrm((dim_inner, d)).astype(BF16),         # no bias
                W1=nrm((d, ff_mult * d)).astype(BF16), b1=nrm((ff_mult * d,)),
                W2=nrm((ff_mult * d, d)).astype(BF16), b2=nrm((d,)),
            ))
        params["blocks"].append(blk)
    for d in dims:
        params["rms_gammas"].append(nrm((d,)))
    return params


# ----------------------------------------------------------------------------
# MMDiT forward (thin glue around the fused Pallas kernels)
# ----------------------------------------------------------------------------

def mmdit_forward(params, modality_tokens, time_cond, *, heads, dim_head):
    B = int(modality_tokens[0].shape[0])
    attn_scale = dim_head ** -0.5
    tokens = list(modality_tokens)

    # SiLU(cond) computed once; all per-block conditioning modulations are hoisted out of
    # the kernels (they are M=1 matmuls — MXU-starving and redundant inside grid steps).
    c = jax.nn.silu(time_cond)                               # (B, Dc) f32

    # num_residual_streams == 1 -> expand_streams / reduce_streams are identity
    for blk in params["blocks"]:
        mods = blk["mods"]
        attn_mods = [(c @ m["W_aln"] + m["b_aln"]).reshape(B, 1, -1) for m in mods]
        ff_mods = [(c @ m["W_fln"] + m["b_fln"]).reshape(B, 1, -1) for m in mods]
        attn_postgs = [(c @ m["W_ga"] + m["b_ga"]).reshape(B, 1, -1) for m in mods]
        ff_postgs = [(c @ m["W_gf"] + m["b_gf"]).reshape(B, 1, -1) for m in mods]

        # ---------------- attention branch: one fused pallas_call ----------------
        tokens = attn_block(
            tokens, attn_mods, attn_postgs,
            [m["W_qkv"] for m in mods], [m["W_out"] for m in mods],
            heads=heads, dim_head=dim_head, scale=attn_scale)

        # ---------------- feedforward branch (fused per modality) ----------------
        tokens = [ff_fused(t, fm, fg, m["W1"], m["b1"], m["W2"], m["b2"])
                  for t, fm, fg, m in zip(tokens, ff_mods, ff_postgs, mods)]

    # final per-modality RMSNorms
    return tuple(rmsnorm(t, g) for t, g in zip(tokens, params["rms_gammas"]))


# ----------------------------------------------------------------------------
# Main
# ----------------------------------------------------------------------------

if __name__ == "__main__":
    B = 2
    dim_modalities = (32, 64)
    seq_lens = (8, 16)
    dim_cond = 32
    heads, dim_head = 4, 16
    depth = 2

    key = jax.random.PRNGKey(0)
    k_text, k_img, k_cond, k_param = jax.random.split(key, 4)
    text_tokens = jax.random.normal(k_text, (B, seq_lens[0], dim_modalities[0]), F32)
    image_tokens = jax.random.normal(k_img, (B, seq_lens[1], dim_modalities[1]), F32)
    time_cond = jax.random.normal(k_cond, (B, dim_cond), F32)

    params = init_params(k_param, depth, dim_modalities, dim_cond, heads, dim_head)

    fwd = jax.jit(functools.partial(mmdit_forward, heads=heads, dim_head=dim_head))
    outs = fwd(params, (text_tokens, image_tokens), time_cond)
    for o in outs:
        jax.block_until_ready(o)

    assert outs[0].shape == (B, seq_lens[0], dim_modalities[0])
    assert outs[1].shape == (B, seq_lens[1], dim_modalities[1])
    assert all(bool(jnp.all(jnp.isfinite(o))) for o in outs)
    print("KERNEL_OK")
</pallas_src>

<mosaic_0001>
module attributes {stable_mosaic.version = 11 : i64} {
  func.func @_ff_kernel(%arg0: i32, %arg1: memref<1x8x32xf32, #tpu.memory_space<vmem>>, %arg2: memref<1x1x64xf32, #tpu.memory_space<vmem>>, %arg3: memref<1x1x32xf32, #tpu.memory_space<vmem>>, %arg4: memref<32x128xbf16, #tpu.memory_space<vmem>>, %arg5: memref<1x128xf32, #tpu.memory_space<vmem>>, %arg6: memref<128x32xbf16, #tpu.memory_space<vmem>>, %arg7: memref<1x32xf32, #tpu.memory_space<vmem>>, %arg8: memref<1x8x32xf32, #tpu.memory_space<vmem>>) attributes {dimension_semantics = [#tpu.dimension_semantics<parallel>], iteration_bounds = array<i64: 2>, scalar_prefetch = 0 : i64, scratch_operands = 0 : i64, tpu.core_type = #tpu.core_type<tc>, window_params = [{transform_indices = @transform_0, window_bounds = array<i64: 1, 8, 32>}, {transform_indices = @transform_1, window_bounds = array<i64: 1, 1, 64>}, {transform_indices = @transform_2, window_bounds = array<i64: 1, 1, 32>}, {pipeline_mode = #tpu.pipeline_mode<synchronous>, transform_indices = @transform_3, window_bounds = array<i64: 32, 128>}, {pipeline_mode = #tpu.pipeline_mode<synchronous>, transform_indices = @transform_4, window_bounds = array<i64: 1, 128>}, {pipeline_mode = #tpu.pipeline_mode<synchronous>, transform_indices = @transform_5, window_bounds = array<i64: 128, 32>}, {pipeline_mode = #tpu.pipeline_mode<synchronous>, transform_indices = @transform_6, window_bounds = array<i64: 1, 32>}, {transform_indices = @transform_7, window_bounds = array<i64: 1, 8, 32>}]} {
    %c0 = arith.constant 0 : index
    %c0_0 = arith.constant 0 : index
    %c0_1 = arith.constant 0 : index
    %0 = vector.load %arg1[%c0, %c0_0, %c0_1] : memref<1x8x32xf32, #tpu.memory_space<vmem>>, vector<1x8x32xf32>
    %1 = vector.shape_cast %0 : vector<1x8x32xf32> to vector<8x32xf32>
    %c0_2 = arith.constant 0 : index
    %c0_3 = arith.constant 0 : index
    %c0_4 = arith.constant 0 : index
    %2 = vector.load %arg2[%c0_2, %c0_3, %c0_4] : memref<1x1x64xf32, #tpu.memory_space<vmem>>, vector<1x1x64xf32>
    %3 = vector.shape_cast %2 : vector<1x1x64xf32> to vector<1x64xf32>
    %4 = vector.extract_strided_slice %3 {offsets = [0, 0], sizes = [1, 32], strides = [1, 1]} : vector<1x64xf32> to vector<1x32xf32>
    %5 = vector.extract_strided_slice %3 {offsets = [0, 32], sizes = [1, 32], strides = [1, 1]} : vector<1x64xf32> to vector<1x32xf32>
    %cst = arith.constant dense<0.000000e+00> : vector<8xf32>
    %6 = vector.multi_reduction <add>, %1, %cst [1] : vector<8x32xf32> to vector<8xf32>
    %7 = vector.shape_cast %6 : vector<8xf32> to vector<8x1xf32>
    %cst_5 = arith.constant 3.200000e+01 : f32
    %8 = vector.broadcast %cst_5 : f32 to vector<8x1xf32>
    %9 = arith.divf %7, %8 : vector<8x1xf32>
    %10 = vector.broadcast %9 : vector<8x1xf32> to vector<8x32xf32>
    %11 = arith.subf %1, %10 : vector<8x32xf32>
    %12 = arith.mulf %11, %11 : vector<8x32xf32>
    %cst_6 = arith.constant dense<0.000000e+00> : vector<8xf32>
    %13 = vector.multi_reduction <add>, %12, %cst_6 [1] : vector<8x32xf32> to vector<8xf32>
    %14 = vector.shape_cast %13 : vector<8xf32> to vector<8x1xf32>
    %cst_7 = arith.constant 3.200000e+01 : f32
    %15 = vector.broadcast %cst_7 : f32 to vector<8x1xf32>
    %16 = arith.divf %14, %15 : vector<8x1xf32>
    %cst_8 = arith.constant 9.99999974E-6 : f32
    %17 = vector.broadcast %cst_8 : f32 to vector<8x1xf32>
    %18 = arith.addf %16, %17 : vector<8x1xf32>
    %19 = math.rsqrt %18 : vector<8x1xf32>
    %20 = vector.broadcast %19 : vector<8x1xf32> to vector<8x32xf32>
    %21 = arith.mulf %11, %20 : vector<8x32xf32>
    %22 = vector.broadcast %4 : vector<1x32xf32> to vector<8x32xf32>
    %23 = arith.mulf %21, %22 : vector<8x32xf32>
    %24 = vector.broadcast %5 : vector<1x32xf32> to vector<8x32xf32>
    %25 = arith.addf %23, %24 : vector<8x32xf32>
    %c0_9 = arith.constant 0 : index
    %c0_10 = arith.constant 0 : index
    %26 = vector.load %arg4[%c0_9, %c0_10] : memref<32x128xbf16, #tpu.memory_space<vmem>>, vector<32x128xbf16>
    %27 = arith.truncf %25 : vector<8x32xf32> to vector<8x32xbf16>
    %cst_11 = arith.constant dense<0.000000e+00> : vector<8x128xf32>
    %28 = tpu.matmul %27, %26, %cst_11 {dimension_numbers = #tpu.dot_dimension_numbers<[1], [0], [0], [1], [0, 0, 1, 1], [], []>} : vector<8x32xbf16>, vector<32x128xbf16>, vector<8x128xf32> -> vector<8x128xf32>
    %c0_12 = arith.constant 0 : index
    %c0_13 = arith.constant 0 : index
    %29 = vector.load %arg5[%c0_12, %c0_13] : memref<1x128xf32, #tpu.memory_space<vmem>>, vector<1x128xf32>
    %30 = vector.broadcast %29 : vector<1x128xf32> to vector<8x128xf32>
    %31 = arith.addf %28, %30 : vector<8x128xf32>
    %cst_14 = arith.constant 5.000000e-01 : f32
    %32 = vector.broadcast %cst_14 : f32 to vector<8x128xf32>
    %33 = arith.mulf %32, %31 : vector<8x128xf32>
    %cst_15 = arith.constant 0.707106769 : f32
    %34 = vector.broadcast %cst_15 : f32 to vector<8x128xf32>
    %35 = arith.mulf %31, %34 : vector<8x128xf32>
    %cst_16 = arith.constant -4.000000e+00 : f32
    %cst_17 = arith.constant 4.000000e+00 : f32
    %36 = vector.broadcast %cst_16 : f32 to vector<8x128xf32>
    %37 = arith.maximumf %36, %35 : vector<8x128xf32>
    %38 = vector.broadcast %cst_17 : f32 to vector<8x128xf32>
    %39 = arith.minimumf %38, %37 : vector<8x128xf32>
    %40 = arith.mulf %39, %39 : vector<8x128xf32>
    %cst_18 = arith.constant -2.72614237E-10 : f32
    %41 = vector.broadcast %cst_18 : f32 to vector<8x128xf32>
    %42 = arith.mulf %41, %40 : vector<8x128xf32>
    %cst_19 = arith.constant 2.77068146E-8 : f32
    %43 = vector.broadcast %cst_19 : f32 to vector<8x128xf32>
    %44 = arith.addf %42, %43 : vector<8x128xf32>
    %45 = arith.mulf %44, %40 : vector<8x128xf32>
    %cst_20 = arith.constant -2.10102394E-6 : f32
    %46 = vector.broadcast %cst_20 : f32 to vector<8x128xf32>
    %47 = arith.addf %45, %46 : vector<8x128xf32>
    %48 = arith.mulf %47, %40 : vector<8x128xf32>
    %cst_21 = arith.constant -5.69250624E-5 : f32
    %49 = vector.broadcast %cst_21 : f32 to vector<8x128xf32>
    %50 = arith.addf %48, %49 : vector<8x128xf32>
    %51 = arith.mulf %50, %40 : vector<8x128xf32>
    %cst_22 = arith.constant -7.34990637E-4 : f32
    %52 = vector.broadcast %cst_22 : f32 to vector<8x128xf32>
    %53 = arith.addf %51, %52 : vector<8x128xf32>
    %54 = arith.mulf %53, %40 : vector<8x128xf32>
    %cst_23 = arith.constant -2.954600e-03 : f32
    %55 = vector.broadcast %cst_23 : f32 to vector<8x128xf32>
    %56 = arith.addf %54, %55 : vector<8x128xf32>
    %57 = arith.mulf %56, %40 : vector<8x128xf32>
    %cst_24 = arith.constant -0.0160960332 : f32
    %58 = vector.broadcast %cst_24 : f32 to vector<8x128xf32>
    %59 = arith.addf %57, %58 : vector<8x128xf32>
    %cst_25 = arith.constant -1.45660715E-5 : f32
    %60 = vector.broadcast %cst_25 : f32 to vector<8x128xf32>
    %61 = arith.mulf %60, %40 : vector<8x128xf32>
    %cst_26 = arith.constant -2.13374049E-4 : f32
    %62 = vector.broadcast %cst_26 : f32 to vector<8x128xf32>
    %63 = arith.addf %61, %62 : vector<8x128xf32>
    %64 = arith.mulf %63, %40 : vector<8x128xf32>
    %cst_27 = arith.constant -0.00168282702 : f32
    %65 = vector.broadcast %cst_27 : f32 to vector<8x128xf32>
    %66 = arith.addf %64, %65 : vector<8x128xf32>
    %67 = arith.mulf %66, %40 : vector<8x128xf32>
    %cst_28 = arith.constant -0.00737332925 : f32
    %68 = vector.broadcast %cst_28 : f32 to vector<8x128xf32>
    %69 = arith.addf %67, %68 : vector<8x128xf32>
    %70 = arith.mulf %69, %40 : vector<8x128xf32>
    %cst_29 = arith.constant -0.0142647391 : f32
    %71 = vector.broadcast %cst_29 : f32 to vector<8x128xf32>
    %72 = arith.addf %70, %71 : vector<8x128xf32>
    %73 = arith.mulf %39, %59 : vector<8x128xf32>
    %74 = arith.divf %73, %72 : vector<8x128xf32>
    %cst_30 = arith.constant 1.000000e+00 : f32
    %75 = vector.broadcast %cst_30 : f32 to vector<8x128xf32>
    %76 = arith.addf %75, %74 : vector<8x128xf32>
    %77 = arith.mulf %33, %76 : vector<8x128xf32>
    %c0_31 = arith.constant 0 : index
    %c0_32 = arith.constant 0 : index
    %78 = vector.load %arg6[%c0_31, %c0_32] : memref<128x32xbf16, #tpu.memory_space<vmem>>, vector<128x32xbf16>
    %79 = arith.truncf %77 : vector<8x128xf32> to vector<8x128xbf16>
    %cst_33 = arith.constant dense<0.000000e+00> : vector<8x32xf32>
    %80 = tpu.matmul %79, %78, %cst_33 {dimension_numbers = #tpu.dot_dimension_numbers<[1], [0], [0], [1], [0, 0, 1, 1], [], []>} : vector<8x128xbf16>, vector<128x32xbf16>, vector<8x32xf32> -> vector<8x32xf32>
    %c0_34 = arith.constant 0 : index
    %c0_35 = arith.constant 0 : index
    %81 = vector.load %arg7[%c0_34, %c0_35] : memref<1x32xf32, #tpu.memory_space<vmem>>, vector<1x32xf32>
    %82 = vector.broadcast %81 : vector<1x32xf32> to vector<8x32xf32>
    %83 = arith.addf %80, %82 : vector<8x32xf32>
    %c0_36 = arith.constant 0 : index
    %c0_37 = arith.constant 0 : index
    %c0_38 = arith.constant 0 : index
    %84 = vector.load %arg3[%c0_36, %c0_37, %c0_38] : memref<1x1x32xf32, #tpu.memory_space<vmem>>, vector<1x1x32xf32>
    %85 = vector.shape_cast %84 : vector<1x1x32xf32> to vector<1x32xf32>
    %86 = vector.broadcast %85 : vector<1x32xf32> to vector<8x32xf32>
    %87 = arith.mulf %83, %86 : vector<8x32xf32>
    %88 = arith.addf %87, %1 : vector<8x32xf32>
    %c0_39 = arith.constant 0 : index
    %c0_40 = arith.constant 0 : index
    %c0_41 = arith.constant 0 : index
    %89 = vector.load %arg8[%c0_39, %c0_40, %c0_41] : memref<1x8x32xf32, #tpu.memory_space<vmem>>, vector<1x8x32xf32>
    %90 = vector.shape_cast %89 : vector<1x8x32xf32> to vector<8x32xf32>
    %91 = vector.shape_cast %88 : vector<8x32xf32> to vector<1x8x32xf32>
    tpu.vector_store %arg8[%c0_39, %c0_40, %c0_41], %91 {strides = array<i32>} : memref<1x8x32xf32, #tpu.memory_space<vmem>>, vector<1x8x32xf32>,
    return
  }
  func.func @transform_0(%arg0: i32) -> (i32, i32, i32) {
    %c0_i32 = arith.constant 0 : i32
    %c0_i32_0 = arith.constant 0 : i32
    %c0_i32_1 = arith.constant 0 : i32
    return %arg0, %c0_i32, %c0_i32_0 : i32, i32, i32
  }
  func.func @transform_1(%arg0: i32) -> (i32, i32, i32) {
    %c0_i32 = arith.constant 0 : i32
    %c0_i32_0 = arith.constant 0 : i32
    %c0_i32_1 = arith.constant 0 : i32
    return %arg0, %c0_i32, %c0_i32_0 : i32, i32, i32
  }
  func.func @transform_2(%arg0: i32) -> (i32, i32, i32) {
    %c0_i32 = arith.constant 0 : i32
    %c0_i32_0 = arith.constant 0 : i32
    %c0_i32_1 = arith.constant 0 : i32
    return %arg0, %c0_i32, %c0_i32_0 : i32, i32, i32
  }
  func.func @transform_3(%arg0: i32) -> (i32, i32) {
    %c0_i32 = arith.constant 0 : i32
    %c0_i32_0 = arith.constant 0 : i32
    %c0_i32_1 = arith.constant 0 : i32
    return %c0_i32, %c0_i32_0 : i32, i32
  }
  func.func @transform_4(%arg0: i32) -> (i32, i32) {
    %c0_i32 = arith.constant 0 : i32
    %c0_i32_0 = arith.constant 0 : i32
    %c0_i32_1 = arith.constant 0 : i32
    return %c0_i32, %c0_i32_0 : i32, i32
  }
  func.func @transform_5(%arg0: i32) -> (i32, i32) {
    %c0_i32 = arith.constant 0 : i32
    %c0_i32_0 = arith.constant 0 : i32
    %c0_i32_1 = arith.constant 0 : i32
    return %c0_i32, %c0_i32_0 : i32, i32
  }
  func.func @transform_6(%arg0: i32) -> (i32, i32) {
    %c0_i32 = arith.constant 0 : i32
    %c0_i32_0 = arith.constant 0 : i32
    %c0_i32_1 = arith.constant 0 : i32
    return %c0_i32, %c0_i32_0 : i32, i32
  }
  func.func @transform_7(%arg0: i32) -> (i32, i32, i32) {
    %c0_i32 = arith.constant 0 : i32
    %c0_i32_0 = arith.constant 0 : i32
    %c0_i32_1 = arith.constant 0 : i32
    return %arg0, %c0_i32, %c0_i32_0 : i32, i32, i32
  }
}

module attributes {stable_mosaic.version = 11 : i64} {
  func.func @_ff_kernel(%arg0: i32, %arg1: memref<1x16x64xf32, #tpu.memory_space<vmem>>, %arg2: memref<1x1x128xf32, #tpu.memory_space<vmem>>, %arg3: memref<1x1x64xf32, #tpu.memory_space<vmem>>, %arg4: memref<64x256xbf16, #tpu.memory_space<vmem>>, %arg5: memref<1x256xf32, #tpu.memory_space<vmem>>, %arg6: memref<256x64xbf16, #tpu.memory_space<vmem>>, %arg7: memref<1x64xf32, #tpu.memory_space<vmem>>, %arg8: memref<1x16x64xf32, #tpu.memory_space<vmem>>) attributes {dimension_semantics = [#tpu.dimension_semantics<parallel>], iteration_bounds = array<i64: 2>, scalar_prefetch = 0 : i64, scratch_operands = 0 : i64, tpu.core_type = #tpu.core_type<tc>, window_params = [{transform_indices = @transform_0, window_bounds = array<i64: 1, 16, 64>}, {transform_indices = @transform_1, window_bounds = array<i64: 1, 1, 128>}, {transform_indices = @transform_2, window_bounds = array<i64: 1, 1, 64>}, {pipeline_mode = #tpu.pipeline_mode<synchronous>, transform_indices = @transform_3, window_bounds = array<i64: 64, 256>}, {pipeline_mode = #tpu.pipeline_mode<synchronous>, transform_indices = @transform_4, window_bounds = array<i64: 1, 256>}, {pipeline_mode = #tpu.pipeline_mode<synchronous>, transform_indices = @transform_5, window_bounds = array<i64: 256, 64>}, {pipeline_mode = #tpu.pipeline_mode<synchronous>, transform_indices = @transform_6, window_bounds = array<i64: 1, 64>}, {transform_indices = @transform_7, window_bounds = array<i64: 1, 16, 64>}]} {
    %c0 = arith.constant 0 : index
    %c0_0 = arith.constant 0 : index
    %c0_1 = arith.constant 0 : index
    %0 = vector.load %arg1[%c0, %c0_0, %c0_1] : memref<1x16x64xf32, #tpu.memory_space<vmem>>, vector<1x16x64xf32>
    %1 = vector.shape_cast %0 : vector<1x16x64xf32> to vector<16x64xf32>
    %c0_2 = arith.constant 0 : index
    %c0_3 = arith.constant 0 : index
    %c0_4 = arith.constant 0 : index
    %2 = vector.load %arg2[%c0_2, %c0_3, %c0_4] : memref<1x1x128xf32, #tpu.memory_space<vmem>>, vector<1x1x128xf32>
    %3 = vector.shape_cast %2 : vector<1x1x128xf32> to vector<1x128xf32>
    %4 = vector.extract_strided_slice %3 {offsets = [0, 0], sizes = [1, 64], strides = [1, 1]} : vector<1x128xf32> to vector<1x64xf32>
    %5 = vector.extract_strided_slice %3 {offsets = [0, 64], sizes = [1, 64], strides = [1, 1]} : vector<1x128xf32> to vector<1x64xf32>
    %cst = arith.constant dense<0.000000e+00> : vector<16xf32>
    %6 = vector.multi_reduction <add>, %1, %cst [1] : vector<16x64xf32> to vector<16xf32>
    %7 = vector.shape_cast %6 : vector<16xf32> to vector<16x1xf32>
    %cst_5 = arith.constant 6.400000e+01 : f32
    %8 = vector.broadcast %cst_5 : f32 to vector<16x1xf32>
    %9 = arith.divf %7, %8 : vector<16x1xf32>
    %10 = vector.broadcast %9 : vector<16x1xf32> to vector<16x64xf32>
    %11 = arith.subf %1, %10 : vector<16x64xf32>
    %12 = arith.mulf %11, %11 : vector<16x64xf32>
    %cst_6 = arith.constant dense<0.000000e+00> : vector<16xf32>
    %13 = vector.multi_reduction <add>, %12, %cst_6 [1] : vector<16x64xf32> to vector<16xf32>
    %14 = vector.shape_cast %13 : vector<16xf32> to vector<16x1xf32>
    %cst_7 = arith.constant 6.400000e+01 : f32
    %15 = vector.broadcast %cst_7 : f32 to vector<16x1xf32>
    %16 = arith.divf %14, %15 : vector<16x1xf32>
    %cst_8 = arith.constant 9.99999974E-6 : f32
    %17 = vector.broadcast %cst_8 : f32 to vector<16x1xf32>
    %18 = arith.addf %16, %17 : vector<16x1xf32>
    %19 = math.rsqrt %18 : vector<16x1xf32>
    %20 = vector.broadcast %19 : vector<16x1xf32> to vector<16x64xf32>
    %21 = arith.mulf %11, %20 : vector<16x64xf32>
    %22 = vector.broadcast %4 : vector<1x64xf32> to vector<16x64xf32>
    %23 = arith.mulf %21, %22 : vector<16x64xf32>
    %24 = vector.broadcast %5 : vector<1x64xf32> to vector<16x64xf32>
    %25 = arith.addf %23, %24 : vector<16x64xf32>
    %c0_9 = arith.constant 0 : index
    %c0_10 = arith.constant 0 : index
    %26 = vector.load %arg4[%c0_9, %c0_10] : memref<64x256xbf16, #tpu.memory_space<vmem>>, vector<64x256xbf16>
    %27 = arith.truncf %25 : vector<16x64xf32> to vector<16x64xbf16>
    %cst_11 = arith.constant dense<0.000000e+00> : vector<16x256xf32>
    %28 = tpu.matmul %27, %26, %cst_11 {dimension_numbers = #tpu.dot_dimension_numbers<[1], [0], [0], [1], [0, 0, 1, 1], [], []>} : vector<16x64xbf16>, vector<64x256xbf16>, vector<16x256xf32> -> vector<16x256xf32>
    %c0_12 = arith.constant 0 : index
    %c0_13 = arith.constant 0 : index
    %29 = vector.load %arg5[%c0_12, %c0_13] : memref<1x256xf32, #tpu.memory_space<vmem>>, vector<1x256xf32>
    %30 = vector.broadcast %29 : vector<1x256xf32> to vector<16x256xf32>
    %31 = arith.addf %28, %30 : vector<16x256xf32>
    %cst_14 = arith.constant 5.000000e-01 : f32
    %32 = vector.broadcast %cst_14 : f32 to vector<16x256xf32>
    %33 = arith.mulf %32, %31 : vector<16x256xf32>
    %cst_15 = arith.constant 0.707106769 : f32
    %34 = vector.broadcast %cst_15 : f32 to vector<16x256xf32>
    %35 = arith.mulf %31, %34 : vector<16x256xf32>
    %cst_16 = arith.constant -4.000000e+00 : f32
    %cst_17 = arith.constant 4.000000e+00 : f32
    %36 = vector.broadcast %cst_16 : f32 to vector<16x256xf32>
    %37 = arith.maximumf %36, %35 : vector<16x256xf32>
    %38 = vector.broadcast %cst_17 : f32 to vector<16x256xf32>
    %39 = arith.minimumf %38, %37 : vector<16x256xf32>
    %40 = arith.mulf %39, %39 : vector<16x256xf32>
    %cst_18 = arith.constant -2.72614237E-10 : f32
    %41 = vector.broadcast %cst_18 : f32 to vector<16x256xf32>
    %42 = arith.mulf %41, %40 : vector<16x256xf32>
    %cst_19 = arith.constant 2.77068146E-8 : f32
    %43 = vector.broadcast %cst_19 : f32 to vector<16x256xf32>
    %44 = arith.addf %42, %43 : vector<16x256xf32>
    %45 = arith.mulf %44, %40 : vector<16x256xf32>
    %cst_20 = arith.constant -2.10102394E-6 : f32
    %46 = vector.broadcast %cst_20 : f32 to vector<16x256xf32>
    %47 = arith.addf %45, %46 : vector<16x256xf32>
    %48 = arith.mulf %47, %40 : vector<16x256xf32>
    %cst_21 = arith.constant -5.69250624E-5 : f32
    %49 = vector.broadcast %cst_21 : f32 to vector<16x256xf32>
    %50 = arith.addf %48, %49 : vector<16x256xf32>
    %51 = arith.mulf %50, %40 : vector<16x256xf32>
    %cst_22 = arith.constant -7.34990637E-4 : f32
    %52 = vector.broadcast %cst_22 : f32 to vector<16x256xf32>
    %53 = arith.addf %51, %52 : vector<16x256xf32>
    %54 = arith.mulf %53, %40 : vector<16x256xf32>
    %cst_23 = arith.constant -2.954600e-03 : f32
    %55 = vector.broadcast %cst_23 : f32 to vector<16x256xf32>
    %56 = arith.addf %54, %55 : vector<16x256xf32>
    %57 = arith.mulf %56, %40 : vector<16x256xf32>
    %cst_24 = arith.constant -0.0160960332 : f32
    %58 = vector.broadcast %cst_24 : f32 to vector<16x256xf32>
    %59 = arith.addf %57, %58 : vector<16x256xf32>
    %cst_25 = arith.constant -1.45660715E-5 : f32
    %60 = vector.broadcast %cst_25 : f32 to vector<16x256xf32>
    %61 = arith.mulf %60, %40 : vector<16x256xf32>
    %cst_26 = arith.constant -2.13374049E-4 : f32
    %62 = vector.broadcast %cst_26 : f32 to vector<16x256xf32>
    %63 = arith.addf %61, %62 : vector<16x256xf32>
    %64 = arith.mulf %63, %40 : vector<16x256xf32>
    %cst_27 = arith.constant -0.00168282702 : f32
    %65 = vector.broadcast %cst_27 : f32 to vector<16x256xf32>
    %66 = arith.addf %64, %65 : vector<16x256xf32>
    %67 = arith.mulf %66, %40 : vector<16x256xf32>
    %cst_28 = arith.constant -0.00737332925 : f32
    %68 = vector.broadcast %cst_28 : f32 to vector<16x256xf32>
    %69 = arith.addf %67, %68 : vector<16x256xf32>
    %70 = arith.mulf %69, %40 : vector<16x256xf32>
    %cst_29 = arith.constant -0.0142647391 : f32
    %71 = vector.broadcast %cst_29 : f32 to vector<16x256xf32>
    %72 = arith.addf %70, %71 : vector<16x256xf32>
    %73 = arith.mulf %39, %59 : vector<16x256xf32>
    %74 = arith.divf %73, %72 : vector<16x256xf32>
    %cst_30 = arith.constant 1.000000e+00 : f32
    %75 = vector.broadcast %cst_30 : f32 to vector<16x256xf32>
    %76 = arith.addf %75, %74 : vector<16x256xf32>
    %77 = arith.mulf %33, %76 : vector<16x256xf32>
    %c0_31 = arith.constant 0 : index
    %c0_32 = arith.constant 0 : index
    %78 = vector.load %arg6[%c0_31, %c0_32] : memref<256x64xbf16, #tpu.memory_space<vmem>>, vector<256x64xbf16>
    %79 = arith.truncf %77 : vector<16x256xf32> to vector<16x256xbf16>
    %cst_33 = arith.constant dense<0.000000e+00> : vector<16x64xf32>
    %80 = tpu.matmul %79, %78, %cst_33 {dimension_numbers = #tpu.dot_dimension_numbers<[1], [0], [0], [1], [0, 0, 1, 1], [], []>} : vector<16x256xbf16>, vector<256x64xbf16>, vector<16x64xf32> -> vector<16x64xf32>
    %c0_34 = arith.constant 0 : index
    %c0_35 = arith.constant 0 : index
    %81 = vector.load %arg7[%c0_34, %c0_35] : memref<1x64xf32, #tpu.memory_space<vmem>>, vector<1x64xf32>
    %82 = vector.broadcast %81 : vector<1x64xf32> to vector<16x64xf32>
    %83 = arith.addf %80, %82 : vector<16x64xf32>
    %c0_36 = arith.constant 0 : index
    %c0_37 = arith.constant 0 : index
    %c0_38 = arith.constant 0 : index
    %84 = vector.load %arg3[%c0_36, %c0_37, %c0_38] : memref<1x1x64xf32, #tpu.memory_space<vmem>>, vector<1x1x64xf32>
    %85 = vector.shape_cast %84 : vector<1x1x64xf32> to vector<1x64xf32>
    %86 = vector.broadcast %85 : vector<1x64xf32> to vector<16x64xf32>
    %87 = arith.mulf %83, %86 : vector<16x64xf32>
    %88 = arith.addf %87, %1 : vector<16x64xf32>
    %c0_39 = arith.constant 0 : index
    %c0_40 = arith.constant 0 : index
    %c0_41 = arith.constant 0 : index
    %89 = vector.load %arg8[%c0_39, %c0_40, %c0_41] : memref<1x16x64xf32, #tpu.memory_space<vmem>>, vector<1x16x64xf32>
    %90 = vector.shape_cast %89 : vector<1x16x64xf32> to vector<16x64xf32>
    %91 = vector.shape_cast %88 : vector<16x64xf32> to vector<1x16x64xf32>
    tpu.vector_store %arg8[%c0_39, %c0_40, %c0_41], %91 {strides = array<i32>} : memref<1x16x64xf32, #tpu.memory_space<vmem>>, vector<1x16x64xf32>,
    return
  }
  func.func @transform_0(%arg0: i32) -> (i32, i32, i32) {
    %c0_i32 = arith.constant 0 : i32
    %c0_i32_0 = arith.constant 0 : i32
    %c0_i32_1 = arith.constant 0 : i32
    return %arg0, %c0_i32, %c0_i32_0 : i32, i32, i32
  }
  func.func @transform_1(%arg0: i32) -> (i32, i32, i32) {
    %c0_i32 = arith.constant 0 : i32
    %c0_i32_0 = arith.constant 0 : i32
    %c0_i32_1 = arith.constant 0 : i32
    return %arg0, %c0_i32, %c0_i32_0 : i32, i32, i32
  }
  func.func @transform_2(%arg0: i32) -> (i32, i32, i32) {
    %c0_i32 = arith.constant 0 : i32
    %c0_i32_0 = arith.constant 0 : i32
    %c0_i32_1 = arith.constant 0 : i32
    return %arg0, %c0_i32, %c0_i32_0 : i32, i32, i32
  }
  func.func @transform_3(%arg0: i32) -> (i32, i32) {
    %c0_i32 = arith.constant 0 : i32
    %c0_i32_0 = arith.constant 0 : i32
    %c0_i32_1 = arith.constant 0 : i32
    return %c0_i32, %c0_i32_0 : i32, i32
  }
  func.func @transform_4(%arg0: i32) -> (i32, i32) {
    %c0_i32 = arith.constant 0 : i32
    %c0_i32_0 = arith.constant 0 : i32
    %c0_i32_1 = arith.constant 0 : i32
    return %c0_i32, %c0_i32_0 : i32, i32
  }
  func.func @transform_5(%arg0: i32) -> (i32, i32) {
    %c0_i32 = arith.constant 0 : i32
    %c0_i32_0 = arith.constant 0 : i32
    %c0_i32_1 = arith.constant 0 : i32
    return %c0_i32, %c0_i32_0 : i32, i32
  }
  func.func @transform_6(%arg0: i32) -> (i32, i32) {
    %c0_i32 = arith.constant 0 : i32
    %c0_i32_0 = arith.constant 0 : i32
    %c0_i32_1 = arith.constant 0 : i32
    return %c0_i32, %c0_i32_0 : i32, i32
  }
  func.func @transform_7(%arg0: i32) -> (i32, i32, i32) {
    %c0_i32 = arith.constant 0 : i32
    %c0_i32_0 = arith.constant 0 : i32
    %c0_i32_1 = arith.constant 0 : i32
    return %arg0, %c0_i32, %c0_i32_0 : i32, i32, i32
  }
}

module attributes {stable_mosaic.version = 11 : i64} {
  func.func @_attn_block_kernel(%arg0: i32, %arg1: memref<1x8x32xf32, #tpu.memory_space<vmem>>, %arg2: memref<1x16x64xf32, #tpu.memory_space<vmem>>, %arg3: memref<1x1x64xf32, #tpu.memory_space<vmem>>, %arg4: memref<1x1x128xf32, #tpu.memory_space<vmem>>, %arg5: memref<1x1x32xf32, #tpu.memory_space<vmem>>, %arg6: memref<1x1x64xf32, #tpu.memory_space<vmem>>, %arg7: memref<32x192xbf16, #tpu.memory_space<vmem>>, %arg8: memref<64x192xbf16, #tpu.memory_space<vmem>>, %arg9: memref<64x32xbf16, #tpu.memory_space<vmem>>, %arg10: memref<64x64xbf16, #tpu.memory_space<vmem>>, %arg11: memref<1x8x32xf32, #tpu.memory_space<vmem>>, %arg12: memref<1x16x64xf32, #tpu.memory_space<vmem>>) attributes {dimension_semantics = [#tpu.dimension_semantics<parallel>], iteration_bounds = array<i64: 2>, scalar_prefetch = 0 : i64, scratch_operands = 0 : i64, tpu.core_type = #tpu.core_type<tc>, window_params = [{transform_indices = @transform_0, window_bounds = array<i64: 1, 8, 32>}, {transform_indices = @transform_1, window_bounds = array<i64: 1, 16, 64>}, {transform_indices = @transform_2, window_bounds = array<i64: 1, 1, 64>}, {transform_indices = @transform_3, window_bounds = array<i64: 1, 1, 128>}, {transform_indices = @transform_4, window_bounds = array<i64: 1, 1, 32>}, {transform_indices = @transform_5, window_bounds = array<i64: 1, 1, 64>}, {pipeline_mode = #tpu.pipeline_mode<synchronous>, transform_indices = @transform_6, window_bounds = array<i64: 32, 192>}, {pipeline_mode = #tpu.pipeline_mode<synchronous>, transform_indices = @transform_7, window_bounds = array<i64: 64, 192>}, {pipeline_mode = #tpu.pipeline_mode<synchronous>, transform_indices = @transform_8, window_bounds = array<i64: 64, 32>}, {pipeline_mode = #tpu.pipeline_mode<synchronous>, transform_indices = @transform_9, window_bounds = array<i64: 64, 64>}, {transform_indices = @transform_10, window_bounds = array<i64: 1, 8, 32>}, {transform_indices = @transform_11, window_bounds = array<i64: 1, 16, 64>}]} {
    %c0 = arith.constant 0 : index
    %c0_0 = arith.constant 0 : index
    %c0_1 = arith.constant 0 : index
    %0 = vector.load %arg1[%c0, %c0_0, %c0_1] : memref<1x8x32xf32, #tpu.memory_space<vmem>>, vector<1x8x32xf32>
    %1 = vector.shape_cast %0 : vector<1x8x32xf32> to vector<8x32xf32>
    %c0_2 = arith.constant 0 : index
    %c0_3 = arith.constant 0 : index
    %c0_4 = arith.constant 0 : index
    %2 = vector.load %arg3[%c0_2, %c0_3, %c0_4] : memref<1x1x64xf32, #tpu.memory_space<vmem>>, vector<1x1x64xf32>
    %3 = vector.shape_cast %2 : vector<1x1x64xf32> to vector<1x64xf32>
    %4 = vector.extract_strided_slice %3 {offsets = [0, 0], sizes = [1, 32], strides = [1, 1]} : vector<1x64xf32> to vector<1x32xf32>
    %5 = vector.extract_strided_slice %3 {offsets = [0, 32], sizes = [1, 32], strides = [1, 1]} : vector<1x64xf32> to vector<1x32xf32>
    %cst = arith.constant dense<0.000000e+00> : vector<8xf32>
    %6 = vector.multi_reduction <add>, %1, %cst [1] : vector<8x32xf32> to vector<8xf32>
    %7 = vector.shape_cast %6 : vector<8xf32> to vector<8x1xf32>
    %cst_5 = arith.constant 3.200000e+01 : f32
    %8 = vector.broadcast %cst_5 : f32 to vector<8x1xf32>
    %9 = arith.divf %7, %8 : vector<8x1xf32>
    %10 = vector.broadcast %9 : vector<8x1xf32> to vector<8x32xf32>
    %11 = arith.subf %1, %10 : vector<8x32xf32>
    %12 = arith.mulf %11, %11 : vector<8x32xf32>
    %cst_6 = arith.constant dense<0.000000e+00> : vector<8xf32>
    %13 = vector.multi_reduction <add>, %12, %cst_6 [1] : vector<8x32xf32> to vector<8xf32>
    %14 = vector.shape_cast %13 : vector<8xf32> to vector<8x1xf32>
    %cst_7 = arith.constant 3.200000e+01 : f32
    %15 = vector.broadcast %cst_7 : f32 to vector<8x1xf32>
    %16 = arith.divf %14, %15 : vector<8x1xf32>
    %cst_8 = arith.constant 9.99999974E-6 : f32
    %17 = vector.broadcast %cst_8 : f32 to vector<8x1xf32>
    %18 = arith.addf %16, %17 : vector<8x1xf32>
    %19 = math.rsqrt %18 : vector<8x1xf32>
    %20 = vector.broadcast %19 : vector<8x1xf32> to vector<8x32xf32>
    %21 = arith.mulf %11, %20 : vector<8x32xf32>
    %22 = vector.broadcast %4 : vector<1x32xf32> to vector<8x32xf32>
    %23 = arith.mulf %21, %22 : vector<8x32xf32>
    %24 = vector.broadcast %5 : vector<1x32xf32> to vector<8x32xf32>
    %25 = arith.addf %23, %24 : vector<8x32xf32>
    %c0_9 = arith.constant 0 : index
    %c0_10 = arith.constant 0 : index
    %26 = vector.load %arg7[%c0_9, %c0_10] : memref<32x192xbf16, #tpu.memory_space<vmem>>, vector<32x192xbf16>
    %27 = arith.truncf %25 : vector<8x32xf32> to vector<8x32xbf16>
    %cst_11 = arith.constant dense<0.000000e+00> : vector<8x192xf32>
    %28 = tpu.matmul %27, %26, %cst_11 {dimension_numbers = #tpu.dot_dimension_numbers<[1], [0], [0], [1], [0, 0, 1, 1], [], []>} : vector<8x32xbf16>, vector<32x192xbf16>, vector<8x192xf32> -> vector<8x192xf32>
    %c0_12 = arith.constant 0 : index
    %c0_13 = arith.constant 0 : index
    %c0_14 = arith.constant 0 : index
    %29 = vector.load %arg2[%c0_12, %c0_13, %c0_14] : memref<1x16x64xf32, #tpu.memory_space<vmem>>, vector<1x16x64xf32>
    %30 = vector.shape_cast %29 : vector<1x16x64xf32> to vector<16x64xf32>
    %c0_15 = arith.constant 0 : index
    %c0_16 = arith.constant 0 : index
    %c0_17 = arith.constant 0 : index
    %31 = vector.load %arg4[%c0_15, %c0_16, %c0_17] : memref<1x1x128xf32, #tpu.memory_space<vmem>>, vector<1x1x128xf32>
    %32 = vector.shape_cast %31 : vector<1x1x128xf32> to vector<1x128xf32>
    %33 = vector.extract_strided_slice %32 {offsets = [0, 0], sizes = [1, 64], strides = [1, 1]} : vector<1x128xf32> to vector<1x64xf32>
    %34 = vector.extract_strided_slice %32 {offsets = [0, 64], sizes = [1, 64], strides = [1, 1]} : vector<1x128xf32> to vector<1x64xf32>
    %cst_18 = arith.constant dense<0.000000e+00> : vector<16xf32>
    %35 = vector.multi_reduction <add>, %30, %cst_18 [1] : vector<16x64xf32> to vector<16xf32>
    %36 = vector.shape_cast %35 : vector<16xf32> to vector<16x1xf32>
    %cst_19 = arith.constant 6.400000e+01 : f32
    %37 = vector.broadcast %cst_19 : f32 to vector<16x1xf32>
    %38 = arith.divf %36, %37 : vector<16x1xf32>
    %39 = vector.broadcast %38 : vector<16x1xf32> to vector<16x64xf32>
    %40 = arith.subf %30, %39 : vector<16x64xf32>
    %41 = arith.mulf %40, %40 : vector<16x64xf32>
    %cst_20 = arith.constant dense<0.000000e+00> : vector<16xf32>
    %42 = vector.multi_reduction <add>, %41, %cst_20 [1] : vector<16x64xf32> to vector<16xf32>
    %43 = vector.shape_cast %42 : vector<16xf32> to vector<16x1xf32>
    %cst_21 = arith.constant 6.400000e+01 : f32
    %44 = vector.broadcast %cst_21 : f32 to vector<16x1xf32>
    %45 = arith.divf %43, %44 : vector<16x1xf32>
    %cst_22 = arith.constant 9.99999974E-6 : f32
    %46 = vector.broadcast %cst_22 : f32 to vector<16x1xf32>
    %47 = arith.addf %45, %46 : vector<16x1xf32>
    %48 = math.rsqrt %47 : vector<16x1xf32>
    %49 = vector.broadcast %48 : vector<16x1xf32> to vector<16x64xf32>
    %50 = arith.mulf %40, %49 : vector<16x64xf32>
    %51 = vector.broadcast %33 : vector<1x64xf32> to vector<16x64xf32>
    %52 = arith.mulf %50, %51 : vector<16x64xf32>
    %53 = vector.broadcast %34 : vector<1x64xf32> to vector<16x64xf32>
    %54 = arith.addf %52, %53 : vector<16x64xf32>
    %c0_23 = arith.constant 0 : index
    %c0_24 = arith.constant 0 : index
    %55 = vector.load %arg8[%c0_23, %c0_24] : memref<64x192xbf16, #tpu.memory_space<vmem>>, vector<64x192xbf16>
    %56 = arith.truncf %54 : vector<16x64xf32> to vector<16x64xbf16>
    %cst_25 = arith.constant dense<0.000000e+00> : vector<16x192xf32>
    %57 = tpu.matmul %56, %55, %cst_25 {dimension_numbers = #tpu.dot_dimension_numbers<[1], [0], [0], [1], [0, 0, 1, 1], [], []>} : vector<16x64xbf16>, vector<64x192xbf16>, vector<16x192xf32> -> vector<16x192xf32>
    %58 = tpu.concatenate %28, %57 in 0 : vector<8x192xf32>, vector<16x192xf32> -> vector<24x192xf32>
    %59 = vector.extract_strided_slice %58 {offsets = [0, 0], sizes = [24, 16], strides = [1, 1]} : vector<24x192xf32> to vector<24x16xf32>
    %cst_26 = arith.constant 2.500000e-01 : f32
    %60 = vector.broadcast %cst_26 : f32 to vector<24x16xf32>
    %61 = arith.mulf %59, %60 : vector<24x16xf32>
    %62 = arith.truncf %61 : vector<24x16xf32> to vector<24x16xbf16>
    %63 = vector.extract_strided_slice %58 {offsets = [0, 64], sizes = [24, 16], strides = [1, 1]} : vector<24x192xf32> to vector<24x16xf32>
    %64 = arith.truncf %63 : vector<24x16xf32> to vector<24x16xbf16>
    %65 = vector.extract_strided_slice %58 {offsets = [0, 128], sizes = [24, 16], strides = [1, 1]} : vector<24x192xf32> to vector<24x16xf32>
    %66 = arith.truncf %65 : vector<24x16xf32> to vector<24x16xbf16>
    %cst_27 = arith.constant dense<0.000000e+00> : vector<24x24xf32>
    %67 = tpu.matmul %62, %64, %cst_27 {dimension_numbers = #tpu.dot_dimension_numbers<[1], [1], [0], [0], [0, 0, 1, 0], [], []>} : vector<24x16xbf16>, vector<24x16xbf16>, vector<24x24xf32> -> vector<24x24xf32>
    %cst_28 = arith.constant dense<0xFF800000> : vector<24xf32>
    %68 = vector.multi_reduction <maximumf>, %67, %cst_28 [1] : vector<24x24xf32> to vector<24xf32>
    %69 = vector.shape_cast %68 : vector<24xf32> to vector<24x1xf32>
    %70 = vector.broadcast %69 : vector<24x1xf32> to vector<24x24xf32>
    %71 = arith.subf %67, %70 : vector<24x24xf32>
    %72 = math.exp %71 : vector<24x24xf32>
    %cst_29 = arith.constant dense<0.000000e+00> : vector<24xf32>
    %73 = vector.multi_reduction <add>, %72, %cst_29 [1] : vector<24x24xf32> to vector<24xf32>
    %74 = vector.shape_cast %73 : vector<24xf32> to vector<24x1xf32>
    %75 = arith.truncf %72 : vector<24x24xf32> to vector<24x24xbf16>
    %cst_30 = arith.constant dense<0.000000e+00> : vector<24x16xf32>
    %76 = tpu.matmul %75, %66, %cst_30 {dimension_numbers = #tpu.dot_dimension_numbers<[1], [0], [0], [1], [0, 0, 1, 1], [], []>} : vector<24x24xbf16>, vector<24x16xbf16>, vector<24x16xf32> -> vector<24x16xf32>
    %77 = tpu.reciprocal %74 : vector<24x1xf32> -> vector<24x1xf32>
    %78 = vector.broadcast %77 : vector<24x1xf32> to vector<24x16xf32>
    %79 = arith.mulf %76, %78 : vector<24x16xf32>
    %80 = vector.extract_strided_slice %58 {offsets = [0, 16], sizes = [24, 16], strides = [1, 1]} : vector<24x192xf32> to vector<24x16xf32>
    %cst_31 = arith.constant 2.500000e-01 : f32
    %81 = vector.broadcast %cst_31 : f32 to vector<24x16xf32>
    %82 = arith.mulf %80, %81 : vector<24x16xf32>
    %83 = arith.truncf %82 : vector<24x16xf32> to vector<24x16xbf16>
    %84 = vector.extract_strided_slice %58 {offsets = [0, 80], sizes = [24, 16], strides = [1, 1]} : vector<24x192xf32> to vector<24x16xf32>
    %85 = arith.truncf %84 : vector<24x16xf32> to vector<24x16xbf16>
    %86 = vector.extract_strided_slice %58 {offsets = [0, 144], sizes = [24, 16], strides = [1, 1]} : vector<24x192xf32> to vector<24x16xf32>
    %87 = arith.truncf %86 : vector<24x16xf32> to vector<24x16xbf16>
    %cst_32 = arith.constant dense<0.000000e+00> : vector<24x24xf32>
    %88 = tpu.matmul %83, %85, %cst_32 {dimension_numbers = #tpu.dot_dimension_numbers<[1], [1], [0], [0], [0, 0, 1, 0], [], []>} : vector<24x16xbf16>, vector<24x16xbf16>, vector<24x24xf32> -> vector<24x24xf32>
    %cst_33 = arith.constant dense<0xFF800000> : vector<24xf32>
    %89 = vector.multi_reduction <maximumf>, %88, %cst_33 [1] : vector<24x24xf32> to vector<24xf32>
    %90 = vector.shape_cast %89 : vector<24xf32> to vector<24x1xf32>
    %91 = vector.broadcast %90 : vector<24x1xf32> to vector<24x24xf32>
    %92 = arith.subf %88, %91 : vector<24x24xf32>
    %93 = math.exp %92 : vector<24x24xf32>
    %cst_34 = arith.constant dense<0.000000e+00> : vector<24xf32>
    %94 = vector.multi_reduction <add>, %93, %cst_34 [1] : vector<24x24xf32> to vector<24xf32>
    %95 = vector.shape_cast %94 : vector<24xf32> to vector<24x1xf32>
    %96 = arith.truncf %93 : vector<24x24xf32> to vector<24x24xbf16>
    %cst_35 = arith.constant dense<0.000000e+00> : vector<24x16xf32>
    %97 = tpu.matmul %96, %87, %cst_35 {dimension_numbers = #tpu.dot_dimension_numbers<[1], [0], [0], [1], [0, 0, 1, 1], [], []>} : vector<24x24xbf16>, vector<24x16xbf16>, vector<24x16xf32> -> vector<24x16xf32>
    %98 = tpu.reciprocal %95 : vector<24x1xf32> -> vector<24x1xf32>
    %99 = vector.broadcast %98 : vector<24x1xf32> to vector<24x16xf32>
    %100 = arith.mulf %97, %99 : vector<24x16xf32>
    %101 = vector.extract_strided_slice %58 {offsets = [0, 32], sizes = [24, 16], strides = [1, 1]} : vector<24x192xf32> to vector<24x16xf32>
    %cst_36 = arith.constant 2.500000e-01 : f32
    %102 = vector.broadcast %cst_36 : f32 to vector<24x16xf32>
    %103 = arith.mulf %101, %102 : vector<24x16xf32>
    %104 = arith.truncf %103 : vector<24x16xf32> to vector<24x16xbf16>
    %105 = vector.extract_strided_slice %58 {offsets = [0, 96], sizes = [24, 16], strides = [1, 1]} : vector<24x192xf32> to vector<24x16xf32>
    %106 = arith.truncf %105 : vector<24x16xf32> to vector<24x16xbf16>
    %107 = vector.extract_strided_slice %58 {offsets = [0, 160], sizes = [24, 16], strides = [1, 1]} : vector<24x192xf32> to vector<24x16xf32>
    %108 = arith.truncf %107 : vector<24x16xf32> to vector<24x16xbf16>
    %cst_37 = arith.constant dense<0.000000e+00> : vector<24x24xf32>
    %109 = tpu.matmul %104, %106, %cst_37 {dimension_numbers = #tpu.dot_dimension_numbers<[1], [1], [0], [0], [0, 0, 1, 0], [], []>} : vector<24x16xbf16>, vector<24x16xbf16>, vector<24x24xf32> -> vector<24x24xf32>
    %cst_38 = arith.constant dense<0xFF800000> : vector<24xf32>
    %110 = vector.multi_reduction <maximumf>, %109, %cst_38 [1] : vector<24x24xf32> to vector<24xf32>
    %111 = vector.shape_cast %110 : vector<24xf32> to vector<24x1xf32>
    %112 = vector.broadcast %111 : vector<24x1xf32> to vector<24x24xf32>
    %113 = arith.subf %109, %112 : vector<24x24xf32>
    %114 = math.exp %113 : vector<24x24xf32>
    %cst_39 = arith.constant dense<0.000000e+00> : vector<24xf32>
    %115 = vector.multi_reduction <add>, %114, %cst_39 [1] : vector<24x24xf32> to vector<24xf32>
    %116 = vector.shape_cast %115 : vector<24xf32> to vector<24x1xf32>
    %117 = arith.truncf %114 : vector<24x24xf32> to vector<24x24xbf16>
    %cst_40 = arith.constant dense<0.000000e+00> : vector<24x16xf32>
    %118 = tpu.matmul %117, %108, %cst_40 {dimension_numbers = #tpu.dot_dimension_numbers<[1], [0], [0], [1], [0, 0, 1, 1], [], []>} : vector<24x24xbf16>, vector<24x16xbf16>, vector<24x16xf32> -> vector<24x16xf32>
    %119 = tpu.reciprocal %116 : vector<24x1xf32> -> vector<24x1xf32>
    %120 = vector.broadcast %119 : vector<24x1xf32> to vector<24x16xf32>
    %121 = arith.mulf %118, %120 : vector<24x16xf32>
    %122 = vector.extract_strided_slice %58 {offsets = [0, 48], sizes = [24, 16], strides = [1, 1]} : vector<24x192xf32> to vector<24x16xf32>
    %cst_41 = arith.constant 2.500000e-01 : f32
    %123 = vector.broadcast %cst_41 : f32 to vector<24x16xf32>
    %124 = arith.mulf %122, %123 : vector<24x16xf32>
    %125 = arith.truncf %124 : vector<24x16xf32> to vector<24x16xbf16>
    %126 = vector.extract_strided_slice %58 {offsets = [0, 112], sizes = [24, 16], strides = [1, 1]} : vector<24x192xf32> to vector<24x16xf32>
    %127 = arith.truncf %126 : vector<24x16xf32> to vector<24x16xbf16>
    %128 = vector.extract_strided_slice %58 {offsets = [0, 176], sizes = [24, 16], strides = [1, 1]} : vector<24x192xf32> to vector<24x16xf32>
    %129 = arith.truncf %128 : vector<24x16xf32> to vector<24x16xbf16>
    %cst_42 = arith.constant dense<0.000000e+00> : vector<24x24xf32>
    %130 = tpu.matmul %125, %127, %cst_42 {dimension_numbers = #tpu.dot_dimension_numbers<[1], [1], [0], [0], [0, 0, 1, 0], [], []>} : vector<24x16xbf16>, vector<24x16xbf16>, vector<24x24xf32> -> vector<24x24xf32>
    %cst_43 = arith.constant dense<0xFF800000> : vector<24xf32>
    %131 = vector.multi_reduction <maximumf>, %130, %cst_43 [1] : vector<24x24xf32> to vector<24xf32>
    %132 = vector.shape_cast %131 : vector<24xf32> to vector<24x1xf32>
    %133 = vector.broadcast %132 : vector<24x1xf32> to vector<24x24xf32>
    %134 = arith.subf %130, %133 : vector<24x24xf32>
    %135 = math.exp %134 : vector<24x24xf32>
    %cst_44 = arith.constant dense<0.000000e+00> : vector<24xf32>
    %136 = vector.multi_reduction <add>, %135, %cst_44 [1] : vector<24x24xf32> to vector<24xf32>
    %137 = vector.shape_cast %136 : vector<24xf32> to vector<24x1xf32>
    %138 = arith.truncf %135 : vector<24x24xf32> to vector<24x24xbf16>
    %cst_45 = arith.constant dense<0.000000e+00> : vector<24x16xf32>
    %139 = tpu.matmul %138, %129, %cst_45 {dimension_numbers = #tpu.dot_dimension_numbers<[1], [0], [0], [1], [0, 0, 1, 1], [], []>} : vector<24x24xbf16>, vector<24x16xbf16>, vector<24x16xf32> -> vector<24x16xf32>
    %140 = tpu.reciprocal %137 : vector<24x1xf32> -> vector<24x1xf32>
    %141 = vector.broadcast %140 : vector<24x1xf32> to vector<24x16xf32>
    %142 = arith.mulf %139, %141 : vector<24x16xf32>
    %143 = tpu.concatenate %79, %100, %121, %142 in 1 : vector<24x16xf32>, vector<24x16xf32>, vector<24x16xf32>, vector<24x16xf32> -> vector<24x64xf32>
    %144 = vector.extract_strided_slice %143 {offsets = [0, 0], sizes = [8, 64], strides = [1, 1]} : vector<24x64xf32> to vector<8x64xf32>
    %c0_46 = arith.constant 0 : index
    %c0_47 = arith.constant 0 : index
    %145 = vector.load %arg9[%c0_46, %c0_47] : memref<64x32xbf16, #tpu.memory_space<vmem>>, vector<64x32xbf16>
    %146 = arith.truncf %144 : vector<8x64xf32> to vector<8x64xbf16>
    %cst_48 = arith.constant dense<0.000000e+00> : vector<8x32xf32>
    %147 = tpu.matmul %146, %145, %cst_48 {dimension_numbers = #tpu.dot_dimension_numbers<[1], [0], [0], [1], [0, 0, 1, 1], [], []>} : vector<8x64xbf16>, vector<64x32xbf16>, vector<8x32xf32> -> vector<8x32xf32>
    %c0_49 = arith.constant 0 : index
    %c0_50 = arith.constant 0 : index
    %c0_51 = arith.constant 0 : index
    %148 = vector.load %arg5[%c0_49, %c0_50, %c0_51] : memref<1x1x32xf32, #tpu.memory_space<vmem>>, vector<1x1x32xf32>
    %149 = vector.shape_cast %148 : vector<1x1x32xf32> to vector<1x32xf32>
    %150 = vector.broadcast %149 : vector<1x32xf32> to vector<8x32xf32>
    %151 = arith.mulf %147, %150 : vector<8x32xf32>
    %c0_52 = arith.constant 0 : index
    %c0_53 = arith.constant 0 : index
    %c0_54 = arith.constant 0 : index
    %152 = vector.load %arg1[%c0_52, %c0_53, %c0_54] : memref<1x8x32xf32, #tpu.memory_space<vmem>>, vector<1x8x32xf32>
    %153 = vector.shape_cast %152 : vector<1x8x32xf32> to vector<8x32xf32>
    %154 = arith.addf %151, %153 : vector<8x32xf32>
    %c0_55 = arith.constant 0 : index
    %c0_56 = arith.constant 0 : index
    %c0_57 = arith.constant 0 : index
    %155 = vector.load %arg11[%c0_55, %c0_56, %c0_57] : memref<1x8x32xf32, #tpu.memory_space<vmem>>, vector<1x8x32xf32>
    %156 = vector.shape_cast %155 : vector<1x8x32xf32> to vector<8x32xf32>
    %157 = vector.shape_cast %154 : vector<8x32xf32> to vector<1x8x32xf32>
    tpu.vector_store %arg11[%c0_55, %c0_56, %c0_57], %157 {strides = array<i32>} : memref<1x8x32xf32, #tpu.memory_space<vmem>>, vector<1x8x32xf32>,
    %158 = vector.extract_strided_slice %143 {offsets = [8, 0], sizes = [16, 64], strides = [1, 1]} : vector<24x64xf32> to vector<16x64xf32>
    %c0_58 = arith.constant 0 : index
    %c0_59 = arith.constant 0 : index
    %159 = vector.load %arg10[%c0_58, %c0_59] : memref<64x64xbf16, #tpu.memory_space<vmem>>, vector<64x64xbf16>
    %160 = arith.truncf %158 : vector<16x64xf32> to vector<16x64xbf16>
    %cst_60 = arith.constant dense<0.000000e+00> : vector<16x64xf32>
    %161 = tpu.matmul %160, %159, %cst_60 {dimension_numbers = #tpu.dot_dimension_numbers<[1], [0], [0], [1], [0, 0, 1, 1], [], []>} : vector<16x64xbf16>, vector<64x64xbf16>, vector<16x64xf32> -> vector<16x64xf32>
    %c0_61 = arith.constant 0 : index
    %c0_62 = arith.constant 0 : index
    %c0_63 = arith.constant 0 : index
    %162 = vector.load %arg6[%c0_61, %c0_62, %c0_63] : memref<1x1x64xf32, #tpu.memory_space<vmem>>, vector<1x1x64xf32>
    %163 = vector.shape_cast %162 : vector<1x1x64xf32> to vector<1x64xf32>
    %164 = vector.broadcast %163 : vector<1x64xf32> to vector<16x64xf32>
    %165 = arith.mulf %161, %164 : vector<16x64xf32>
    %c0_64 = arith.constant 0 : index
    %c0_65 = arith.constant 0 : index
    %c0_66 = arith.constant 0 : index
    %166 = vector.load %arg2[%c0_64, %c0_65, %c0_66] : memref<1x16x64xf32, #tpu.memory_space<vmem>>, vector<1x16x64xf32>
    %167 = vector.shape_cast %166 : vector<1x16x64xf32> to vector<16x64xf32>
    %168 = arith.addf %165, %167 : vector<16x64xf32>
    %c0_67 = arith.constant 0 : index
    %c0_68 = arith.constant 0 : index
    %c0_69 = arith.constant 0 : index
    %169 = vector.load %arg12[%c0_67, %c0_68, %c0_69] : memref<1x16x64xf32, #tpu.memory_space<vmem>>, vector<1x16x64xf32>
    %170 = vector.shape_cast %169 : vector<1x16x64xf32> to vector<16x64xf32>
    %171 = vector.shape_cast %168 : vector<16x64xf32> to vector<1x16x64xf32>
    tpu.vector_store %arg12[%c0_67, %c0_68, %c0_69], %171 {strides = array<i32>} : memref<1x16x64xf32, #tpu.memory_space<vmem>>, vector<1x16x64xf32>,
    return
  }
  func.func @transform_0(%arg0: i32) -> (i32, i32, i32) {
    %c0_i32 = arith.constant 0 : i32
    %c0_i32_0 = arith.constant 0 : i32
    %c0_i32_1 = arith.constant 0 : i32
    return %arg0, %c0_i32, %c0_i32_0 : i32, i32, i32
  }
  func.func @transform_1(%arg0: i32) -> (i32, i32, i32) {
    %c0_i32 = arith.constant 0 : i32
    %c0_i32_0 = arith.constant 0 : i32
    %c0_i32_1 = arith.constant 0 : i32
    return %arg0, %c0_i32, %c0_i32_0 : i32, i32, i32
  }
  func.func @transform_2(%arg0: i32) -> (i32, i32, i32) {
    %c0_i32 = arith.constant 0 : i32
    %c0_i32_0 = arith.constant 0 : i32
    %c0_i32_1 = arith.constant 0 : i32
    return %arg0, %c0_i32, %c0_i32_0 : i32, i32, i32
  }
  func.func @transform_3(%arg0: i32) -> (i32, i32, i32) {
    %c0_i32 = arith.constant 0 : i32
    %c0_i32_0 = arith.constant 0 : i32
    %c0_i32_1 = arith.constant 0 : i32
    return %arg0, %c0_i32, %c0_i32_0 : i32, i32, i32
  }
  func.func @transform_4(%arg0: i32) -> (i32, i32, i32) {
    %c0_i32 = arith.constant 0 : i32
    %c0_i32_0 = arith.constant 0 : i32
    %c0_i32_1 = arith.constant 0 : i32
    return %arg0, %c0_i32, %c0_i32_0 : i32, i32, i32
  }
  func.func @transform_5(%arg0: i32) -> (i32, i32, i32) {
    %c0_i32 = arith.constant 0 : i32
    %c0_i32_0 = arith.constant 0 : i32
    %c0_i32_1 = arith.constant 0 : i32
    return %arg0, %c0_i32, %c0_i32_0 : i32, i32, i32
  }
  func.func @transform_6(%arg0: i32) -> (i32, i32) {
    %c0_i32 = arith.constant 0 : i32
    %c0_i32_0 = arith.constant 0 : i32
    %c0_i32_1 = arith.constant 0 : i32
    return %c0_i32, %c0_i32_0 : i32, i32
  }
  func.func @transform_7(%arg0: i32) -> (i32, i32) {
    %c0_i32 = arith.constant 0 : i32
    %c0_i32_0 = arith.constant 0 : i32
    %c0_i32_1 = arith.constant 0 : i32
    return %c0_i32, %c0_i32_0 : i32, i32
  }
  func.func @transform_8(%arg0: i32) -> (i32, i32) {
    %c0_i32 = arith.constant 0 : i32
    %c0_i32_0 = arith.constant 0 : i32
    %c0_i32_1 = arith.constant 0 : i32
    return %c0_i32, %c0_i32_0 : i32, i32
  }
  func.func @transform_9(%arg0: i32) -> (i32, i32) {
    %c0_i32 = arith.constant 0 : i32
    %c0_i32_0 = arith.constant 0 : i32
    %c0_i32_1 = arith.constant 0 : i32
    return %c0_i32, %c0_i32_0 : i32, i32
  }
  func.func @transform_10(%arg0: i32) -> (i32, i32, i32) {
    %c0_i32 = arith.constant 0 : i32
    %c0_i32_0 = arith.constant 0 : i32
    %c0_i32_1 = arith.constant 0 : i32
    return %arg0, %c0_i32, %c0_i32_0 : i32, i32, i32
  }
  func.func @transform_11(%arg0: i32) -> (i32, i32, i32) {
    %c0_i32 = arith.constant 0 : i32
    %c0_i32_0 = arith.constant 0 : i32
    %c0_i32_1 = arith.constant 0 : i32
    return %arg0, %c0_i32, %c0_i32_0 : i32, i32, i32
  }
}

module attributes {stable_mosaic.version = 11 : i64} {
  func.func @_attn_block_kernel(%arg0: i32, %arg1: memref<1x8x32xf32, #tpu.memory_space<vmem>>, %arg2: memref<1x16x64xf32, #tpu.memory_space<vmem>>, %arg3: memref<1x1x64xf32, #tpu.memory_space<vmem>>, %arg4: memref<1x1x128xf32, #tpu.memory_space<vmem>>, %arg5: memref<1x1x32xf32, #tpu.memory_space<vmem>>, %arg6: memref<1x1x64xf32, #tpu.memory_space<vmem>>, %arg7: memref<32x192xbf16, #tpu.memory_space<vmem>>, %arg8: memref<64x192xbf16, #tpu.memory_space<vmem>>, %arg9: memref<64x32xbf16, #tpu.memory_space<vmem>>, %arg10: memref<64x64xbf16, #tpu.memory_space<vmem>>, %arg11: memref<1x8x32xf32, #tpu.memory_space<vmem>>, %arg12: memref<1x16x64xf32, #tpu.memory_space<vmem>>) attributes {dimension_semantics = [#tpu.dimension_semantics<parallel>], iteration_bounds = array<i64: 2>, scalar_prefetch = 0 : i64, scratch_operands = 0 : i64, tpu.core_type = #tpu.core_type<tc>, window_params = [{transform_indices = @transform_0, window_bounds = array<i64: 1, 8, 32>}, {transform_indices = @transform_1, window_bounds = array<i64: 1, 16, 64>}, {transform_indices = @transform_2, window_bounds = array<i64: 1, 1, 64>}, {transform_indices = @transform_3, window_bounds = array<i64: 1, 1, 128>}, {transform_indices = @transform_4, window_bounds = array<i64: 1, 1, 32>}, {transform_indices = @transform_5, window_bounds = array<i64: 1, 1, 64>}, {pipeline_mode = #tpu.pipeline_mode<synchronous>, transform_indices = @transform_6, window_bounds = array<i64: 32, 192>}, {pipeline_mode = #tpu.pipeline_mode<synchronous>, transform_indices = @transform_7, window_bounds = array<i64: 64, 192>}, {pipeline_mode = #tpu.pipeline_mode<synchronous>, transform_indices = @transform_8, window_bounds = array<i64: 64, 32>}, {pipeline_mode = #tpu.pipeline_mode<synchronous>, transform_indices = @transform_9, window_bounds = array<i64: 64, 64>}, {transform_indices = @transform_10, window_bounds = array<i64: 1, 8, 32>}, {transform_indices = @transform_11, window_bounds = array<i64: 1, 16, 64>}]} {
    %c0 = arith.constant 0 : index
    %c0_0 = arith.constant 0 : index
    %c0_1 = arith.constant 0 : index
    %0 = vector.load %arg1[%c0, %c0_0, %c0_1] : memref<1x8x32xf32, #tpu.memory_space<vmem>>, vector<1x8x32xf32>
    %1 = vector.shape_cast %0 : vector<1x8x32xf32> to vector<8x32xf32>
    %c0_2 = arith.constant 0 : index
    %c0_3 = arith.constant 0 : index
    %c0_4 = arith.constant 0 : index
    %2 = vector.load %arg3[%c0_2, %c0_3, %c0_4] : memref<1x1x64xf32, #tpu.memory_space<vmem>>, vector<1x1x64xf32>
    %3 = vector.shape_cast %2 : vector<1x1x64xf32> to vector<1x64xf32>
    %4 = vector.extract_strided_slice %3 {offsets = [0, 0], sizes = [1, 32], strides = [1, 1]} : vector<1x64xf32> to vector<1x32xf32>
    %5 = vector.extract_strided_slice %3 {offsets = [0, 32], sizes = [1, 32], strides = [1, 1]} : vector<1x64xf32> to vector<1x32xf32>
    %cst = arith.constant dense<0.000000e+00> : vector<8xf32>
    %6 = vector.multi_reduction <add>, %1, %cst [1] : vector<8x32xf32> to vector<8xf32>
    %7 = vector.shape_cast %6 : vector<8xf32> to vector<8x1xf32>
    %cst_5 = arith.constant 3.200000e+01 : f32
    %8 = vector.broadcast %cst_5 : f32 to vector<8x1xf32>
    %9 = arith.divf %7, %8 : vector<8x1xf32>
    %10 = vector.broadcast %9 : vector<8x1xf32> to vector<8x32xf32>
    %11 = arith.subf %1, %10 : vector<8x32xf32>
    %12 = arith.mulf %11, %11 : vector<8x32xf32>
    %cst_6 = arith.constant dense<0.000000e+00> : vector<8xf32>
    %13 = vector.multi_reduction <add>, %12, %cst_6 [1] : vector<8x32xf32> to vector<8xf32>
    %14 = vector.shape_cast %13 : vector<8xf32> to vector<8x1xf32>
    %cst_7 = arith.constant 3.200000e+01 : f32
    %15 = vector.broadcast %cst_7 : f32 to vector<8x1xf32>
    %16 = arith.divf %14, %15 : vector<8x1xf32>
    %cst_8 = arith.constant 9.99999974E-6 : f32
    %17 = vector.broadcast %cst_8 : f32 to vector<8x1xf32>
    %18 = arith.addf %16, %17 : vector<8x1xf32>
    %19 = math.rsqrt %18 : vector<8x1xf32>
    %20 = vector.broadcast %19 : vector<8x1xf32> to vector<8x32xf32>
    %21 = arith.mulf %11, %20 : vector<8x32xf32>
    %22 = vector.broadcast %4 : vector<1x32xf32> to vector<8x32xf32>
    %23 = arith.mulf %21, %22 : vector<8x32xf32>
    %24 = vector.broadcast %5 : vector<1x32xf32> to vector<8x32xf32>
    %25 = arith.addf %23, %24 : vector<8x32xf32>
    %c0_9 = arith.constant 0 : index
    %c0_10 = arith.constant 0 : index
    %26 = vector.load %arg7[%c0_9, %c0_10] : memref<32x192xbf16, #tpu.memory_space<vmem>>, vector<32x192xbf16>
    %27 = arith.truncf %25 : vector<8x32xf32> to vector<8x32xbf16>
    %cst_11 = arith.constant dense<0.000000e+00> : vector<8x192xf32>
    %28 = tpu.matmul %27, %26, %cst_11 {dimension_numbers = #tpu.dot_dimension_numbers<[1], [0], [0], [1], [0, 0, 1, 1], [], []>} : vector<8x32xbf16>, vector<32x192xbf16>, vector<8x192xf32> -> vector<8x192xf32>
    %c0_12 = arith.constant 0 : index
    %c0_13 = arith.constant 0 : index
    %c0_14 = arith.constant 0 : index
    %29 = vector.load %arg2[%c0_12, %c0_13, %c0_14] : memref<1x16x64xf32, #tpu.memory_space<vmem>>, vector<1x16x64xf32>
    %30 = vector.shape_cast %29 : vector<1x16x64xf32> to vector<16x64xf32>
    %c0_15 = arith.constant 0 : index
    %c0_16 = arith.constant 0 : index
    %c0_17 = arith.constant 0 : index
    %31 = vector.load %arg4[%c0_15, %c0_16, %c0_17] : memref<1x1x128xf32, #tpu.memory_space<vmem>>, vector<1x1x128xf32>
    %32 = vector.shape_cast %31 : vector<1x1x128xf32> to vector<1x128xf32>
    %33 = vector.extract_strided_slice %32 {offsets = [0, 0], sizes = [1, 64], strides = [1, 1]} : vector<1x128xf32> to vector<1x64xf32>
    %34 = vector.extract_strided_slice %32 {offsets = [0, 64], sizes = [1, 64], strides = [1, 1]} : vector<1x128xf32> to vector<1x64xf32>
    %cst_18 = arith.constant dense<0.000000e+00> : vector<16xf32>
    %35 = vector.multi_reduction <add>, %30, %cst_18 [1] : vector<16x64xf32> to vector<16xf32>
    %36 = vector.shape_cast %35 : vector<16xf32> to vector<16x1xf32>
    %cst_19 = arith.constant 6.400000e+01 : f32
    %37 = vector.broadcast %cst_19 : f32 to vector<16x1xf32>
    %38 = arith.divf %36, %37 : vector<16x1xf32>
    %39 = vector.broadcast %38 : vector<16x1xf32> to vector<16x64xf32>
    %40 = arith.subf %30, %39 : vector<16x64xf32>
    %41 = arith.mulf %40, %40 : vector<16x64xf32>
    %cst_20 = arith.constant dense<0.000000e+00> : vector<16xf32>
    %42 = vector.multi_reduction <add>, %41, %cst_20 [1] : vector<16x64xf32> to vector<16xf32>
    %43 = vector.shape_cast %42 : vector<16xf32> to vector<16x1xf32>
    %cst_21 = arith.constant 6.400000e+01 : f32
    %44 = vector.broadcast %cst_21 : f32 to vector<16x1xf32>
    %45 = arith.divf %43, %44 : vector<16x1xf32>
    %cst_22 = arith.constant 9.99999974E-6 : f32
    %46 = vector.broadcast %cst_22 : f32 to vector<16x1xf32>
    %47 = arith.addf %45, %46 : vector<16x1xf32>
    %48 = math.rsqrt %47 : vector<16x1xf32>
    %49 = vector.broadcast %48 : vector<16x1xf32> to vector<16x64xf32>
    %50 = arith.mulf %40, %49 : vector<16x64xf32>
    %51 = vector.broadcast %33 : vector<1x64xf32> to vector<16x64xf32>
    %52 = arith.mulf %50, %51 : vector<16x64xf32>
    %53 = vector.broadcast %34 : vector<1x64xf32> to vector<16x64xf32>
    %54 = arith.addf %52, %53 : vector<16x64xf32>
    %c0_23 = arith.constant 0 : index
    %c0_24 = arith.constant 0 : index
    %55 = vector.load %arg8[%c0_23, %c0_24] : memref<64x192xbf16, #tpu.memory_space<vmem>>, vector<64x192xbf16>
    %56 = arith.truncf %54 : vector<16x64xf32> to vector<16x64xbf16>
    %cst_25 = arith.constant dense<0.000000e+00> : vector<16x192xf32>
    %57 = tpu.matmul %56, %55, %cst_25 {dimension_numbers = #tpu.dot_dimension_numbers<[1], [0], [0], [1], [0, 0, 1, 1], [], []>} : vector<16x64xbf16>, vector<64x192xbf16>, vector<16x192xf32> -> vector<16x192xf32>
    %58 = tpu.concatenate %28, %57 in 0 : vector<8x192xf32>, vector<16x192xf32> -> vector<24x192xf32>
    %59 = vector.extract_strided_slice %58 {offsets = [0, 0], sizes = [24, 16], strides = [1, 1]} : vector<24x192xf32> to vector<24x16xf32>
    %cst_26 = arith.constant 2.500000e-01 : f32
    %60 = vector.broadcast %cst_26 : f32 to vector<24x16xf32>
    %61 = arith.mulf %59, %60 : vector<24x16xf32>
    %62 = arith.truncf %61 : vector<24x16xf32> to vector<24x16xbf16>
    %63 = vector.extract_strided_slice %58 {offsets = [0, 64], sizes = [24, 16], strides = [1, 1]} : vector<24x192xf32> to vector<24x16xf32>
    %64 = arith.truncf %63 : vector<24x16xf32> to vector<24x16xbf16>
    %65 = vector.extract_strided_slice %58 {offsets = [0, 128], sizes = [24, 16], strides = [1, 1]} : vector<24x192xf32> to vector<24x16xf32>
    %66 = arith.truncf %65 : vector<24x16xf32> to vector<24x16xbf16>
    %cst_27 = arith.constant dense<0.000000e+00> : vector<24x24xf32>
    %67 = tpu.matmul %62, %64, %cst_27 {dimension_numbers = #tpu.dot_dimension_numbers<[1], [1], [0], [0], [0, 0, 1, 0], [], []>} : vector<24x16xbf16>, vector<24x16xbf16>, vector<24x24xf32> -> vector<24x24xf32>
    %cst_28 = arith.constant dense<0xFF800000> : vector<24xf32>
    %68 = vector.multi_reduction <maximumf>, %67, %cst_28 [1] : vector<24x24xf32> to vector<24xf32>
    %69 = vector.shape_cast %68 : vector<24xf32> to vector<24x1xf32>
    %70 = vector.broadcast %69 : vector<24x1xf32> to vector<24x24xf32>
    %71 = arith.subf %67, %70 : vector<24x24xf32>
    %72 = math.exp %71 : vector<24x24xf32>
    %cst_29 = arith.constant dense<0.000000e+00> : vector<24xf32>
    %73 = vector.multi_reduction <add>, %72, %cst_29 [1] : vector<24x24xf32> to vector<24xf32>
    %74 = vector.shape_cast %73 : vector<24xf32> to vector<24x1xf32>
    %75 = arith.truncf %72 : vector<24x24xf32> to vector<24x24xbf16>
    %cst_30 = arith.constant dense<0.000000e+00> : vector<24x16xf32>
    %76 = tpu.matmul %75, %66, %cst_30 {dimension_numbers = #tpu.dot_dimension_numbers<[1], [0], [0], [1], [0, 0, 1, 1], [], []>} : vector<24x24xbf16>, vector<24x16xbf16>, vector<24x16xf32> -> vector<24x16xf32>
    %77 = tpu.reciprocal %74 : vector<24x1xf32> -> vector<24x1xf32>
    %78 = vector.broadcast %77 : vector<24x1xf32> to vector<24x16xf32>
    %79 = arith.mulf %76, %78 : vector<24x16xf32>
    %80 = vector.extract_strided_slice %58 {offsets = [0, 16], sizes = [24, 16], strides = [1, 1]} : vector<24x192xf32> to vector<24x16xf32>
    %cst_31 = arith.constant 2.500000e-01 : f32
    %81 = vector.broadcast %cst_31 : f32 to vector<24x16xf32>
    %82 = arith.mulf %80, %81 : vector<24x16xf32>
    %83 = arith.truncf %82 : vector<24x16xf32> to vector<24x16xbf16>
    %84 = vector.extract_strided_slice %58 {offsets = [0, 80], sizes = [24, 16], strides = [1, 1]} : vector<24x192xf32> to vector<24x16xf32>
    %85 = arith.truncf %84 : vector<24x16xf32> to vector<24x16xbf16>
    %86 = vector.extract_strided_slice %58 {offsets = [0, 144], sizes = [24, 16], strides = [1, 1]} : vector<24x192xf32> to vector<24x16xf32>
    %87 = arith.truncf %86 : vector<24x16xf32> to vector<24x16xbf16>
    %cst_32 = arith.constant dense<0.000000e+00> : vector<24x24xf32>
    %88 = tpu.matmul %83, %85, %cst_32 {dimension_numbers = #tpu.dot_dimension_numbers<[1], [1], [0], [0], [0, 0, 1, 0], [], []>} : vector<24x16xbf16>, vector<24x16xbf16>, vector<24x24xf32> -> vector<24x24xf32>
    %cst_33 = arith.constant dense<0xFF800000> : vector<24xf32>
    %89 = vector.multi_reduction <maximumf>, %88, %cst_33 [1] : vector<24x24xf32> to vector<24xf32>
    %90 = vector.shape_cast %89 : vector<24xf32> to vector<24x1xf32>
    %91 = vector.broadcast %90 : vector<24x1xf32> to vector<24x24xf32>
    %92 = arith.subf %88, %91 : vector<24x24xf32>
    %93 = math.exp %92 : vector<24x24xf32>
    %cst_34 = arith.constant dense<0.000000e+00> : vector<24xf32>
    %94 = vector.multi_reduction <add>, %93, %cst_34 [1] : vector<24x24xf32> to vector<24xf32>
    %95 = vector.shape_cast %94 : vector<24xf32> to vector<24x1xf32>
    %96 = arith.truncf %93 : vector<24x24xf32> to vector<24x24xbf16>
    %cst_35 = arith.constant dense<0.000000e+00> : vector<24x16xf32>
    %97 = tpu.matmul %96, %87, %cst_35 {dimension_numbers = #tpu.dot_dimension_numbers<[1], [0], [0], [1], [0, 0, 1, 1], [], []>} : vector<24x24xbf16>, vector<24x16xbf16>, vector<24x16xf32> -> vector<24x16xf32>
    %98 = tpu.reciprocal %95 : vector<24x1xf32> -> vector<24x1xf32>
    %99 = vector.broadcast %98 : vector<24x1xf32> to vector<24x16xf32>
    %100 = arith.mulf %97, %99 : vector<24x16xf32>
    %101 = vector.extract_strided_slice %58 {offsets = [0, 32], sizes = [24, 16], strides = [1, 1]} : vector<24x192xf32> to vector<24x16xf32>
    %cst_36 = arith.constant 2.500000e-01 : f32
    %102 = vector.broadcast %cst_36 : f32 to vector<24x16xf32>
    %103 = arith.mulf %101, %102 : vector<24x16xf32>
    %104 = arith.truncf %103 : vector<24x16xf32> to vector<24x16xbf16>
    %105 = vector.extract_strided_slice %58 {offsets = [0, 96], sizes = [24, 16], strides = [1, 1]} : vector<24x192xf32> to vector<24x16xf32>
    %106 = arith.truncf %105 : vector<24x16xf32> to vector<24x16xbf16>
    %107 = vector.extract_strided_slice %58 {offsets = [0, 160], sizes = [24, 16], strides = [1, 1]} : vector<24x192xf32> to vector<24x16xf32>
    %108 = arith.truncf %107 : vector<24x16xf32> to vector<24x16xbf16>
    %cst_37 = arith.constant dense<0.000000e+00> : vector<24x24xf32>
    %109 = tpu.matmul %104, %106, %cst_37 {dimension_numbers = #tpu.dot_dimension_numbers<[1], [1], [0], [0], [0, 0, 1, 0], [], []>} : vector<24x16xbf16>, vector<24x16xbf16>, vector<24x24xf32> -> vector<24x24xf32>
    %cst_38 = arith.constant dense<0xFF800000> : vector<24xf32>
    %110 = vector.multi_reduction <maximumf>, %109, %cst_38 [1] : vector<24x24xf32> to vector<24xf32>
    %111 = vector.shape_cast %110 : vector<24xf32> to vector<24x1xf32>
    %112 = vector.broadcast %111 : vector<24x1xf32> to vector<24x24xf32>
    %113 = arith.subf %109, %112 : vector<24x24xf32>
    %114 = math.exp %113 : vector<24x24xf32>
    %cst_39 = arith.constant dense<0.000000e+00> : vector<24xf32>
    %115 = vector.multi_reduction <add>, %114, %cst_39 [1] : vector<24x24xf32> to vector<24xf32>
    %116 = vector.shape_cast %115 : vector<24xf32> to vector<24x1xf32>
    %117 = arith.truncf %114 : vector<24x24xf32> to vector<24x24xbf16>
    %cst_40 = arith.constant dense<0.000000e+00> : vector<24x16xf32>
    %118 = tpu.matmul %117, %108, %cst_40 {dimension_numbers = #tpu.dot_dimension_numbers<[1], [0], [0], [1], [0, 0, 1, 1], [], []>} : vector<24x24xbf16>, vector<24x16xbf16>, vector<24x16xf32> -> vector<24x16xf32>
    %119 = tpu.reciprocal %116 : vector<24x1xf32> -> vector<24x1xf32>
    %120 = vector.broadcast %119 : vector<24x1xf32> to vector<24x16xf32>
    %121 = arith.mulf %118, %120 : vector<24x16xf32>
    %122 = vector.extract_strided_slice %58 {offsets = [0, 48], sizes = [24, 16], strides = [1, 1]} : vector<24x192xf32> to vector<24x16xf32>
    %cst_41 = arith.constant 2.500000e-01 : f32
    %123 = vector.broadcast %cst_41 : f32 to vector<24x16xf32>
    %124 = arith.mulf %122, %123 : vector<24x16xf32>
    %125 = arith.truncf %124 : vector<24x16xf32> to vector<24x16xbf16>
    %126 = vector.extract_strided_slice %58 {offsets = [0, 112], sizes = [24, 16], strides = [1, 1]} : vector<24x192xf32> to vector<24x16xf32>
    %127 = arith.truncf %126 : vector<24x16xf32> to vector<24x16xbf16>
    %128 = vector.extract_strided_slice %58 {offsets = [0, 176], sizes = [24, 16], strides = [1, 1]} : vector<24x192xf32> to vector<24x16xf32>
    %129 = arith.truncf %128 : vector<24x16xf32> to vector<24x16xbf16>
    %cst_42 = arith.constant dense<0.000000e+00> : vector<24x24xf32>
    %130 = tpu.matmul %125, %127, %cst_42 {dimension_numbers = #tpu.dot_dimension_numbers<[1], [1], [0], [0], [0, 0, 1, 0], [], []>} : vector<24x16xbf16>, vector<24x16xbf16>, vector<24x24xf32> -> vector<24x24xf32>
    %cst_43 = arith.constant dense<0xFF800000> : vector<24xf32>
    %131 = vector.multi_reduction <maximumf>, %130, %cst_43 [1] : vector<24x24xf32> to vector<24xf32>
    %132 = vector.shape_cast %131 : vector<24xf32> to vector<24x1xf32>
    %133 = vector.broadcast %132 : vector<24x1xf32> to vector<24x24xf32>
    %134 = arith.subf %130, %133 : vector<24x24xf32>
    %135 = math.exp %134 : vector<24x24xf32>
    %cst_44 = arith.constant dense<0.000000e+00> : vector<24xf32>
    %136 = vector.multi_reduction <add>, %135, %cst_44 [1] : vector<24x24xf32> to vector<24xf32>
    %137 = vector.shape_cast %136 : vector<24xf32> to vector<24x1xf32>
    %138 = arith.truncf %135 : vector<24x24xf32> to vector<24x24xbf16>
    %cst_45 = arith.constant dense<0.000000e+00> : vector<24x16xf32>
    %139 = tpu.matmul %138, %129, %cst_45 {dimension_numbers = #tpu.dot_dimension_numbers<[1], [0], [0], [1], [0, 0, 1, 1], [], []>} : vector<24x24xbf16>, vector<24x16xbf16>, vector<24x16xf32> -> vector<24x16xf32>
    %140 = tpu.reciprocal %137 : vector<24x1xf32> -> vector<24x1xf32>
    %141 = vector.broadcast %140 : vector<24x1xf32> to vector<24x16xf32>
    %142 = arith.mulf %139, %141 : vector<24x16xf32>
    %143 = tpu.concatenate %79, %100, %121, %142 in 1 : vector<24x16xf32>, vector<24x16xf32>, vector<24x16xf32>, vector<24x16xf32> -> vector<24x64xf32>
    %144 = vector.extract_strided_slice %143 {offsets = [0, 0], sizes = [8, 64], strides = [1, 1]} : vector<24x64xf32> to vector<8x64xf32>
    %c0_46 = arith.constant 0 : index
    %c0_47 = arith.constant 0 : index
    %145 = vector.load %arg9[%c0_46, %c0_47] : memref<64x32xbf16, #tpu.memory_space<vmem>>, vector<64x32xbf16>
    %146 = arith.truncf %144 : vector<8x64xf32> to vector<8x64xbf16>
    %cst_48 = arith.constant dense<0.000000e+00> : vector<8x32xf32>
    %147 = tpu.matmul %146, %145, %cst_48 {dimension_numbers = #tpu.dot_dimension_numbers<[1], [0], [0], [1], [0, 0, 1, 1], [], []>} : vector<8x64xbf16>, vector<64x32xbf16>, vector<8x32xf32> -> vector<8x32xf32>
    %c0_49 = arith.constant 0 : index
    %c0_50 = arith.constant 0 : index
    %c0_51 = arith.constant 0 : index
    %148 = vector.load %arg5[%c0_49, %c0_50, %c0_51] : memref<1x1x32xf32, #tpu.memory_space<vmem>>, vector<1x1x32xf32>
    %149 = vector.shape_cast %148 : vector<1x1x32xf32> to vector<1x32xf32>
    %150 = vector.broadcast %149 : vector<1x32xf32> to vector<8x32xf32>
    %151 = arith.mulf %147, %150 : vector<8x32xf32>
    %c0_52 = arith.constant 0 : index
    %c0_53 = arith.constant 0 : index
    %c0_54 = arith.constant 0 : index
    %152 = vector.load %arg1[%c0_52, %c0_53, %c0_54] : memref<1x8x32xf32, #tpu.memory_space<vmem>>, vector<1x8x32xf32>
    %153 = vector.shape_cast %152 : vector<1x8x32xf32> to vector<8x32xf32>
    %154 = arith.addf %151, %153 : vector<8x32xf32>
    %c0_55 = arith.constant 0 : index
    %c0_56 = arith.constant 0 : index
    %c0_57 = arith.constant 0 : index
    %155 = vector.load %arg11[%c0_55, %c0_56, %c0_57] : memref<1x8x32xf32, #tpu.memory_space<vmem>>, vector<1x8x32xf32>
    %156 = vector.shape_cast %155 : vector<1x8x32xf32> to vector<8x32xf32>
    %157 = vector.shape_cast %154 : vector<8x32xf32> to vector<1x8x32xf32>
    tpu.vector_store %arg11[%c0_55, %c0_56, %c0_57], %157 {strides = array<i32>} : memref<1x8x32xf32, #tpu.memory_space<vmem>>, vector<1x8x32xf32>,
    %158 = vector.extract_strided_slice %143 {offsets = [8, 0], sizes = [16, 64], strides = [1, 1]} : vector<24x64xf32> to vector<16x64xf32>
    %c0_58 = arith.constant 0 : index
    %c0_59 = arith.constant 0 : index
    %159 = vector.load %arg10[%c0_58, %c0_59] : memref<64x64xbf16, #tpu.memory_space<vmem>>, vector<64x64xbf16>
    %160 = arith.truncf %158 : vector<16x64xf32> to vector<16x64xbf16>
    %cst_60 = arith.constant dense<0.000000e+00> : vector<16x64xf32>
    %161 = tpu.matmul %160, %159, %cst_60 {dimension_numbers = #tpu.dot_dimension_numbers<[1], [0], [0], [1], [0, 0, 1, 1], [], []>} : vector<16x64xbf16>, vector<64x64xbf16>, vector<16x64xf32> -> vector<16x64xf32>
    %c0_61 = arith.constant 0 : index
    %c0_62 = arith.constant 0 : index
    %c0_63 = arith.constant 0 : index
    %162 = vector.load %arg6[%c0_61, %c0_62, %c0_63] : memref<1x1x64xf32, #tpu.memory_space<vmem>>, vector<1x1x64xf32>
    %163 = vector.shape_cast %162 : vector<1x1x64xf32> to vector<1x64xf32>
    %164 = vector.broadcast %163 : vector<1x64xf32> to vector<16x64xf32>
    %165 = arith.mulf %161, %164 : vector<16x64xf32>
    %c0_64 = arith.constant 0 : index
    %c0_65 = arith.constant 0 : index
    %c0_66 = arith.constant 0 : index
    %166 = vector.load %arg2[%c0_64, %c0_65, %c0_66] : memref<1x16x64xf32, #tpu.memory_space<vmem>>, vector<1x16x64xf32>
    %167 = vector.shape_cast %166 : vector<1x16x64xf32> to vector<16x64xf32>
    %168 = arith.addf %165, %167 : vector<16x64xf32>
    %c0_67 = arith.constant 0 : index
    %c0_68 = arith.constant 0 : index
    %c0_69 = arith.constant 0 : index
    %169 = vector.load %arg12[%c0_67, %c0_68, %c0_69] : memref<1x16x64xf32, #tpu.memory_space<vmem>>, vector<1x16x64xf32>
    %170 = vector.shape_cast %169 : vector<1x16x64xf32> to vector<16x64xf32>
    %171 = vector.shape_cast %168 : vector<16x64xf32> to vector<1x16x64xf32>
    tpu.vector_store %arg12[%c0_67, %c0_68, %c0_69], %171 {strides = array<i32>} : memref<1x16x64xf32, #tpu.memory_space<vmem>>, vector<1x16x64xf32>,
    return
  }
  func.func @transform_0(%arg0: i32) -> (i32, i32, i32) {
    %c0_i32 = arith.constant 0 : i32
    %c0_i32_0 = arith.constant 0 : i32
    %c0_i32_1 = arith.constant 0 : i32
    return %arg0, %c0_i32, %c0_i32_0 : i32, i32, i32
  }
  func.func @transform_1(%arg0: i32) -> (i32, i32, i32) {
    %c0_i32 = arith.constant 0 : i32
    %c0_i32_0 = arith.constant 0 : i32
    %c0_i32_1 = arith.constant 0 : i32
    return %arg0, %c0_i32, %c0_i32_0 : i32, i32, i32
  }
  func.func @transform_2(%arg0: i32) -> (i32, i32, i32) {
    %c0_i32 = arith.constant 0 : i32
    %c0_i32_0 = arith.constant 0 : i32
    %c0_i32_1 = arith.constant 0 : i32
    return %arg0, %c0_i32, %c0_i32_0 : i32, i32, i32
  }
  func.func @transform_3(%arg0: i32) -> (i32, i32, i32) {
    %c0_i32 = arith.constant 0 : i32
    %c0_i32_0 = arith.constant 0 : i32
    %c0_i32_1 = arith.constant 0 : i32
    return %arg0, %c0_i32, %c0_i32_0 : i32, i32, i32
  }
  func.func @transform_4(%arg0: i32) -> (i32, i32, i32) {
    %c0_i32 = arith.constant 0 : i32
    %c0_i32_0 = arith.constant 0 : i32
    %c0_i32_1 = arith.constant 0 : i32
    return %arg0, %c0_i32, %c0_i32_0 : i32, i32, i32
  }
  func.func @transform_5(%arg0: i32) -> (i32, i32, i32) {
    %c0_i32 = arith.constant 0 : i32
    %c0_i32_0 = arith.constant 0 : i32
    %c0_i32_1 = arith.constant 0 : i32
    return %arg0, %c0_i32, %c0_i32_0 : i32, i32, i32
  }
  func.func @transform_6(%arg0: i32) -> (i32, i32) {
    %c0_i32 = arith.constant 0 : i32
    %c0_i32_0 = arith.constant 0 : i32
    %c0_i32_1 = arith.constant 0 : i32
    return %c0_i32, %c0_i32_0 : i32, i32
  }
  func.func @transform_7(%arg0: i32) -> (i32, i32) {
    %c0_i32 = arith.constant 0 : i32
    %c0_i32_0 = arith.constant 0 : i32
    %c0_i32_1 = arith.constant 0 : i32
    return %c0_i32, %c0_i32_0 : i32, i32
  }
  func.func @transform_8(%arg0: i32) -> (i32, i32) {
    %c0_i32 = arith.constant 0 : i32
    %c0_i32_0 = arith.constant 0 : i32
    %c0_i32_1 = arith.constant 0 : i32
    return %c0_i32, %c0_i32_0 : i32, i32
  }
  func.func @transform_9(%arg0: i32) -> (i32, i32) {
    %c0_i32 = arith.constant 0 : i32
    %c0_i32_0 = arith.constant 0 : i32
    %c0_i32_1 = arith.constant 0 : i32
    return %c0_i32, %c0_i32_0 : i32, i32
  }
  func.func @transform_10(%arg0: i32) -> (i32, i32, i32) {
    %c0_i32 = arith.constant 0 : i32
    %c0_i32_0 = arith.constant 0 : i32
    %c0_i32_1 = arith.constant 0 : i32
    return %arg0, %c0_i32, %c0_i32_0 : i32, i32, i32
  }
  func.func @transform_11(%arg0: i32) -> (i32, i32, i32) {
    %c0_i32 = arith.constant 0 : i32
    %c0_i32_0 = arith.constant 0 : i32
    %c0_i32_1 = arith.constant 0 : i32
    return %arg0, %c0_i32, %c0_i32_0 : i32, i32, i32
  }
}

module attributes {stable_mosaic.version = 11 : i64} {
  func.func @_rmsnorm_kernel(%arg0: i32, %arg1: memref<1x16x64xf32, #tpu.memory_space<vmem>>, %arg2: memref<1x64xf32, #tpu.memory_space<vmem>>, %arg3: memref<1x16x64xf32, #tpu.memory_space<vmem>>) attributes {dimension_semantics = [#tpu.dimension_semantics<parallel>], iteration_bounds = array<i64: 2>, scalar_prefetch = 0 : i64, scratch_operands = 0 : i64, tpu.core_type = #tpu.core_type<tc>, window_params = [{transform_indices = @transform_0, window_bounds = array<i64: 1, 16, 64>}, {pipeline_mode = #tpu.pipeline_mode<synchronous>, transform_indices = @transform_1, window_bounds = array<i64: 1, 64>}, {transform_indices = @transform_2, window_bounds = array<i64: 1, 16, 64>}]} {
    %c0 = arith.constant 0 : index
    %c0_0 = arith.constant 0 : index
    %c0_1 = arith.constant 0 : index
    %0 = vector.load %arg1[%c0, %c0_0, %c0_1] : memref<1x16x64xf32, #tpu.memory_space<vmem>>, vector<1x16x64xf32>
    %1 = vector.shape_cast %0 : vector<1x16x64xf32> to vector<16x64xf32>
    %2 = arith.mulf %1, %1 : vector<16x64xf32>
    %cst = arith.constant dense<0.000000e+00> : vector<16xf32>
    %3 = vector.multi_reduction <add>, %2, %cst [1] : vector<16x64xf32> to vector<16xf32>
    %4 = vector.shape_cast %3 : vector<16xf32> to vector<16x1xf32>
    %5 = math.sqrt %4 : vector<16x1xf32>
    %cst_2 = arith.constant 9.99999996E-13 : f32
    %6 = vector.broadcast %cst_2 : f32 to vector<16x1xf32>
    %7 = arith.maximumf %5, %6 : vector<16x1xf32>
    %8 = vector.broadcast %7 : vector<16x1xf32> to vector<16x64xf32>
    %9 = arith.divf %1, %8 : vector<16x64xf32>
    %cst_3 = arith.constant 8.000000e+00 : f32
    %10 = vector.broadcast %cst_3 : f32 to vector<16x64xf32>
    %11 = arith.mulf %9, %10 : vector<16x64xf32>
    %c0_4 = arith.constant 0 : index
    %c0_5 = arith.constant 0 : index
    %12 = vector.load %arg2[%c0_4, %c0_5] : memref<1x64xf32, #tpu.memory_space<vmem>>, vector<1x64xf32>
    %cst_6 = arith.constant 1.000000e+00 : f32
    %13 = vector.broadcast %cst_6 : f32 to vector<1x64xf32>
    %14 = arith.addf %12, %13 : vector<1x64xf32>
    %15 = vector.broadcast %14 : vector<1x64xf32> to vector<16x64xf32>
    %16 = arith.mulf %11, %15 : vector<16x64xf32>
    %c0_7 = arith.constant 0 : index
    %c0_8 = arith.constant 0 : index
    %c0_9 = arith.constant 0 : index
    %17 = vector.load %arg3[%c0_7, %c0_8, %c0_9] : memref<1x16x64xf32, #tpu.memory_space<vmem>>, vector<1x16x64xf32>
    %18 = vector.shape_cast %17 : vector<1x16x64xf32> to vector<16x64xf32>
    %19 = vector.shape_cast %16 : vector<16x64xf32> to vector<1x16x64xf32>
    tpu.vector_store %arg3[%c0_7, %c0_8, %c0_9], %19 {strides = array<i32>} : memref<1x16x64xf32, #tpu.memory_space<vmem>>, vector<1x16x64xf32>,
    return
  }
  func.func @transform_0(%arg0: i32) -> (i32, i32, i32) {
    %c0_i32 = arith.constant 0 : i32
    %c0_i32_0 = arith.constant 0 : i32
    %c0_i32_1 = arith.constant 0 : i32
    return %arg0, %c0_i32, %c0_i32_0 : i32, i32, i32
  }
  func.func @transform_1(%arg0: i32) -> (i32, i32) {
    %c0_i32 = arith.constant 0 : i32
    %c0_i32_0 = arith.constant 0 : i32
    %c0_i32_1 = arith.constant 0 : i32
    return %c0_i32, %c0_i32_0 : i32, i32
  }
  func.func @transform_2(%arg0: i32) -> (i32, i32, i32) {
    %c0_i32 = arith.constant 0 : i32
    %c0_i32_0 = arith.constant 0 : i32
    %c0_i32_1 = arith.constant 0 : i32
    return %arg0, %c0_i32, %c0_i32_0 : i32, i32, i32
  }
}

module attributes {stable_mosaic.version = 11 : i64} {
  func.func @_rmsnorm_kernel(%arg0: i32, %arg1: memref<1x8x32xf32, #tpu.memory_space<vmem>>, %arg2: memref<1x32xf32, #tpu.memory_space<vmem>>, %arg3: memref<1x8x32xf32, #tpu.memory_space<vmem>>) attributes {dimension_semantics = [#tpu.dimension_semantics<parallel>], iteration_bounds = array<i64: 2>, scalar_prefetch = 0 : i64, scratch_operands = 0 : i64, tpu.core_type = #tpu.core_type<tc>, window_params = [{transform_indices = @transform_0, window_bounds = array<i64: 1, 8, 32>}, {pipeline_mode = #tpu.pipeline_mode<synchronous>, transform_indices = @transform_1, window_bounds = array<i64: 1, 32>}, {transform_indices = @transform_2, window_bounds = array<i64: 1, 8, 32>}]} {
    %c0 = arith.constant 0 : index
    %c0_0 = arith.constant 0 : index
    %c0_1 = arith.constant 0 : index
    %0 = vector.load %arg1[%c0, %c0_0, %c0_1] : memref<1x8x32xf32, #tpu.memory_space<vmem>>, vector<1x8x32xf32>
    %1 = vector.shape_cast %0 : vector<1x8x32xf32> to vector<8x32xf32>
    %2 = arith.mulf %1, %1 : vector<8x32xf32>
    %cst = arith.constant dense<0.000000e+00> : vector<8xf32>
    %3 = vector.multi_reduction <add>, %2, %cst [1] : vector<8x32xf32> to vector<8xf32>
    %4 = vector.shape_cast %3 : vector<8xf32> to vector<8x1xf32>
    %5 = math.sqrt %4 : vector<8x1xf32>
    %cst_2 = arith.constant 9.99999996E-13 : f32
    %6 = vector.broadcast %cst_2 : f32 to vector<8x1xf32>
    %7 = arith.maximumf %5, %6 : vector<8x1xf32>
    %8 = vector.broadcast %7 : vector<8x1xf32> to vector<8x32xf32>
    %9 = arith.divf %1, %8 : vector<8x32xf32>
    %cst_3 = arith.constant 5.65685415 : f32
    %10 = vector.broadcast %cst_3 : f32 to vector<8x32xf32>
    %11 = arith.mulf %9, %10 : vector<8x32xf32>
    %c0_4 = arith.constant 0 : index
    %c0_5 = arith.constant 0 : index
    %12 = vector.load %arg2[%c0_4, %c0_5] : memref<1x32xf32, #tpu.memory_space<vmem>>, vector<1x32xf32>
    %cst_6 = arith.constant 1.000000e+00 : f32
    %13 = vector.broadcast %cst_6 : f32 to vector<1x32xf32>
    %14 = arith.addf %12, %13 : vector<1x32xf32>
    %15 = vector.broadcast %14 : vector<1x32xf32> to vector<8x32xf32>
    %16 = arith.mulf %11, %15 : vector<8x32xf32>
    %c0_7 = arith.constant 0 : index
    %c0_8 = arith.constant 0 : index
    %c0_9 = arith.constant 0 : index
    %17 = vector.load %arg3[%c0_7, %c0_8, %c0_9] : memref<1x8x32xf32, #tpu.memory_space<vmem>>, vector<1x8x32xf32>
    %18 = vector.shape_cast %17 : vector<1x8x32xf32> to vector<8x32xf32>
    %19 = vector.shape_cast %16 : vector<8x32xf32> to vector<1x8x32xf32>
    tpu.vector_store %arg3[%c0_7, %c0_8, %c0_9], %19 {strides = array<i32>} : memref<1x8x32xf32, #tpu.memory_space<vmem>>, vector<1x8x32xf32>,
    return
  }
  func.func @transform_0(%arg0: i32) -> (i32, i32, i32) {
    %c0_i32 = arith.constant 0 : i32
    %c0_i32_0 = arith.constant 0 : i32
    %c0_i32_1 = arith.constant 0 : i32
    return %arg0, %c0_i32, %c0_i32_0 : i32, i32, i32
  }
  func.func @transform_1(%arg0: i32) -> (i32, i32) {
    %c0_i32 = arith.constant 0 : i32
    %c0_i32_0 = arith.constant 0 : i32
    %c0_i32_1 = arith.constant 0 : i32
    return %c0_i32, %c0_i32_0 : i32, i32
  }
  func.func @transform_2(%arg0: i32) -> (i32, i32, i32) {
    %c0_i32 = arith.constant 0 : i32
    %c0_i32_0 = arith.constant 0 : i32
    %c0_i32_1 = arith.constant 0 : i32
    return %arg0, %c0_i32, %c0_i32_0 : i32, i32, i32
  }
}

</mosaic_0001>

<llo_original>
// kernel: mmdit_forward.9
$region0: #{mmdit_forward.9}
  #allocation0 [shape = 'u32[]', space=smem, size = 0x4, offset = 0x4, fixed_abs, tag = 'smem constant byte address 0x4 - core index']
  #allocation1 [shape = 'u32[72,128]{1,0:T(1,128)}', space=vmem, size = 0x9000, scoped, tag = 'internal scratch']
  %s0 = inlined_call_operand.vmem [shape: f32[2,8,32], index: 0, kind: input, shape index: {}]
  %s1 = inlined_call_operand.vmem [shape: f32[2,1,64], index: 1, kind: input, shape index: {}]
  %s2 = inlined_call_operand.vmem [shape: f32[2,1,32], index: 2, kind: input, shape index: {}]
  %s3 = inlined_call_operand.vmem [shape: bf16[32,128], index: 3, kind: input, shape index: {}]
  %s4 = inlined_call_operand.vmem [shape: f32[1,128], index: 4, kind: input, shape index: {}]
  %s5 = inlined_call_operand.vmem [shape: bf16[128,32], index: 5, kind: input, shape index: {}]
  %s6 = inlined_call_operand.vmem [shape: f32[1,32], index: 6, kind: input, shape index: {}]
  %s7 = inlined_call_operand.vmem [shape: f32[2,8,32], index: 7, kind: output, shape index: {}]
  %s8 = sld [smem:[#allocation0]]
  $region61: #{mmdit_forward.9} parent=0
    _
  %s10 = ssub.s32 1, %s8
  %s11 = scalar_select 0, %s10, %s8
  loop: start=0, step=1, limit=4
  $region2: #{mmdit_forward.9} parent=0 // loop_pre_header
    _
  $region3: #{mmdit_forward.9} parent=0 // loop_header
    %s13 = sphi 0, %s17
    %p14 = scmp.ge.s32.totalorder %s13, 4
    %s23 = sphi 0, %s25
    %s26 = sphi 0, %s23
    %s27 = sphi 0, %s26
    %s43 = sphi 0, %s27
    %s49 = sphi 0, %s51
    %s52 = sphi 0, %s49
    %s53 = sphi 0, %s52
    %s69 = sphi 0, %s53
    %s75 = sphi 0, %s77
    %s78 = sphi 0, %s75
    %s79 = sphi 0, %s78
    %s95 = sphi 0, %s79
    %s99 = sphi 0, %s99
    %s101 = sphi 0, %s99
    %s102 = sphi 0, %s101
    %s116 = sphi 0, %s102
    %s120 = sphi 0, %s120
    %s122 = sphi 0, %s120
    %s123 = sphi 0, %s122
    %s137 = sphi 0, %s123
    %s141 = sphi 0, %s141
    %s143 = sphi 0, %s141
    %s144 = sphi 0, %s143
    %s158 = sphi 0, %s144
    %s162 = sphi 0, %s162
    %s164 = sphi 0, %s162
    %s165 = sphi 0, %s164
    %s179 = sphi 0, %s165
    %s185 = sphi 0, %s187
    %s188 = sphi 0, %s185
    %s189 = sphi 0, %s188
    %s205 = sphi 0, %s189
  $region4: #{mmdit_forward.9} parent=0 // loop_header_branch
    %16 = sbr.rel (%p14) target = $region8
  $region5: #{mmdit_forward.9} parent=0 // loop_body
    %s18 = ssub.s32 %s13, 1
    %s19 = ssub.s32 %s13, 2
    %s20 = sadd.s32 %s13, 1
    %s21 = ssub.s32 %s13, %s20
    %p22 = scmp.eq.s32.totalorder %s21, 0
    %s24 = sadd.s32 %s23, 1
    %s25 = scalar_select %p22, %s23, %s24
    %p28 = pneg %p22
    %p29 = scmp.eq.s32.totalorder %s13, 1
    %p30 = por %p28, %p29
    %p31 = scmp.ne.s32.totalorder %s23, %s26
    %p32 = scmp.eq.s32.totalorder %s13, 0
    %p33 = por %p31, %p32
    %p34 = scmp.ne.s32.totalorder %s23, %s26
    %p35 = scmp.eq.s32.totalorder %s18, 1
    %p36 = por %p34, %p35
    %p37 = scmp.ne.s32.totalorder %s26, %s27
    %p38 = scmp.eq.s32.totalorder %s18, 0
    %p39 = por %p37, %p38
    %p40 = scmp.ne.s32.totalorder %s26, %s27
    %p41 = scmp.eq.s32.totalorder %s19, 1
    %p42 = por %p40, %p41
    %p44 = scmp.ne.s32.totalorder %s27, %s43
    %p45 = scmp.eq.s32.totalorder %s19, 0
    %p46 = por %p44, %p45
    %s47 = ssub.s32 %s13, %s20
    %p48 = scmp.eq.s32.totalorder %s47, 0
    %s50 = sadd.s32 %s49, 1
    %s51 = scalar_select %p48, %s49, %s50
    %p54 = pneg %p48
    %p55 = scmp.eq.s32.totalorder %s13, 1
    %p56 = por %p54, %p55
    %p57 = scmp.ne.s32.totalorder %s49, %s52
    %p58 = scmp.eq.s32.totalorder %s13, 0
    %p59 = por %p57, %p58
    %p60 = scmp.ne.s32.totalorder %s49, %s52
    %p61 = scmp.eq.s32.totalorder %s18, 1
    %p62 = por %p60, %p61
    %p63 = scmp.ne.s32.totalorder %s52, %s53
    %p64 = scmp.eq.s32.totalorder %s18, 0
    %p65 = por %p63, %p64
    %p66 = scmp.ne.s32.totalorder %s52, %s53
    %p67 = scmp.eq.s32.totalorder %s19, 1
    %p68 = por %p66, %p67
    %p70 = scmp.ne.s32.totalorder %s53, %s69
    %p71 = scmp.eq.s32.totalorder %s19, 0
    %p72 = por %p70, %p71
    %s73 = ssub.s32 %s13, %s20
    %p74 = scmp.eq.s32.totalorder %s73, 0
    %s76 = sadd.s32 %s75, 1
    %s77 = scalar_select %p74, %s75, %s76
    %p80 = pneg %p74
    %p81 = scmp.eq.s32.totalorder %s13, 1
    %p82 = por %p80, %p81
    %p83 = scmp.ne.s32.totalorder %s75, %s78
    %p84 = scmp.eq.s32.totalorder %s13, 0
    %p85 = por %p83, %p84
    %p86 = scmp.ne.s32.totalorder %s75, %s78
    %p87 = scmp.eq.s32.totalorder %s18, 1
    %p88 = por %p86, %p87
    %p89 = scmp.ne.s32.totalorder %s78, %s79
    %p90 = scmp.eq.s32.totalorder %s18, 0
    %p91 = por %p89, %p90
    %p92 = scmp.ne.s32.totalorder %s78, %s79
    %p93 = scmp.eq.s32.totalorder %s19, 1
    %p94 = por %p92, %p93
    %p96 = scmp.ne.s32.totalorder %s79, %s95
    %p97 = scmp.eq.s32.totalorder %s19, 0
    %p98 = por %p96, %p97
    %s100 = sadd.s32 %s99, 1
    %p103 = scmp.eq.s32.totalorder %s13, 1
    %p104 = scmp.ne.s32.totalorder %s99, %s101
    %p105 = scmp.eq.s32.totalorder %s13, 0
    %p106 = por %p104, %p105
    %p107 = scmp.ne.s32.totalorder %s99, %s101
    %p108 = scmp.eq.s32.totalorder %s18, 1
    %p109 = por %p107, %p108
    %p110 = scmp.ne.s32.totalorder %s101, %s102
    %p111 = scmp.eq.s32.totalorder %s18, 0
    %p112 = por %p110, %p111
    %p113 = scmp.ne.s32.totalorder %s101, %s102
    %p114 = scmp.eq.s32.totalorder %s19, 1
    %p115 = por %p113, %p114
    %p117 = scmp.ne.s32.totalorder %s102, %s116
    %p118 = scmp.eq.s32.totalorder %s19, 0
    %p119 = por %p117, %p118
    %s121 = sadd.s32 %s120, 1
    %p124 = scmp.eq.s32.totalorder %s13, 1
    %p125 = scmp.ne.s32.totalorder %s120, %s122
    %p126 = scmp.eq.s32.totalorder %s13, 0
    %p127 = por %p125, %p126
    %p128 = scmp.ne.s32.totalorder %s120, %s122
    %p129 = scmp.eq.s32.totalorder %s18, 1
    %p130 = por %p128, %p129
    %p131 = scmp.ne.s32.totalorder %s122, %s123
    %p132 = scmp.eq.s32.totalorder %s18, 0
    %p133 = por %p131, %p132
    %p134 = scmp.ne.s32.totalorder %s122, %s123
    %p135 = scmp.eq.s32.totalorder %s19, 1
    %p136 = por %p134, %p135
    %p138 = scmp.ne.s32.totalorder %s123, %s137
    %p139 = scmp.eq.s32.totalorder %s19, 0
    %p140 = por %p138, %p139
    %s142 = sadd.s32 %s141, 1
    %p145 = scmp.eq.s32.totalorder %s13, 1
    %p146 = scmp.ne.s32.totalorder %s141, %s143
    %p147 = scmp.eq.s32.totalorder %s13, 0
    %p148 = por %p146, %p147
    %p149 = scmp.ne.s32.totalorder %s141, %s143
    %p150 = scmp.eq.s32.totalorder %s18, 1
    %p151 = por %p149, %p150
    %p152 = scmp.ne.s32.totalorder %s143, %s144
    %p153 = scmp.eq.s32.totalorder %s18, 0
    %p154 = por %p152, %p153
    %p155 = scmp.ne.s32.totalorder %s143, %s144
    %p156 = scmp.eq.s32.totalorder %s19, 1
    %p157 = por %p155, %p156
    %p159 = scmp.ne.s32.totalorder %s144, %s158
    %p160 = scmp.eq.s32.totalorder %s19, 0
    %p161 = por %p159, %p160
    %s163 = sadd.s32 %s162, 1
    %p166 = scmp.eq.s32.totalorder %s13, 1
    %p167 = scmp.ne.s32.totalorder %s162, %s164
    %p168 = scmp.eq.s32.totalorder %s13, 0
    %p169 = por %p167, %p168
    %p170 = scmp.ne.s32.totalorder %s162, %s164
    %p171 = scmp.eq.s32.totalorder %s18, 1
    %p172 = por %p170, %p171
    %p173 = scmp.ne.s32.totalorder %s164, %s165
    %p174 = scmp.eq.s32.totalorder %s18, 0
    %p175 = por %p173, %p174
    %p176 = scmp.ne.s32.totalorder %s164, %s165
    %p177 = scmp.eq.s32.totalorder %s19, 1
    %p178 = por %p176, %p177
    %p180 = scmp.ne.s32.totalorder %s165, %s179
    %p181 = scmp.eq.s32.totalorder %s19, 0
    %p182 = por %p180, %p181
    %s183 = ssub.s32 %s13, %s20
    %p184 = scmp.eq.s32.totalorder %s183, 0
    %s186 = sadd.s32 %s185, 1
    %s187 = scalar_select %p184, %s185, %s186
    %p190 = pneg %p184
    %p191 = scmp.eq.s32.totalorder %s13, 1
    %p192 = por %p190, %p191
    %p193 = scmp.ne.s32.totalorder %s185, %s188
    %p194 = scmp.eq.s32.totalorder %s13, 0
    %p195 = por %p193, %p194
    %p196 = scmp.ne.s32.totalorder %s185, %s188
    %p197 = scmp.eq.s32.totalorder %s18, 1
    %p198 = por %p196, %p197
    %p199 = scmp.ne.s32.totalorder %s188, %s189
    %p200 = scmp.eq.s32.totalorder %s18, 0
    %p201 = por %p199, %p200
    %p202 = scmp.ne.s32.totalorder %s188, %s189
    %p203 = scmp.eq.s32.totalorder %s19, 1
    %p204 = por %p202, %p203
    %p206 = scmp.ne.s32.totalorder %s189, %s205
    %p207 = scmp.eq.s32.totalorder %s19, 0
    %p208 = por %p206, %p207
    %p209 = scmp.le.s32.totalorder 1, %s13
    %p210 = scmp.lt.s32.totalorder %s13, 3
    %p211 = pnand %p209, %p210
    %p212 = pneg %p211
    // Predicated region
    $region9: #{mmdit_forward.9} parent=5 // pred_check
      _
    $region10: #{mmdit_forward.9} parent=5 // pred_check_branch
      %214 = sbr.rel (%p211) target = $region12
    $region11: #{mmdit_forward.9} parent=5 // pred_region
      %s215 = ssub.s32 %s13, 1
      // Predicated region
      $region13: #{mmdit_forward.9} parent=11 // pred_check
        %p216 = pneg %p112
      $region14: #{mmdit_forward.9} parent=11 // pred_check_branch
        %218 = sbr.rel (%p216) target = $region16
      $region15: #{mmdit_forward.9} parent=11 // pred_region
        _
      $region16: #{mmdit_forward.9} parent=11 // pred_fallthru
        _
      // Predicated region
      $region17: #{mmdit_forward.9} parent=11 // pred_check
        %p219 = pneg %p133
      $region18: #{mmdit_forward.9} parent=11 // pred_check_branch
        %221 = sbr.rel (%p219) target = $region20
      $region19: #{mmdit_forward.9} parent=11 // pred_region
        _
      $region20: #{mmdit_forward.9} parent=11 // pred_fallthru
        _
      // Predicated region
      $region21: #{mmdit_forward.9} parent=11 // pred_check
        %p222 = pneg %p154
      $region22: #{mmdit_forward.9} parent=11 // pred_check_branch
        %224 = sbr.rel (%p222) target = $region24
      $region23: #{mmdit_forward.9} parent=11 // pred_region
        _
      $region24: #{mmdit_forward.9} parent=11 // pred_fallthru
        _
      // Predicated region
      $region25: #{mmdit_forward.9} parent=11 // pred_check
        %p225 = pneg %p175
      $region26: #{mmdit_forward.9} parent=11 // pred_check_branch
        %227 = sbr.rel (%p225) target = $region28
      $region27: #{mmdit_forward.9} parent=11 // pred_region
        _
      $region28: #{mmdit_forward.9} parent=11 // pred_fallthru
        _
    $region12: #{mmdit_forward.9} parent=5 // pred_fallthru
      _
    %p228 = scmp.lt.s32.totalorder %s13, 2
    // Predicated region
    $region29: #{mmdit_forward.9} parent=5 // pred_check
      %p229 = pneg %p228
    $region30: #{mmdit_forward.9} parent=5 // pred_check_branch
      %231 = sbr.rel (%p229) target = $region32
    $region31: #{mmdit_forward.9} parent=5 // pred_region
      // Predicated region
      $region33: #{mmdit_forward.9} parent=31 // pred_check
        %p232 = pneg %p33
      $region34: #{mmdit_forward.9} parent=31 // pred_check_branch
        %234 = sbr.rel (%p232) target = $region36
      $region35: #{mmdit_forward.9} parent=31 // pred_region
        %p235 = scmp.lt.s32.totalorder %s13, 1
        %s236 = scalar_select %p235, %s13, 1
        %s237 = smul.addr %s236, 8
        %s238 = scalar_lea.vmem %s0, %s237
      $region36: #{mmdit_forward.9} parent=31 // pred_fallthru
        _
      // Predicated region
      $region37: #{mmdit_forward.9} parent=31 // pred_check
        %p239 = pneg %p59
      $region38: #{mmdit_forward.9} parent=31 // pred_check_branch
        %241 = sbr.rel (%p239) target = $region40
      $region39: #{mmdit_forward.9} parent=31 // pred_region
        %p242 = scmp.lt.s32.totalorder %s13, 1
        %s243 = scalar_select %p242, %s13, 1
        %s244 = scalar_lea.vmem %s1, %s243
      $region40: #{mmdit_forward.9} parent=31 // pred_fallthru
        _
      // Predicated region
      $region41: #{mmdit_forward.9} parent=31 // pred_check
        %p245 = pneg %p85
      $region42: #{mmdit_forward.9} parent=31 // pred_check_branch
        %247 = sbr.rel (%p245) target = $region44
      $region43: #{mmdit_forward.9} parent=31 // pred_region
        %p248 = scmp.lt.s32.totalorder %s13, 1
        %s249 = scalar_select %p248, %s13, 1
        %s250 = scalar_lea.vmem %s2, %s249
      $region44: #{mmdit_forward.9} parent=31 // pred_fallthru
        _
    $region32: #{mmdit_forward.9} parent=5 // pred_fallthru
      _
    %p251 = scmp.le.s32.totalorder 1, %s13
    %p252 = scmp.lt.s32.totalorder %s13, 3
    %p253 = pnand %p251, %p252
    %p254 = pneg %p253
    // Predicated region
    $region45: #{mmdit_forward.9} parent=5 // pred_check
      _
    $region46: #{mmdit_forward.9} parent=5 // pred_check_branch
      %256 = sbr.rel (%p253) target = $region48
    $region47: #{mmdit_forward.9} parent=5 // pred_region
      %s257 = ssub.s32 %s13, 1
      %p258 = scmp.lt.s32.totalorder %s18, 1
      %s259 = scalar_select %p258, %s18, 1
      %s260 = smul.addr %s259, 8
      %s261 = scalar_lea.vmem %s0, %s260
      %p262 = pneg %p39
      %p263 = pneg %p36
      %p264 = scmp.lt.s32.totalorder %s18, 1
      %s265 = scalar_select %p264, %s18, 1
      %s266 = scalar_lea.vmem %s1, %s265
      %p267 = pneg %p65
      %p268 = pneg %p62
      %p269 = scmp.lt.s32.totalorder %s18, 1
      %s270 = scalar_select %p269, %s18, 1
      %s271 = scalar_lea.vmem %s2, %s270
      %p272 = pneg %p91
      %p273 = pneg %p88
      %p274 = pneg %p112
      %p275 = pneg %p109
      %p276 = pneg %p133
      %p277 = pneg %p130
      %p278 = pneg %p154
      %p279 = pneg %p151
      %p280 = pneg %p175
      %p281 = pneg %p172
      %p282 = pneg %p201
      %p283 = pneg %p198
      %p284 = scmp.lt.s32.totalorder %s18, 1
      %s285 = scalar_select %p284, %s18, 1
      %s286 = smul.addr %s285, 8
      %s287 = scalar_lea.vmem %s7, %s286
      %p288 = scmp.lt.s32.totalorder %s18, 1
      %s289 = scalar_select %p288, %s18, 1
      %s290 = smul.addr %s289, 8
      %s291 = scalar_lea.vmem %s0, %s290
      %p292 = scmp.lt.s32.totalorder %s18, 1
      %s293 = scalar_select %p292, %s18, 1
      %s294 = scalar_lea.vmem %s1, %s293
      %p295 = scmp.lt.s32.totalorder %s18, 1
      %s296 = scalar_select %p295, %s18, 1
      %s297 = scalar_lea.vmem %s2, %s296
      %p298 = scmp.lt.s32.totalorder %s18, 1
      %s299 = scalar_select %p298, %s18, 1
      %s300 = smul.addr %s299, 8
      %s301 = scalar_lea.vmem %s7, %s300
      %v303 = vld [vmem:[%s291] sm:$0xff]
      %v304 = vld [vmem:[%s294] sm:$0x1]
      %vm305 = vcmask 261120
      %v306 = vsel %vm305, %v303, 0.0
      %307 = vadd.xlane.f32.xlu0 %v306
      %v308 = vpop.xlane.xlu0 %307
      %v309 = vrcp.pop 32.0
      %v310 = vmul.f32 32.0, %v309
      %v311 = vsub.f32 1.0, %v310
      %v312 = vmul.f32 %v309, %v311
      %v313 = vadd.f32 %v309, %v312
      %vm314 = vweird.f32 %v309
      %v315 = vsel %vm314, %v309, %v313
      %v316 = vmul.f32 %v308, %v315
      %v317 = vsub.f32 %v303, %v316
      %v318 = vmul.f32 %v317, %v317
      %v319 = vsel %vm305, %v318, 0.0
      %320 = vadd.xlane.f32.xlu0 %v319
      %v321 = vpop.xlane.xlu0 %320
      %v322 = vmul.f32 %v321, %v315
      %v323 = vadd.f32 %v322, 1e-05
      %v324 = vrsqrt.pop %v323
      %v325 = vmul.f32 %v324, %v323
      %v326 = vmul.f32 %v325, %v324
      %v327 = vmul.f32 0.5, %v326
      %v328 = vsub.f32 1.5, %v327
      %v329 = vmul.f32 %v324, %v328
      %vm330 = vweird.f32 %v323
      %vm331 = vweird.f32 %v324
      %vm332 = vmor %vm330, %vm331
      %v333 = vsel %vm332, %v324, %v329
      %v334 = vmul.f32 %v317, %v333
      %v336 = vperm.slane %v304, 0
      %v338 = vmul.f32 %v334, %v336
      %339 = vrot.lane.b32.xlu0 %v336, 96
      %v340 = vpop.permute.xlu0 %339
      %v342 = vadd.f32 %v338, %v340
      %v343 = vld [vmem:[%s3] sm:$0xf]
      %v344 = vld [vmem:[%s3 + $0x4] sm:$0xf]
      %v345 = vld [vmem:[%s3 + $0x8] sm:$0xf]
      %v346 = vld [vmem:[%s3 + $0xc] sm:$0xf]
      %v347 = vpack.c.bf16 %v342, %v342
      %v348 = vld [vmem:[%s4] sm:$0x1]
      %v350 = vperm.slane %v348, 0
      %v356 = vunpack.c.l.b16 %v343
      %v357 = vunpack.c.l.b16 %v344
      %v358 = vunpack.c.l.b16 %v345
      %v359 = vunpack.c.l.b16 %v346
      %v360 = vpack.c.b16 %v357, %v356
      %v361 = vpack.c.b16 %v359, %v358
      %v365 = vsel %vm305, %v347, 0
      %367 = vmatpush.bf16.msra.mxu0 0
      %368 = vmatpush.bf16.msra.mxu0 0
      %369 = vmatpush.bf16.msra.mxu0 0
      %370 = vmatpush.bf16.msra.mxu0 0
      %371 = vmatpush.bf16.msra.mxu0 0
      %372 = vmatpush.bf16.msra.mxu0 0
      %373 = vmatpush.bf16.msra.mxu0 %v361
      %374 = vmatpush.bf16.msra.mxu0 %v360
      %375 = vmatmul.bf16.gmra.mxu0 %v365
      %v376 = vpop.f32.mrf.mxu0
      %v377 = vadd.f32 %v350, %v376
      %v378 = vpop.f32.mrf.mxu0
      %379 = vdwg.mxu0
      %v380 = vmul.f32 %v377, 0.5
      %v381 = vmul.f32 %v377, 0.70710677
      %v382 = vmax.f32 %v381, -4.0
      %v383 = vmin.f32 %v382, 4.0
      %v384 = vmul.f32 %v383, %v383
      %v385 = vmul.f32 %v384, -2.7261424e-10
      %v386 = vadd.f32 %v385, 2.7706815e-08
      %v387 = vmul.f32 %v386, %v384
      %v388 = vadd.f32 %v387, -2.101024e-06
      %v389 = vmul.f32 %v388, %v384
      %v390 = vadd.f32 %v389, -5.6925062e-05
      %v391 = vmul.f32 %v390, %v384
      %v392 = vadd.f32 %v391, -0.00073499064
      %v393 = vmul.f32 %v392, %v384
      %v394 = vadd.f32 %v393, -0.0029546
      %v395 = vmul.f32 %v394, %v384
      %v396 = vadd.f32 %v395, -0.016096033
      %v397 = vmul.f32 %v384, -1.45660715e-05
      %v398 = vadd.f32 %v397, -0.00021337405
      %v399 = vmul.f32 %v398, %v384
      %v400 = vadd.f32 %v399, -0.001682827
      %v401 = vmul.f32 %v400, %v384
      %v402 = vadd.f32 %v401, -0.0073733293
      %v403 = vmul.f32 %v402, %v384
      %v404 = vadd.f32 %v403, -0.014264739
      %v405 = vmul.f32 %v383, %v396
      %v406 = vrcp.pop %v404
      %v407 = vmul.f32 %v404, %v406
      %v408 = vsub.f32 1.0, %v407
      %v409 = vmul.f32 %v406, %v408
      %v410 = vadd.f32 %v406, %v409
      %vm411 = vweird.f32 %v404
      %vm412 = vweird.f32 %v406
      %vm413 = vmor %vm411, %vm412
      %v414 = vsel %vm413, %v406, %v410
      %v415 = vand.u32 2147483647, %v404
      %vm416 = vcmp.eq.f32.partialorder %v415, 8.507059e+37
      %v417 = vand.u32 %v404, 2147483648
      %v418 = vor.u32 1.1754944e-38, %v417
      %v419 = vsel %vm416, %v418, %v414
      %v420 = vmul.f32 %v405, %v419
      %v421 = vadd.f32 %v420, 1.0
      %v422 = vmul.f32 %v380, %v421
      %v423 = vld [vmem:[%s5] sm:$0xf]
      %v424 = vld [vmem:[%s5 + $0x4] sm:$0xf]
      %v425 = vld [vmem:[%s5 + $0x8] sm:$0xf]
      %v426 = vld [vmem:[%s5 + $0xc] sm:$0xf]
      %v427 = vld [vmem:[%s5 + $0x10] sm:$0xf]
      %v428 = vld [vmem:[%s5 + $0x14] sm:$0xf]
      %v429 = vld [vmem:[%s5 + $0x18] sm:$0xf]
      %v430 = vld [vmem:[%s5 + $0x1c] sm:$0xf]
      %v431 = vld [vmem:[%s5 + $0x20] sm:$0xf]
      %v432 = vld [vmem:[%s5 + $0x24] sm:$0xf]
      %v433 = vld [vmem:[%s5 + $0x28] sm:$0xf]
      %v434 = vld [vmem:[%s5 + $0x2c] sm:$0xf]
      %v435 = vld [vmem:[%s5 + $0x30] sm:$0xf]
      %v436 = vld [vmem:[%s5 + $0x34] sm:$0xf]
      %v437 = vld [vmem:[%s5 + $0x38] sm:$0xf]
      %v438 = vld [vmem:[%s5 + $0x3c] sm:$0xf]
      %v439 = vpack.c.bf16 %v422, %v422
      %v440 = vld [vmem:[%s6] sm:$0x1]
      %v442 = vperm.slane %v440, 0
      %v460 = vunpack.c.l.b16 %v423
      %v461 = vunpack.c.l.b16 %v424
      %v462 = vunpack.c.l.b16 %v425
      %v463 = vunpack.c.l.b16 %v426
      %v464 = vunpack.c.l.b16 %v427
      %v465 = vunpack.c.l.b16 %v428
      %v466 = vunpack.c.l.b16 %v429
      %v467 = vunpack.c.l.b16 %v430
      %v468 = vunpack.c.l.b16 %v431
      %v469 = vunpack.c.l.b16 %v432
      %v470 = vunpack.c.l.b16 %v433
      %v471 = vunpack.c.l.b16 %v434
      %v472 = vunpack.c.l.b16 %v435
      %v473 = vunpack.c.l.b16 %v436
      %v474 = vunpack.c.l.b16 %v437
      %v475 = vunpack.c.l.b16 %v438
      %v476 = vpack.c.b16 %v461, %v460
      %v477 = vpack.c.b16 %v463, %v462
      %v478 = vpack.c.b16 %v465, %v464
      %v479 = vpack.c.b16 %v467, %v466
      %v480 = vpack.c.b16 %v469, %v468
      %v481 = vpack.c.b16 %v471, %v470
      %v482 = vpack.c.b16 %v473, %v472
      %v483 = vpack.c.b16 %v475, %v474
      %492 = vmatpush.bf16.msra.mxu0 %v483
      %493 = vmatpush.bf16.msra.mxu0 %v482
      %494 = vmatpush.bf16.msra.mxu0 %v481
      %495 = vmatpush.bf16.msra.mxu0 %v480
      %496 = vmatpush.bf16.msra.mxu0 %v479
      %497 = vmatpush.bf16.msra.mxu0 %v478
      %498 = vmatpush.bf16.msra.mxu0 %v477
      %499 = vmatpush.bf16.msra.mxu0 %v476
      %500 = vmatmul.bf16.gmra.mxu0 %v439
      %v501 = vpop.f32.mrf.mxu0
      %v502 = vadd.f32 %v442, %v501
      %v503 = vpop.f32.mrf.mxu0
      %504 = vdwg.mxu0
      %v505 = vld [vmem:[%s297] sm:$0x1]
      %v507 = vperm.slane %v505, 0
      %v509 = vmul.f32 %v502, %v507
      %v510 = vadd.f32 %v509, %v303
      %511 = vst.msk [vmem:[%s301] sm:$0xff] %vm305, %v510
      %p512 = scmp.lt.s32.totalorder %s18, 1
      %s513 = scalar_select %p512, %s18, 1
      %s514 = smul.addr %s513, 8
      %s515 = scalar_lea.vmem %s7, %s514
      // Predicated region
      $region49: #{mmdit_forward.9} parent=47 // pred_check
        %p516 = pneg %p198
      $region50: #{mmdit_forward.9} parent=47 // pred_check_branch
        %518 = sbr.rel (%p516) target = $region52
      $region51: #{mmdit_forward.9} parent=47 // pred_region
        _
      $region52: #{mmdit_forward.9} parent=47 // pred_fallthru
        _
    $region48: #{mmdit_forward.9} parent=5 // pred_fallthru
      _
    %p519 = scmp.le.s32.totalorder 2, %s13
    // Predicated region
    $region53: #{mmdit_forward.9} parent=5 // pred_check
      %p520 = pneg %p519
    $region54: #{mmdit_forward.9} parent=5 // pred_check_branch
      %522 = sbr.rel (%p520) target = $region56
    $region55: #{mmdit_forward.9} parent=5 // pred_region
      %s523 = ssub.s32 %s13, 2
      // Predicated region
      $region57: #{mmdit_forward.9} parent=55 // pred_check
        %p524 = pneg %p204
      $region58: #{mmdit_forward.9} parent=55 // pred_check_branch
        %526 = sbr.rel (%p524) target = $region60
      $region59: #{mmdit_forward.9} parent=55 // pred_region
        %p527 = scmp.lt.s32.totalorder %s19, 1
        %s528 = scalar_select %p527, %s19, 1
        %s529 = smul.addr %s528, 8
        %s530 = scalar_lea.vmem %s7, %s529
      $region60: #{mmdit_forward.9} parent=55 // pred_fallthru
        _
    $region56: #{mmdit_forward.9} parent=5 // pred_fallthru
      _
  $region6: #{mmdit_forward.9} parent=0 // loop_footer
    %s17 = sadd.s32 1, %s13
  $region7: #{mmdit_forward.9} parent=0 // loop_footer_branch
    %12 = sbr.rel target = $region3
  $region8: #{mmdit_forward.9} parent=0 // loop_exit
    _

// kernel: mmdit_forward.10
$region0: #{mmdit_forward.10}
  #allocation0 [shape = 'u32[]', space=smem, size = 0x4, offset = 0x4, fixed_abs, tag = 'smem constant byte address 0x4 - core index']
  #allocation1 [shape = 'u32[72,128]{1,0:T(1,128)}', space=vmem, size = 0x9000, scoped, tag = 'internal scratch']
  %s0 = inlined_call_operand.vmem [shape: f32[2,16,64], index: 0, kind: input, shape index: {}]
  %s1 = inlined_call_operand.vmem [shape: f32[2,1,128], index: 1, kind: input, shape index: {}]
  %s2 = inlined_call_operand.vmem [shape: f32[2,1,64], index: 2, kind: input, shape index: {}]
  %s3 = inlined_call_operand.vmem [shape: bf16[64,256], index: 3, kind: input, shape index: {}]
  %s4 = inlined_call_operand.vmem [shape: f32[1,256], index: 4, kind: input, shape index: {}]
  %s5 = inlined_call_operand.vmem [shape: bf16[256,64], index: 5, kind: input, shape index: {}]
  %s6 = inlined_call_operand.vmem [shape: f32[1,64], index: 6, kind: input, shape index: {}]
  %s7 = inlined_call_operand.vmem [shape: f32[2,16,64], index: 7, kind: output, shape index: {}]
  %s8 = sld [smem:[#allocation0]]
  $region61: #{mmdit_forward.10} parent=0
    _
  %s10 = ssub.s32 1, %s8
  %s11 = scalar_select 0, %s10, %s8
  loop: start=0, step=1, limit=4
  $region2: #{mmdit_forward.10} parent=0 // loop_pre_header
    _
  $region3: #{mmdit_forward.10} parent=0 // loop_header
    %s13 = sphi 0, %s17
    %p14 = scmp.ge.s32.totalorder %s13, 4
    %s23 = sphi 0, %s25
    %s26 = sphi 0, %s23
    %s27 = sphi 0, %s26
    %s43 = sphi 0, %s27
    %s49 = sphi 0, %s51
    %s52 = sphi 0, %s49
    %s53 = sphi 0, %s52
    %s69 = sphi 0, %s53
    %s75 = sphi 0, %s77
    %s78 = sphi 0, %s75
    %s79 = sphi 0, %s78
    %s95 = sphi 0, %s79
    %s99 = sphi 0, %s99
    %s101 = sphi 0, %s99
    %s102 = sphi 0, %s101
    %s116 = sphi 0, %s102
    %s120 = sphi 0, %s120
    %s122 = sphi 0, %s120
    %s123 = sphi 0, %s122
    %s137 = sphi 0, %s123
    %s141 = sphi 0, %s141
    %s143 = sphi 0, %s141
    %s144 = sphi 0, %s143
    %s158 = sphi 0, %s144
    %s162 = sphi 0, %s162
    %s164 = sphi 0, %s162
    %s165 = sphi 0, %s164
    %s179 = sphi 0, %s165
    %s185 = sphi 0, %s187
    %s188 = sphi 0, %s185
    %s189 = sphi 0, %s188
    %s205 = sphi 0, %s189
  $region4: #{mmdit_forward.10} parent=0 // loop_header_branch
    %16 = sbr.rel (%p14) target = $region8
  $region5: #{mmdit_forward.10} parent=0 // loop_body
    %s18 = ssub.s32 %s13, 1
    %s19 = ssub.s32 %s13, 2
    %s20 = sadd.s32 %s13, 1
    %s21 = ssub.s32 %s13, %s20
    %p22 = scmp.eq.s32.totalorder %s21, 0
    %s24 = sadd.s32 %s23, 1
    %s25 = scalar_select %p22, %s23, %s24
    %p28 = pneg %p22
    %p29 = scmp.eq.s32.totalorder %s13, 1
    %p30 = por %p28, %p29
    %p31 = scmp.ne.s32.totalorder %s23, %s26
    %p32 = scmp.eq.s32.totalorder %s13, 0
    %p33 = por %p31, %p32
    %p34 = scmp.ne.s32.totalorder %s23, %s26
    %p35 = scmp.eq.s32.totalorder %s18, 1
    %p36 = por %p34, %p35
    %p37 = scmp.ne.s32.totalorder %s26, %s27
    %p38 = scmp.eq.s32.totalorder %s18, 0
    %p39 = por %p37, %p38
    %p40 = scmp.ne.s32.totalorder %s26, %s27
    %p41 = scmp.eq.s32.totalorder %s19, 1
    %p42 = por %p40, %p41
    %p44 = scmp.ne.s32.totalorder %s27, %s43
    %p45 = scmp.eq.s32.totalorder %s19, 0
    %p46 = por %p44, %p45
    %s47 = ssub.s32 %s13, %s20
    %p48 = scmp.eq.s32.totalorder %s47, 0
    %s50 = sadd.s32 %s49, 1
    %s51 = scalar_select %p48, %s49, %s50
    %p54 = pneg %p48
    %p55 = scmp.eq.s32.totalorder %s13, 1
    %p56 = por %p54, %p55
    %p57 = scmp.ne.s32.totalorder %s49, %s52
    %p58 = scmp.eq.s32.totalorder %s13, 0
    %p59 = por %p57, %p58
    %p60 = scmp.ne.s32.totalorder %s49, %s52
    %p61 = scmp.eq.s32.totalorder %s18, 1
    %p62 = por %p60, %p61
    %p63 = scmp.ne.s32.totalorder %s52, %s53
    %p64 = scmp.eq.s32.totalorder %s18, 0
    %p65 = por %p63, %p64
    %p66 = scmp.ne.s32.totalorder %s52, %s53
    %p67 = scmp.eq.s32.totalorder %s19, 1
    %p68 = por %p66, %p67
    %p70 = scmp.ne.s32.totalorder %s53, %s69
    %p71 = scmp.eq.s32.totalorder %s19, 0
    %p72 = por %p70, %p71
    %s73 = ssub.s32 %s13, %s20
    %p74 = scmp.eq.s32.totalorder %s73, 0
    %s76 = sadd.s32 %s75, 1
    %s77 = scalar_select %p74, %s75, %s76
    %p80 = pneg %p74
    %p81 = scmp.eq.s32.totalorder %s13, 1
    %p82 = por %p80, %p81
    %p83 = scmp.ne.s32.totalorder %s75, %s78
    %p84 = scmp.eq.s32.totalorder %s13, 0
    %p85 = por %p83, %p84
    %p86 = scmp.ne.s32.totalorder %s75, %s78
    %p87 = scmp.eq.s32.totalorder %s18, 1
    %p88 = por %p86, %p87
    %p89 = scmp.ne.s32.totalorder %s78, %s79
    %p90 = scmp.eq.s32.totalorder %s18, 0
    %p91 = por %p89, %p90
    %p92 = scmp.ne.s32.totalorder %s78, %s79
    %p93 = scmp.eq.s32.totalorder %s19, 1
    %p94 = por %p92, %p93
    %p96 = scmp.ne.s32.totalorder %s79, %s95
    %p97 = scmp.eq.s32.totalorder %s19, 0
    %p98 = por %p96, %p97
    %s100 = sadd.s32 %s99, 1
    %p103 = scmp.eq.s32.totalorder %s13, 1
    %p104 = scmp.ne.s32.totalorder %s99, %s101
    %p105 = scmp.eq.s32.totalorder %s13, 0
    %p106 = por %p104, %p105
    %p107 = scmp.ne.s32.totalorder %s99, %s101
    %p108 = scmp.eq.s32.totalorder %s18, 1
    %p109 = por %p107, %p108
    %p110 = scmp.ne.s32.totalorder %s101, %s102
    %p111 = scmp.eq.s32.totalorder %s18, 0
    %p112 = por %p110, %p111
    %p113 = scmp.ne.s32.totalorder %s101, %s102
    %p114 = scmp.eq.s32.totalorder %s19, 1
    %p115 = por %p113, %p114
    %p117 = scmp.ne.s32.totalorder %s102, %s116
    %p118 = scmp.eq.s32.totalorder %s19, 0
    %p119 = por %p117, %p118
    %s121 = sadd.s32 %s120, 1
    %p124 = scmp.eq.s32.totalorder %s13, 1
    %p125 = scmp.ne.s32.totalorder %s120, %s122
    %p126 = scmp.eq.s32.totalorder %s13, 0
    %p127 = por %p125, %p126
    %p128 = scmp.ne.s32.totalorder %s120, %s122
    %p129 = scmp.eq.s32.totalorder %s18, 1
    %p130 = por %p128, %p129
    %p131 = scmp.ne.s32.totalorder %s122, %s123
    %p132 = scmp.eq.s32.totalorder %s18, 0
    %p133 = por %p131, %p132
    %p134 = scmp.ne.s32.totalorder %s122, %s123
    %p135 = scmp.eq.s32.totalorder %s19, 1
    %p136 = por %p134, %p135
    %p138 = scmp.ne.s32.totalorder %s123, %s137
    %p139 = scmp.eq.s32.totalorder %s19, 0
    %p140 = por %p138, %p139
    %s142 = sadd.s32 %s141, 1
    %p145 = scmp.eq.s32.totalorder %s13, 1
    %p146 = scmp.ne.s32.totalorder %s141, %s143
    %p147 = scmp.eq.s32.totalorder %s13, 0
    %p148 = por %p146, %p147
    %p149 = scmp.ne.s32.totalorder %s141, %s143
    %p150 = scmp.eq.s32.totalorder %s18, 1
    %p151 = por %p149, %p150
    %p152 = scmp.ne.s32.totalorder %s143, %s144
    %p153 = scmp.eq.s32.totalorder %s18, 0
    %p154 = por %p152, %p153
    %p155 = scmp.ne.s32.totalorder %s143, %s144
    %p156 = scmp.eq.s32.totalorder %s19, 1
    %p157 = por %p155, %p156
    %p159 = scmp.ne.s32.totalorder %s144, %s158
    %p160 = scmp.eq.s32.totalorder %s19, 0
    %p161 = por %p159, %p160
    %s163 = sadd.s32 %s162, 1
    %p166 = scmp.eq.s32.totalorder %s13, 1
    %p167 = scmp.ne.s32.totalorder %s162, %s164
    %p168 = scmp.eq.s32.totalorder %s13, 0
    %p169 = por %p167, %p168
    %p170 = scmp.ne.s32.totalorder %s162, %s164
    %p171 = scmp.eq.s32.totalorder %s18, 1
    %p172 = por %p170, %p171
    %p173 = scmp.ne.s32.totalorder %s164, %s165
    %p174 = scmp.eq.s32.totalorder %s18, 0
    %p175 = por %p173, %p174
    %p176 = scmp.ne.s32.totalorder %s164, %s165
    %p177 = scmp.eq.s32.totalorder %s19, 1
    %p178 = por %p176, %p177
    %p180 = scmp.ne.s32.totalorder %s165, %s179
    %p181 = scmp.eq.s32.totalorder %s19, 0
    %p182 = por %p180, %p181
    %s183 = ssub.s32 %s13, %s20
    %p184 = scmp.eq.s32.totalorder %s183, 0
    %s186 = sadd.s32 %s185, 1
    %s187 = scalar_select %p184, %s185, %s186
    %p190 = pneg %p184
    %p191 = scmp.eq.s32.totalorder %s13, 1
    %p192 = por %p190, %p191
    %p193 = scmp.ne.s32.totalorder %s185, %s188
    %p194 = scmp.eq.s32.totalorder %s13, 0
    %p195 = por %p193, %p194
    %p196 = scmp.ne.s32.totalorder %s185, %s188
    %p197 = scmp.eq.s32.totalorder %s18, 1
    %p198 = por %p196, %p197
    %p199 = scmp.ne.s32.totalorder %s188, %s189
    %p200 = scmp.eq.s32.totalorder %s18, 0
    %p201 = por %p199, %p200
    %p202 = scmp.ne.s32.totalorder %s188, %s189
    %p203 = scmp.eq.s32.totalorder %s19, 1
    %p204 = por %p202, %p203
    %p206 = scmp.ne.s32.totalorder %s189, %s205
    %p207 = scmp.eq.s32.totalorder %s19, 0
    %p208 = por %p206, %p207
    %p209 = scmp.le.s32.totalorder 1, %s13
    %p210 = scmp.lt.s32.totalorder %s13, 3
    %p211 = pnand %p209, %p210
    %p212 = pneg %p211
    // Predicated region
    $region9: #{mmdit_forward.10} parent=5 // pred_check
      _
    $region10: #{mmdit_forward.10} parent=5 // pred_check_branch
      %214 = sbr.rel (%p211) target = $region12
    $region11: #{mmdit_forward.10} parent=5 // pred_region
      %s215 = ssub.s32 %s13, 1
      // Predicated region
      $region13: #{mmdit_forward.10} parent=11 // pred_check
        %p216 = pneg %p112
      $region14: #{mmdit_forward.10} parent=11 // pred_check_branch
        %218 = sbr.rel (%p216) target = $region16
      $region15: #{mmdit_forward.10} parent=11 // pred_region
        _
      $region16: #{mmdit_forward.10} parent=11 // pred_fallthru
        _
      // Predicated region
      $region17: #{mmdit_forward.10} parent=11 // pred_check
        %p219 = pneg %p133
      $region18: #{mmdit_forward.10} parent=11 // pred_check_branch
        %221 = sbr.rel (%p219) target = $region20
      $region19: #{mmdit_forward.10} parent=11 // pred_region
        _
      $region20: #{mmdit_forward.10} parent=11 // pred_fallthru
        _
      // Predicated region
      $region21: #{mmdit_forward.10} parent=11 // pred_check
        %p222 = pneg %p154
      $region22: #{mmdit_forward.10} parent=11 // pred_check_branch
        %224 = sbr.rel (%p222) target = $region24
      $region23: #{mmdit_forward.10} parent=11 // pred_region
        _
      $region24: #{mmdit_forward.10} parent=11 // pred_fallthru
        _
      // Predicated region
      $region25: #{mmdit_forward.10} parent=11 // pred_check
        %p225 = pneg %p175
      $region26: #{mmdit_forward.10} parent=11 // pred_check_branch
        %227 = sbr.rel (%p225) target = $region28
      $region27: #{mmdit_forward.10} parent=11 // pred_region
        _
      $region28: #{mmdit_forward.10} parent=11 // pred_fallthru
        _
    $region12: #{mmdit_forward.10} parent=5 // pred_fallthru
      _
    %p228 = scmp.lt.s32.totalorder %s13, 2
    // Predicated region
    $region29: #{mmdit_forward.10} parent=5 // pred_check
      %p229 = pneg %p228
    $region30: #{mmdit_forward.10} parent=5 // pred_check_branch
      %231 = sbr.rel (%p229) target = $region32
    $region31: #{mmdit_forward.10} parent=5 // pred_region
      // Predicated region
      $region33: #{mmdit_forward.10} parent=31 // pred_check
        %p232 = pneg %p33
      $region34: #{mmdit_forward.10} parent=31 // pred_check_branch
        %234 = sbr.rel (%p232) target = $region36
      $region35: #{mmdit_forward.10} parent=31 // pred_region
        %p235 = scmp.lt.s32.totalorder %s13, 1
        %s236 = scalar_select %p235, %s13, 1
        %s237 = smul.addr %s236, 2
        %s238 = smul.addr %s237, 8
        %s239 = scalar_lea.vmem %s0, %s238
      $region36: #{mmdit_forward.10} parent=31 // pred_fallthru
        _
      // Predicated region
      $region37: #{mmdit_forward.10} parent=31 // pred_check
        %p240 = pneg %p59
      $region38: #{mmdit_forward.10} parent=31 // pred_check_branch
        %242 = sbr.rel (%p240) target = $region40
      $region39: #{mmdit_forward.10} parent=31 // pred_region
        %p243 = scmp.lt.s32.totalorder %s13, 1
        %s244 = scalar_select %p243, %s13, 1
        %s245 = scalar_lea.vmem %s1, %s244
      $region40: #{mmdit_forward.10} parent=31 // pred_fallthru
        _
      // Predicated region
      $region41: #{mmdit_forward.10} parent=31 // pred_check
        %p246 = pneg %p85
      $region42: #{mmdit_forward.10} parent=31 // pred_check_branch
        %248 = sbr.rel (%p246) target = $region44
      $region43: #{mmdit_forward.10} parent=31 // pred_region
        %p249 = scmp.lt.s32.totalorder %s13, 1
        %s250 = scalar_select %p249, %s13, 1
        %s251 = scalar_lea.vmem %s2, %s250
      $region44: #{mmdit_forward.10} parent=31 // pred_fallthru
        _
    $region32: #{mmdit_forward.10} parent=5 // pred_fallthru
      _
    %p252 = scmp.le.s32.totalorder 1, %s13
    %p253 = scmp.lt.s32.totalorder %s13, 3
    %p254 = pnand %p252, %p253
    %p255 = pneg %p254
    // Predicated region
    $region45: #{mmdit_forward.10} parent=5 // pred_check
      _
    $region46: #{mmdit_forward.10} parent=5 // pred_check_branch
      %257 = sbr.rel (%p254) target = $region48
    $region47: #{mmdit_forward.10} parent=5 // pred_region
      %s258 = ssub.s32 %s13, 1
      %p259 = scmp.lt.s32.totalorder %s18, 1
      %s260 = scalar_select %p259, %s18, 1
      %s261 = smul.addr %s260, 2
      %s262 = smul.addr %s261, 8
      %s263 = scalar_lea.vmem %s0, %s262
      %p264 = pneg %p39
      %p265 = pneg %p36
      %p266 = scmp.lt.s32.totalorder %s18, 1
      %s267 = scalar_select %p266, %s18, 1
      %s268 = scalar_lea.vmem %s1, %s267
      %p269 = pneg %p65
      %p270 = pneg %p62
      %p271 = scmp.lt.s32.totalorder %s18, 1
      %s272 = scalar_select %p271, %s18, 1
      %s273 = scalar_lea.vmem %s2, %s272
      %p274 = pneg %p91
      %p275 = pneg %p88
      %p276 = pneg %p112
      %p277 = pneg %p109
      %p278 = pneg %p133
      %p279 = pneg %p130
      %p280 = pneg %p154
      %p281 = pneg %p151
      %p282 = pneg %p175
      %p283 = pneg %p172
      %p284 = pneg %p201
      %p285 = pneg %p198
      %p286 = scmp.lt.s32.totalorder %s18, 1
      %s287 = scalar_select %p286, %s18, 1
      %s288 = smul.addr %s287, 2
      %s289 = smul.addr %s288, 8
      %s290 = scalar_lea.vmem %s7, %s289
      %p291 = scmp.lt.s32.totalorder %s18, 1
      %s292 = scalar_select %p291, %s18, 1
      %s293 = smul.addr %s292, 2
      %s294 = smul.addr %s293, 8
      %s295 = scalar_lea.vmem %s0, %s294
      %p296 = scmp.lt.s32.totalorder %s18, 1
      %s297 = scalar_select %p296, %s18, 1
      %s298 = scalar_lea.vmem %s1, %s297
      %p299 = scmp.lt.s32.totalorder %s18, 1
      %s300 = scalar_select %p299, %s18, 1
      %s301 = scalar_lea.vmem %s2, %s300
      %p302 = scmp.lt.s32.totalorder %s18, 1
      %s303 = scalar_select %p302, %s18, 1
      %s304 = smul.addr %s303, 2
      %s305 = smul.addr %s304, 8
      %s306 = scalar_lea.vmem %s7, %s305
      %v308 = vld [vmem:[%s295] sm:$0xff]
      %v309 = vld [vmem:[%s295 + $0x8] sm:$0xff]
      %v310 = vld [vmem:[%s298] sm:$0x1]
      %vm311 = vcmask 523264
      %v312 = vsel %vm311, %v308, 0.0
      %313 = vadd.xlane.f32.xlu0 %v312
      %v314 = vpop.xlane.xlu0 %313
      %v315 = vsel %vm311, %v309, 0.0
      %316 = vadd.xlane.f32.xlu0 %v315
      %v317 = vpop.xlane.xlu0 %316
      %v318 = vrcp.pop 64.0
      %v319 = vmul.f32 64.0, %v318
      %v320 = vsub.f32 1.0, %v319
      %v321 = vmul.f32 %v318, %v320
      %v322 = vadd.f32 %v318, %v321
      %vm323 = vweird.f32 %v318
      %v324 = vsel %vm323, %v318, %v322
      %v325 = vmul.f32 %v314, %v324
      %v326 = vmul.f32 %v317, %v324
      %v327 = vsub.f32 %v308, %v325
      %v328 = vsub.f32 %v309, %v326
      %v329 = vmul.f32 %v327, %v327
      %v330 = vmul.f32 %v328, %v328
      %v331 = vsel %vm311, %v329, 0.0
      %332 = vadd.xlane.f32.xlu0 %v331
      %v333 = vpop.xlane.xlu0 %332
      %v334 = vsel %vm311, %v330, 0.0
      %335 = vadd.xlane.f32.xlu0 %v334
      %v336 = vpop.xlane.xlu0 %335
      %v337 = vmul.f32 %v333, %v324
      %v338 = vmul.f32 %v336, %v324
      %v339 = vadd.f32 %v337, 1e-05
      %v340 = vadd.f32 %v338, 1e-05
      %v341 = vrsqrt.pop %v339
      %v342 = vmul.f32 %v341, %v339
      %v343 = vmul.f32 %v342, %v341
      %v344 = vmul.f32 0.5, %v343
      %v345 = vsub.f32 1.5, %v344
      %v346 = vmul.f32 %v341, %v345
      %vm347 = vweird.f32 %v339
      %vm348 = vweird.f32 %v341
      %vm349 = vmor %vm347, %vm348
      %v350 = vsel %vm349, %v341, %v346
      %v351 = vrsqrt.pop %v340
      %v352 = vmul.f32 %v351, %v340
      %v353 = vmul.f32 %v352, %v351
      %v354 = vmul.f32 0.5, %v353
      %v355 = vsub.f32 1.5, %v354
      %v356 = vmul.f32 %v351, %v355
      %vm357 = vweird.f32 %v340
      %vm358 = vweird.f32 %v351
      %vm359 = vmor %vm357, %vm358
      %v360 = vsel %vm359, %v351, %v356
      %v361 = vmul.f32 %v327, %v350
      %v362 = vmul.f32 %v328, %v360
      %v364 = vperm.slane %v310, 0
      %v366 = vmul.f32 %v361, %v364
      %v367 = vmul.f32 %v362, %v364
      %368 = vrot.lane.b32.xlu0 %v364, 64
      %v369 = vpop.permute.xlu0 %368
      %v371 = vadd.f32 %v366, %v369
      %v372 = vadd.f32 %v367, %v369
      %v373 = vld [vmem:[%s3] sm:$0xff]
      %v374 = vld [vmem:[%s3 + $0x8] sm:$0xff]
      %v375 = vld [vmem:[%s3 + $0x10] sm:$0xff]
      %v376 = vld [vmem:[%s3 + $0x18] sm:$0xff]
      %v377 = vld [vmem:[%s3 + $0x20] sm:$0xff]
      %v378 = vld [vmem:[%s3 + $0x28] sm:$0xff]
      %v379 = vld [vmem:[%s3 + $0x30] sm:$0xff]
      %v380 = vld [vmem:[%s3 + $0x38] sm:$0xff]
      %v381 = vpack.c.bf16 %v372, %v371
      %v382 = vld [vmem:[%s4] sm:$0x3]
      %v384 = vperm.slane %v382, 0
      %v385 = vperm.slane %v382, 1
      %v396 = vunpack.c.l.b16 %v373
      %v397 = vunpack.c.h.b16 %v373
      %v398 = vunpack.c.l.b16 %v374
      %v399 = vunpack.c.h.b16 %v374
      %v400 = vunpack.c.l.b16 %v375
      %v401 = vunpack.c.h.b16 %v375
      %v402 = vunpack.c.l.b16 %v376
      %v403 = vunpack.c.h.b16 %v376
      %v404 = vunpack.c.l.b16 %v377
      %v405 = vunpack.c.h.b16 %v377
      %v406 = vunpack.c.l.b16 %v378
      %v407 = vunpack.c.h.b16 %v378
      %v408 = vunpack.c.l.b16 %v379
      %v409 = vunpack.c.h.b16 %v379
      %v410 = vunpack.c.l.b16 %v380
      %v411 = vunpack.c.h.b16 %v380
      %v412 = vpack.c.b16 %v398, %v396
      %v413 = vpack.c.b16 %v399, %v397
      %v414 = vpack.c.b16 %v402, %v400
      %v415 = vpack.c.b16 %v403, %v401
      %v416 = vpack.c.b16 %v406, %v404
      %v417 = vpack.c.b16 %v407, %v405
      %v418 = vpack.c.b16 %v410, %v408
      %v419 = vpack.c.b16 %v411, %v409
      %v429 = vsel %vm311, %v381, 0
      %431 = vmatpush.bf16.msra.mxu0 0
      %432 = vmatpush.bf16.msra.mxu0 0
      %433 = vmatpush.bf16.msra.mxu0 0
      %434 = vmatpush.bf16.msra.mxu0 0
      %435 = vmatpush.bf16.msra.mxu0 %v418
      %436 = vmatpush.bf16.msra.mxu0 %v416
      %437 = vmatpush.bf16.msra.mxu0 %v414
      %438 = vmatpush.bf16.msra.mxu0 %v412
      %439 = vmatmul.bf16.gmra.mxu0 %v429
      %v440 = vpop.f32.mrf.mxu0
      %v441 = vadd.f32 %v384, %v440
      %v442 = vpop.f32.mrf.mxu0
      %v443 = vadd.f32 %v384, %v442
      %444 = vdwg.mxu0
      %445 = vmatpush.bf16.msra.mxu0 0
      %446 = vmatpush.bf16.msra.mxu0 0
      %447 = vmatpush.bf16.msra.mxu0 0
      %448 = vmatpush.bf16.msra.mxu0 0
      %449 = vmatpush.bf16.msra.mxu0 %v419
      %450 = vmatpush.bf16.msra.mxu0 %v417
      %451 = vmatpush.bf16.msra.mxu0 %v415
      %452 = vmatpush.bf16.msra.mxu0 %v413
      %453 = vmatmul.bf16.gmra.mxu0 %v429
      %v454 = vpop.f32.mrf.mxu0
      %v455 = vadd.f32 %v385, %v454
      %v456 = vpop.f32.mrf.mxu0
      %v457 = vadd.f32 %v385, %v456
      %458 = vdwg.mxu0
      %v459 = vmul.f32 %v441, 0.5
      %v460 = vmul.f32 %v455, 0.5
      %v461 = vmul.f32 %v443, 0.5
      %v462 = vmul.f32 %v457, 0.5
      %v463 = vmul.f32 %v441, 0.70710677
      %v464 = vmul.f32 %v455, 0.70710677
      %v465 = vmul.f32 %v443, 0.70710677
      %v466 = vmul.f32 %v457, 0.70710677
      %v467 = vmax.f32 %v463, -4.0
      %v468 = vmax.f32 %v464, -4.0
      %v469 = vmax.f32 %v465, -4.0
      %v470 = vmax.f32 %v466, -4.0
      %v471 = vmin.f32 %v467, 4.0
      %v472 = vmin.f32 %v468, 4.0
      %v473 = vmin.f32 %v469, 4.0
      %v474 = vmin.f32 %v470, 4.0
      %v475 = vmul.f32 %v471, %v471
      %v476 = vmul.f32 %v472, %v472
      %v477 = vmul.f32 %v473, %v473
      %v478 = vmul.f32 %v474, %v474
      %v479 = vmul.f32 %v475, -2.7261424e-10
      %v480 = vmul.f32 %v476, -2.7261424e-10
      %v481 = vmul.f32 %v477, -2.7261424e-10
      %v482 = vmul.f32 %v478, -2.7261424e-10
      %v483 = vadd.f32 %v479, 2.7706815e-08
      %v484 = vadd.f32 %v480, 2.7706815e-08
      %v485 = vadd.f32 %v481, 2.7706815e-08
      %v486 = vadd.f32 %v482, 2.7706815e-08
      %v487 = vmul.f32 %v483, %v475
      %v488 = vmul.f32 %v484, %v476
      %v489 = vmul.f32 %v485, %v477
      %v490 = vmul.f32 %v486, %v478
      %v491 = vadd.f32 %v487, -2.101024e-06
      %v492 = vadd.f32 %v488, -2.101024e-06
      %v493 = vadd.f32 %v489, -2.101024e-06
      %v494 = vadd.f32 %v490, -2.101024e-06
      %v495 = vmul.f32 %v491, %v475
      %v496 = vmul.f32 %v492, %v476
      %v497 = vmul.f32 %v493, %v477
      %v498 = vmul.f32 %v494, %v478
      %v499 = vadd.f32 %v495, -5.6925062e-05
      %v500 = vadd.f32 %v496, -5.6925062e-05
      %v501 = vadd.f32 %v497, -5.6925062e-05
      %v502 = vadd.f32 %v498, -5.6925062e-05
      %v503 = vmul.f32 %v499, %v475
      %v504 = vmul.f32 %v500, %v476
      %v505 = vmul.f32 %v501, %v477
      %v506 = vmul.f32 %v502, %v478
      %v507 = vadd.f32 %v503, -0.00073499064
      %v508 = vadd.f32 %v504, -0.00073499064
      %v509 = vadd.f32 %v505, -0.00073499064
      %v510 = vadd.f32 %v506, -0.00073499064
      %v511 = vmul.f32 %v507, %v475
      %v512 = vmul.f32 %v508, %v476
      %v513 = vmul.f32 %v509, %v477
      %v514 = vmul.f32 %v510, %v478
      %v515 = vadd.f32 %v511, -0.0029546
      %v516 = vadd.f32 %v512, -0.0029546
      %v517 = vadd.f32 %v513, -0.0029546
      %v518 = vadd.f32 %v514, -0.0029546
      %v519 = vmul.f32 %v515, %v475
      %v520 = vmul.f32 %v516, %v476
      %v521 = vmul.f32 %v517, %v477
      %v522 = vmul.f32 %v518, %v478
      %v523 = vadd.f32 %v519, -0.016096033
      %v524 = vadd.f32 %v520, -0.016096033
      %v525 = vadd.f32 %v521, -0.016096033
      %v526 = vadd.f32 %v522, -0.016096033
      %v527 = vmul.f32 %v475, -1.45660715e-05
      %v528 = vmul.f32 %v476, -1.45660715e-05
      %v529 = vmul.f32 %v477, -1.45660715e-05
      %v530 = vmul.f32 %v478, -1.45660715e-05
      %v531 = vadd.f32 %v527, -0.00021337405
      %v532 = vadd.f32 %v528, -0.00021337405
      %v533 = vadd.f32 %v529, -0.00021337405
      %v534 = vadd.f32 %v530, -0.00021337405
      %v535 = vmul.f32 %v531, %v475
      %v536 = vmul.f32 %v532, %v476
      %v537 = vmul.f32 %v533, %v477
      %v538 = vmul.f32 %v534, %v478
      %v539 = vadd.f32 %v535, -0.001682827
      %v540 = vadd.f32 %v536, -0.001682827
      %v541 = vadd.f32 %v537, -0.001682827
      %v542 = vadd.f32 %v538, -0.001682827
      %v543 = vmul.f32 %v539, %v475
      %v544 = vmul.f32 %v540, %v476
      %v545 = vmul.f32 %v541, %v477
      %v546 = vmul.f32 %v542, %v478
      %v547 = vadd.f32 %v543, -0.0073733293
      %v548 = vadd.f32 %v544, -0.0073733293
      %v549 = vadd.f32 %v545, -0.0073733293
      %v550 = vadd.f32 %v546, -0.0073733293
      %v551 = vmul.f32 %v547, %v475
      %v552 = vmul.f32 %v548, %v476
      %v553 = vmul.f32 %v549, %v477
      %v554 = vmul.f32 %v550, %v478
      %v555 = vadd.f32 %v551, -0.014264739
      %v556 = vadd.f32 %v552, -0.014264739
      %v557 = vadd.f32 %v553, -0.014264739
      %v558 = vadd.f32 %v554, -0.014264739
      %v559 = vmul.f32 %v471, %v523
      %v560 = vmul.f32 %v472, %v524
      %v561 = vmul.f32 %v473, %v525
      %v562 = vmul.f32 %v474, %v526
      %v563 = vrcp.pop %v555
      %v564 = vmul.f32 %v555, %v563
      %v565 = vsub.f32 1.0, %v564
      %v566 = vmul.f32 %v563, %v565
      %v567 = vadd.f32 %v563, %v566
      %vm568 = vweird.f32 %v555
      %vm569 = vweird.f32 %v563
      %vm570 = vmor %vm568, %vm569
      %v571 = vsel %vm570, %v563, %v567
      %v572 = vand.u32 2147483647, %v555
      %vm573 = vcmp.eq.f32.partialorder %v572, 8.507059e+37
      %v574 = vand.u32 %v555, 2147483648
      %v575 = vor.u32 1.1754944e-38, %v574
      %v576 = vsel %vm573, %v575, %v571
      %v577 = vmul.f32 %v559, %v576
      %v578 = vrcp.pop %v556
      %v579 = vmul.f32 %v556, %v578
      %v580 = vsub.f32 1.0, %v579
      %v581 = vmul.f32 %v578, %v580
      %v582 = vadd.f32 %v578, %v581
      %vm583 = vweird.f32 %v556
      %vm584 = vweird.f32 %v578
      %vm585 = vmor %vm583, %vm584
      %v586 = vsel %vm585, %v578, %v582
      %v587 = vand.u32 2147483647, %v556
      %vm588 = vcmp.eq.f32.partialorder %v587, 8.507059e+37
      %v589 = vand.u32 %v556, 2147483648
      %v590 = vor.u32 1.1754944e-38, %v589
      %v591 = vsel %vm588, %v590, %v586
      %v592 = vmul.f32 %v560, %v591
      %v593 = vrcp.pop %v557
      %v594 = vmul.f32 %v557, %v593
      %v595 = vsub.f32 1.0, %v594
      %v596 = vmul.f32 %v593, %v595
      %v597 = vadd.f32 %v593, %v596
      %vm598 = vweird.f32 %v557
      %vm599 = vweird.f32 %v593
      %vm600 = vmor %vm598, %vm599
      %v601 = vsel %vm600, %v593, %v597
      %v602 = vand.u32 2147483647, %v557
      %vm603 = vcmp.eq.f32.partialorder %v602, 8.507059e+37
      %v604 = vand.u32 %v557, 2147483648
      %v605 = vor.u32 1.1754944e-38, %v604
      %v606 = vsel %vm603, %v605, %v601
      %v607 = vmul.f32 %v561, %v606
      %v608 = vrcp.pop %v558
      %v609 = vmul.f32 %v558, %v608
      %v610 = vsub.f32 1.0, %v609
      %v611 = vmul.f32 %v608, %v610
      %v612 = vadd.f32 %v608, %v611
      %vm613 = vweird.f32 %v558
      %vm614 = vweird.f32 %v608
      %vm615 = vmor %vm613, %vm614
      %v616 = vsel %vm615, %v608, %v612
      %v617 = vand.u32 2147483647, %v558
      %vm618 = vcmp.eq.f32.partialorder %v617, 8.507059e+37
      %v619 = vand.u32 %v558, 2147483648
      %v620 = vor.u32 1.1754944e-38, %v619
      %v621 = vsel %vm618, %v620, %v616
      %v622 = vmul.f32 %v562, %v621
      %v623 = vadd.f32 %v577, 1.0
      %v624 = vadd.f32 %v592, 1.0
      %v625 = vadd.f32 %v607, 1.0
      %v626 = vadd.f32 %v622, 1.0
      %v627 = vmul.f32 %v459, %v623
      %v628 = vmul.f32 %v460, %v624
      %v629 = vmul.f32 %v461, %v625
      %v630 = vmul.f32 %v462, %v626
      %v631 = vld [vmem:[%s5] sm:$0xf]
      %v632 = vld [vmem:[%s5 + $0x4] sm:$0xf]
      %v633 = vld [vmem:[%s5 + $0x8] sm:$0xf]
      %v634 = vld [vmem:[%s5 + $0xc] sm:$0xf]
      %v635 = vld [vmem:[%s5 + $0x10] sm:$0xf]
      %v636 = vld [vmem:[%s5 + $0x14] sm:$0xf]
      %v637 = vld [vmem:[%s5 + $0x18] sm:$0xf]
      %v638 = vld [vmem:[%s5 + $0x1c] sm:$0xf]
      %v639 = vld [vmem:[%s5 + $0x20] sm:$0xf]
      %v640 = vld [vmem:[%s5 + $0x24] sm:$0xf]
      %v641 = vld [vmem:[%s5 + $0x28] sm:$0xf]
      %v642 = vld [vmem:[%s5 + $0x2c] sm:$0xf]
      %v643 = vld [vmem:[%s5 + $0x30] sm:$0xf]
      %v644 = vld [vmem:[%s5 + $0x34] sm:$0xf]
      %v645 = vld [vmem:[%s5 + $0x38] sm:$0xf]
      %v646 = vld [vmem:[%s5 + $0x3c] sm:$0xf]
      %v647 = vld [vmem:[%s5 + $0x40] sm:$0xf]
      %v648 = vld [vmem:[%s5 + $0x44] sm:$0xf]
      %v649 = vld [vmem:[%s5 + $0x48] sm:$0xf]
      %v650 = vld [vmem:[%s5 + $0x4c] sm:$0xf]
      %v651 = vld [vmem:[%s5 + $0x50] sm:$0xf]
      %v652 = vld [vmem:[%s5 + $0x54] sm:$0xf]
      %v653 = vld [vmem:[%s5 + $0x58] sm:$0xf]
      %v654 = vld [vmem:[%s5 + $0x5c] sm:$0xf]
      %v655 = vld [vmem:[%s5 + $0x60] sm:$0xf]
      %v656 = vld [vmem:[%s5 + $0x64] sm:$0xf]
      %v657 = vld [vmem:[%s5 + $0x68] sm:$0xf]
      %v658 = vld [vmem:[%s5 + $0x6c] sm:$0xf]
      %v659 = vld [vmem:[%s5 + $0x70] sm:$0xf]
      %v660 = vld [vmem:[%s5 + $0x74] sm:$0xf]
      %v661 = vld [vmem:[%s5 + $0x78] sm:$0xf]
      %v662 = vld [vmem:[%s5 + $0x7c] sm:$0xf]
      %v663 = vpack.c.bf16 %v629, %v627
      %v664 = vpack.c.bf16 %v630, %v628
      %v665 = vld [vmem:[%s6] sm:$0x1]
      %v667 = vperm.slane %v665, 0
      %v701 = vunpack.c.l.b16 %v631
      %v702 = vunpack.c.l.b16 %v632
      %v703 = vunpack.c.l.b16 %v633
      %v704 = vunpack.c.l.b16 %v634
      %v705 = vunpack.c.l.b16 %v635
      %v706 = vunpack.c.l.b16 %v636
      %v707 = vunpack.c.l.b16 %v637
      %v708 = vunpack.c.l.b16 %v638
      %v709 = vunpack.c.l.b16 %v639
      %v710 = vunpack.c.l.b16 %v640
      %v711 = vunpack.c.l.b16 %v641
      %v712 = vunpack.c.l.b16 %v642
      %v713 = vunpack.c.l.b16 %v643
      %v714 = vunpack.c.l.b16 %v644
      %v715 = vunpack.c.l.b16 %v645
      %v716 = vunpack.c.l.b16 %v646
      %v717 = vunpack.c.l.b16 %v647
      %v718 = vunpack.c.l.b16 %v648
      %v719 = vunpack.c.l.b16 %v649
      %v720 = vunpack.c.l.b16 %v650
      %v721 = vunpack.c.l.b16 %v651
      %v722 = vunpack.c.l.b16 %v652
      %v723 = vunpack.c.l.b16 %v653
      %v724 = vunpack.c.l.b16 %v654
      %v725 = vunpack.c.l.b16 %v655
      %v726 = vunpack.c.l.b16 %v656
      %v727 = vunpack.c.l.b16 %v657
      %v728 = vunpack.c.l.b16 %v658
      %v729 = vunpack.c.l.b16 %v659
      %v730 = vunpack.c.l.b16 %v660
      %v731 = vunpack.c.l.b16 %v661
      %v732 = vunpack.c.l.b16 %v662
      %v733 = vpack.c.b16 %v702, %v701
      %v734 = vpack.c.b16 %v704, %v703
      %v735 = vpack.c.b16 %v706, %v705
      %v736 = vpack.c.b16 %v708, %v707
      %v737 = vpack.c.b16 %v710, %v709
      %v738 = vpack.c.b16 %v712, %v711
      %v739 = vpack.c.b16 %v714, %v713
      %v740 = vpack.c.b16 %v716, %v715
      %v741 = vpack.c.b16 %v718, %v717
      %v742 = vpack.c.b16 %v720, %v719
      %v743 = vpack.c.b16 %v722, %v721
      %v744 = vpack.c.b16 %v724, %v723
      %v745 = vpack.c.b16 %v726, %v725
      %v746 = vpack.c.b16 %v728, %v727
      %v747 = vpack.c.b16 %v730, %v729
      %v748 = vpack.c.b16 %v732, %v731
      %765 = vmatpush.bf16.msra.mxu0 %v740
      %766 = vmatpush.bf16.msra.mxu0 %v739
      %767 = vmatpush.bf16.msra.mxu0 %v738
      %768 = vmatpush.bf16.msra.mxu0 %v737
      %769 = vmatpush.bf16.msra.mxu0 %v736
      %770 = vmatpush.bf16.msra.mxu0 %v735
      %771 = vmatpush.bf16.msra.mxu0 %v734
      %772 = vmatpush.bf16.msra.mxu0 %v733
      %773 = vmatmul.bf16.gmra.mxu0 %v663
      %v774 = vpop.f32.mrf.mxu0
      %v775 = vadd.f32 %v667, %v774
      %v776 = vpop.f32.mrf.mxu0
      %v777 = vadd.f32 %v667, %v776
      %778 = vdwg.mxu0
      %779 = vmatpush.bf16.msra.mxu0 %v748
      %780 = vmatpush.bf16.msra.mxu0 %v747
      %781 = vmatpush.bf16.msra.mxu0 %v746
      %782 = vmatpush.bf16.msra.mxu0 %v745
      %783 = vmatpush.bf16.msra.mxu0 %v744
      %784 = vmatpush.bf16.msra.mxu0 %v743
      %785 = vmatpush.bf16.msra.mxu0 %v742
      %786 = vmatpush.bf16.msra.mxu0 %v741
      %787 = vmatmul.bf16.gmra.mxu0 %v664
      %v788 = vpop.f32.mrf.mxu0
      %v789 = vadd.f32 %v775, %v788
      %v790 = vpop.f32.mrf.mxu0
      %v791 = vadd.f32 %v777, %v790
      %792 = vdwg.mxu0
      %v793 = vld [vmem:[%s301] sm:$0x1]
      %v795 = vperm.slane %v793, 0
      %v797 = vmul.f32 %v789, %v795
      %v798 = vmul.f32 %v791, %v795
      %v799 = vadd.f32 %v797, %v308
      %v800 = vadd.f32 %v798, %v309
      %801 = vst.msk [vmem:[%s306] sm:$0xff] %vm311, %v799
      %802 = vst.msk [vmem:[%s306 + $0x8] sm:$0xff] %vm311, %v800
      %p803 = scmp.lt.s32.totalorder %s18, 1
      %s804 = scalar_select %p803, %s18, 1
      %s805 = smul.addr %s804, 2
      %s806 = smul.addr %s805, 8
      %s807 = scalar_lea.vmem %s7, %s806
      // Predicated region
      $region49: #{mmdit_forward.10} parent=47 // pred_check
        %p808 = pneg %p198
      $region50: #{mmdit_forward.10} parent=47 // pred_check_branch
        %810 = sbr.rel (%p808) target = $region52
      $region51: #{mmdit_forward.10} parent=47 // pred_region
        _
      $region52: #{mmdit_forward.10} parent=47 // pred_fallthru
        _
    $region48: #{mmdit_forward.10} parent=5 // pred_fallthru
      _
    %p811 = scmp.le.s32.totalorder 2, %s13
    // Predicated region
    $region53: #{mmdit_forward.10} parent=5 // pred_check
      %p812 = pneg %p811
    $region54: #{mmdit_forward.10} parent=5 // pred_check_branch
      %814 = sbr.rel (%p812) target = $region56
    $region55: #{mmdit_forward.10} parent=5 // pred_region
      %s815 = ssub.s32 %s13, 2
      // Predicated region
      $region57: #{mmdit_forward.10} parent=55 // pred_check
        %p816 = pneg %p204
      $region58: #{mmdit_forward.10} parent=55 // pred_check_branch
        %818 = sbr.rel (%p816) target = $region60
      $region59: #{mmdit_forward.10} parent=55 // pred_region
        %p819 = scmp.lt.s32.totalorder %s19, 1
        %s820 = scalar_select %p819, %s19, 1
        %s821 = smul.addr %s820, 2
        %s822 = smul.addr %s821, 8
        %s823 = scalar_lea.vmem %s7, %s822
      $region60: #{mmdit_forward.10} parent=55 // pred_fallthru
        _
    $region56: #{mmdit_forward.10} parent=5 // pred_fallthru
      _
  $region6: #{mmdit_forward.10} parent=0 // loop_footer
    %s17 = sadd.s32 1, %s13
  $region7: #{mmdit_forward.10} parent=0 // loop_footer_branch
    %12 = sbr.rel target = $region3
  $region8: #{mmdit_forward.10} parent=0 // loop_exit
    _

// kernel: mmdit_forward.11
$region0: #{mmdit_forward.11}
  #allocation0 [shape = 'u32[]', space=smem, size = 0x4, offset = 0x4, fixed_abs, tag = 'smem constant byte address 0x4 - core index']
  #allocation1 [shape = 'u32[72,128]{1,0:T(1,128)}', space=vmem, size = 0x9000, scoped, tag = 'internal scratch']
  %s0 = inlined_call_operand.vmem [shape: f32[2,8,32], index: 0, kind: input, shape index: {}]
  %s1 = inlined_call_operand.vmem [shape: f32[2,16,64], index: 1, kind: input, shape index: {}]
  %s2 = inlined_call_operand.vmem [shape: f32[2,1,64], index: 2, kind: input, shape index: {}]
  %s3 = inlined_call_operand.vmem [shape: f32[2,1,128], index: 3, kind: input, shape index: {}]
  %s4 = inlined_call_operand.vmem [shape: f32[2,1,32], index: 4, kind: input, shape index: {}]
  %s5 = inlined_call_operand.vmem [shape: f32[2,1,64], index: 5, kind: input, shape index: {}]
  %s6 = inlined_call_operand.vmem [shape: bf16[32,192], index: 6, kind: input, shape index: {}]
  %s7 = inlined_call_operand.vmem [shape: bf16[64,192], index: 7, kind: input, shape index: {}]
  %s8 = inlined_call_operand.vmem [shape: bf16[64,32], index: 8, kind: input, shape index: {}]
  %s9 = inlined_call_operand.vmem [shape: bf16[64,64], index: 9, kind: input, shape index: {}]
  %s10 = inlined_call_operand.vmem [shape: f32[2,8,32], index: 10, kind: output, shape index: {0}]
  %s11 = inlined_call_operand.vmem [shape: f32[2,16,64], index: 11, kind: output, shape index: {1}]
  %12 = xla_tuple %s10, %s11
  %s13 = sld [smem:[#allocation0]]
  $region81: #{mmdit_forward.11} parent=0
    _
  %s15 = ssub.s32 1, %s13
  %s16 = scalar_select 0, %s15, %s13
  loop: start=0, step=1, limit=4
  $region2: #{mmdit_forward.11} parent=0 // loop_pre_header
    _
  $region3: #{mmdit_forward.11} parent=0 // loop_header
    %s18 = sphi 0, %s22
    %p19 = scmp.ge.s32.totalorder %s18, 4
    %s28 = sphi 0, %s30
    %s31 = sphi 0, %s28
    %s32 = sphi 0, %s31
    %s48 = sphi 0, %s32
    %s54 = sphi 0, %s56
    %s57 = sphi 0, %s54
    %s58 = sphi 0, %s57
    %s74 = sphi 0, %s58
    %s80 = sphi 0, %s82
    %s83 = sphi 0, %s80
    %s84 = sphi 0, %s83
    %s100 = sphi 0, %s84
    %s106 = sphi 0, %s108
    %s109 = sphi 0, %s106
    %s110 = sphi 0, %s109
    %s126 = sphi 0, %s110
    %s132 = sphi 0, %s134
    %s135 = sphi 0, %s132
    %s136 = sphi 0, %s135
    %s152 = sphi 0, %s136
    %s158 = sphi 0, %s160
    %s161 = sphi 0, %s158
    %s162 = sphi 0, %s161
    %s178 = sphi 0, %s162
    %s182 = sphi 0, %s182
    %s184 = sphi 0, %s182
    %s185 = sphi 0, %s184
    %s199 = sphi 0, %s185
    %s203 = sphi 0, %s203
    %s205 = sphi 0, %s203
    %s206 = sphi 0, %s205
    %s220 = sphi 0, %s206
    %s224 = sphi 0, %s224
    %s226 = sphi 0, %s224
    %s227 = sphi 0, %s226
    %s241 = sphi 0, %s227
    %s245 = sphi 0, %s245
    %s247 = sphi 0, %s245
    %s248 = sphi 0, %s247
    %s262 = sphi 0, %s248
    %s268 = sphi 0, %s270
    %s271 = sphi 0, %s268
    %s272 = sphi 0, %s271
    %s288 = sphi 0, %s272
    %s294 = sphi 0, %s296
    %s297 = sphi 0, %s294
    %s298 = sphi 0, %s297
    %s314 = sphi 0, %s298
  $region4: #{mmdit_forward.11} parent=0 // loop_header_branch
    %21 = sbr.rel (%p19) target = $region8
  $region5: #{mmdit_forward.11} parent=0 // loop_body
    %s23 = ssub.s32 %s18, 1
    %s24 = ssub.s32 %s18, 2
    %s25 = sadd.s32 %s18, 1
    %s26 = ssub.s32 %s18, %s25
    %p27 = scmp.eq.s32.totalorder %s26, 0
    %s29 = sadd.s32 %s28, 1
    %s30 = scalar_select %p27, %s28, %s29
    %p33 = pneg %p27
    %p34 = scmp.eq.s32.totalorder %s18, 1
    %p35 = por %p33, %p34
    %p36 = scmp.ne.s32.totalorder %s28, %s31
    %p37 = scmp.eq.s32.totalorder %s18, 0
    %p38 = por %p36, %p37
    %p39 = scmp.ne.s32.totalorder %s28, %s31
    %p40 = scmp.eq.s32.totalorder %s23, 1
    %p41 = por %p39, %p40
    %p42 = scmp.ne.s32.totalorder %s31, %s32
    %p43 = scmp.eq.s32.totalorder %s23, 0
    %p44 = por %p42, %p43
    %p45 = scmp.ne.s32.totalorder %s31, %s32
    %p46 = scmp.eq.s32.totalorder %s24, 1
    %p47 = por %p45, %p46
    %p49 = scmp.ne.s32.totalorder %s32, %s48
    %p50 = scmp.eq.s32.totalorder %s24, 0
    %p51 = por %p49, %p50
    %s52 = ssub.s32 %s18, %s25
    %p53 = scmp.eq.s32.totalorder %s52, 0
    %s55 = sadd.s32 %s54, 1
    %s56 = scalar_select %p53, %s54, %s55
    %p59 = pneg %p53
    %p60 = scmp.eq.s32.totalorder %s18, 1
    %p61 = por %p59, %p60
    %p62 = scmp.ne.s32.totalorder %s54, %s57
    %p63 = scmp.eq.s32.totalorder %s18, 0
    %p64 = por %p62, %p63
    %p65 = scmp.ne.s32.totalorder %s54, %s57
    %p66 = scmp.eq.s32.totalorder %s23, 1
    %p67 = por %p65, %p66
    %p68 = scmp.ne.s32.totalorder %s57, %s58
    %p69 = scmp.eq.s32.totalorder %s23, 0
    %p70 = por %p68, %p69
    %p71 = scmp.ne.s32.totalorder %s57, %s58
    %p72 = scmp.eq.s32.totalorder %s24, 1
    %p73 = por %p71, %p72
    %p75 = scmp.ne.s32.totalorder %s58, %s74
    %p76 = scmp.eq.s32.totalorder %s24, 0
    %p77 = por %p75, %p76
    %s78 = ssub.s32 %s18, %s25
    %p79 = scmp.eq.s32.totalorder %s78, 0
    %s81 = sadd.s32 %s80, 1
    %s82 = scalar_select %p79, %s80, %s81
    %p85 = pneg %p79
    %p86 = scmp.eq.s32.totalorder %s18, 1
    %p87 = por %p85, %p86
    %p88 = scmp.ne.s32.totalorder %s80, %s83
    %p89 = scmp.eq.s32.totalorder %s18, 0
    %p90 = por %p88, %p89
    %p91 = scmp.ne.s32.totalorder %s80, %s83
    %p92 = scmp.eq.s32.totalorder %s23, 1
    %p93 = por %p91, %p92
    %p94 = scmp.ne.s32.totalorder %s83, %s84
    %p95 = scmp.eq.s32.totalorder %s23, 0
    %p96 = por %p94, %p95
    %p97 = scmp.ne.s32.totalorder %s83, %s84
    %p98 = scmp.eq.s32.totalorder %s24, 1
    %p99 = por %p97, %p98
    %p101 = scmp.ne.s32.totalorder %s84, %s100
    %p102 = scmp.eq.s32.totalorder %s24, 0
    %p103 = por %p101, %p102
    %s104 = ssub.s32 %s18, %s25
    %p105 = scmp.eq.s32.totalorder %s104, 0
    %s107 = sadd.s32 %s106, 1
    %s108 = scalar_select %p105, %s106, %s107
    %p111 = pneg %p105
    %p112 = scmp.eq.s32.totalorder %s18, 1
    %p113 = por %p111, %p112
    %p114 = scmp.ne.s32.totalorder %s106, %s109
    %p115 = scmp.eq.s32.totalorder %s18, 0
    %p116 = por %p114, %p115
    %p117 = scmp.ne.s32.totalorder %s106, %s109
    %p118 = scmp.eq.s32.totalorder %s23, 1
    %p119 = por %p117, %p118
    %p120 = scmp.ne.s32.totalorder %s109, %s110
    %p121 = scmp.eq.s32.totalorder %s23, 0
    %p122 = por %p120, %p121
    %p123 = scmp.ne.s32.totalorder %s109, %s110
    %p124 = scmp.eq.s32.totalorder %s24, 1
    %p125 = por %p123, %p124
    %p127 = scmp.ne.s32.totalorder %s110, %s126
    %p128 = scmp.eq.s32.totalorder %s24, 0
    %p129 = por %p127, %p128
    %s130 = ssub.s32 %s18, %s25
    %p131 = scmp.eq.s32.totalorder %s130, 0
    %s133 = sadd.s32 %s132, 1
    %s134 = scalar_select %p131, %s132, %s133
    %p137 = pneg %p131
    %p138 = scmp.eq.s32.totalorder %s18, 1
    %p139 = por %p137, %p138
    %p140 = scmp.ne.s32.totalorder %s132, %s135
    %p141 = scmp.eq.s32.totalorder %s18, 0
    %p142 = por %p140, %p141
    %p143 = scmp.ne.s32.totalorder %s132, %s135
    %p144 = scmp.eq.s32.totalorder %s23, 1
    %p145 = por %p143, %p144
    %p146 = scmp.ne.s32.totalorder %s135, %s136
    %p147 = scmp.eq.s32.totalorder %s23, 0
    %p148 = por %p146, %p147
    %p149 = scmp.ne.s32.totalorder %s135, %s136
    %p150 = scmp.eq.s32.totalorder %s24, 1
    %p151 = por %p149, %p150
    %p153 = scmp.ne.s32.totalorder %s136, %s152
    %p154 = scmp.eq.s32.totalorder %s24, 0
    %p155 = por %p153, %p154
    %s156 = ssub.s32 %s18, %s25
    %p157 = scmp.eq.s32.totalorder %s156, 0
    %s159 = sadd.s32 %s158, 1
    %s160 = scalar_select %p157, %s158, %s159
    %p163 = pneg %p157
    %p164 = scmp.eq.s32.totalorder %s18, 1
    %p165 = por %p163, %p164
    %p166 = scmp.ne.s32.totalorder %s158, %s161
    %p167 = scmp.eq.s32.totalorder %s18, 0
    %p168 = por %p166, %p167
    %p169 = scmp.ne.s32.totalorder %s158, %s161
    %p170 = scmp.eq.s32.totalorder %s23, 1
    %p171 = por %p169, %p170
    %p172 = scmp.ne.s32.totalorder %s161, %s162
    %p173 = scmp.eq.s32.totalorder %s23, 0
    %p174 = por %p172, %p173
    %p175 = scmp.ne.s32.totalorder %s161, %s162
    %p176 = scmp.eq.s32.totalorder %s24, 1
    %p177 = por %p175, %p176
    %p179 = scmp.ne.s32.totalorder %s162, %s178
    %p180 = scmp.eq.s32.totalorder %s24, 0
    %p181 = por %p179, %p180
    %s183 = sadd.s32 %s182, 1
    %p186 = scmp.eq.s32.totalorder %s18, 1
    %p187 = scmp.ne.s32.totalorder %s182, %s184
    %p188 = scmp.eq.s32.totalorder %s18, 0
    %p189 = por %p187, %p188
    %p190 = scmp.ne.s32.totalorder %s182, %s184
    %p191 = scmp.eq.s32.totalorder %s23, 1
    %p192 = por %p190, %p191
    %p193 = scmp.ne.s32.totalorder %s184, %s185
    %p194 = scmp.eq.s32.totalorder %s23, 0
    %p195 = por %p193, %p194
    %p196 = scmp.ne.s32.totalorder %s184, %s185
    %p197 = scmp.eq.s32.totalorder %s24, 1
    %p198 = por %p196, %p197
    %p200 = scmp.ne.s32.totalorder %s185, %s199
    %p201 = scmp.eq.s32.totalorder %s24, 0
    %p202 = por %p200, %p201
    %s204 = sadd.s32 %s203, 1
    %p207 = scmp.eq.s32.totalorder %s18, 1
    %p208 = scmp.ne.s32.totalorder %s203, %s205
    %p209 = scmp.eq.s32.totalorder %s18, 0
    %p210 = por %p208, %p209
    %p211 = scmp.ne.s32.totalorder %s203, %s205
    %p212 = scmp.eq.s32.totalorder %s23, 1
    %p213 = por %p211, %p212
    %p214 = scmp.ne.s32.totalorder %s205, %s206
    %p215 = scmp.eq.s32.totalorder %s23, 0
    %p216 = por %p214, %p215
    %p217 = scmp.ne.s32.totalorder %s205, %s206
    %p218 = scmp.eq.s32.totalorder %s24, 1
    %p219 = por %p217, %p218
    %p221 = scmp.ne.s32.totalorder %s206, %s220
    %p222 = scmp.eq.s32.totalorder %s24, 0
    %p223 = por %p221, %p222
    %s225 = sadd.s32 %s224, 1
    %p228 = scmp.eq.s32.totalorder %s18, 1
    %p229 = scmp.ne.s32.totalorder %s224, %s226
    %p230 = scmp.eq.s32.totalorder %s18, 0
    %p231 = por %p229, %p230
    %p232 = scmp.ne.s32.totalorder %s224, %s226
    %p233 = scmp.eq.s32.totalorder %s23, 1
    %p234 = por %p232, %p233
    %p235 = scmp.ne.s32.totalorder %s226, %s227
    %p236 = scmp.eq.s32.totalorder %s23, 0
    %p237 = por %p235, %p236
    %p238 = scmp.ne.s32.totalorder %s226, %s227
    %p239 = scmp.eq.s32.totalorder %s24, 1
    %p240 = por %p238, %p239
    %p242 = scmp.ne.s32.totalorder %s227, %s241
    %p243 = scmp.eq.s32.totalorder %s24, 0
    %p244 = por %p242, %p243
    %s246 = sadd.s32 %s245, 1
    %p249 = scmp.eq.s32.totalorder %s18, 1
    %p250 = scmp.ne.s32.totalorder %s245, %s247
    %p251 = scmp.eq.s32.totalorder %s18, 0
    %p252 = por %p250, %p251
    %p253 = scmp.ne.s32.totalorder %s245, %s247
    %p254 = scmp.eq.s32.totalorder %s23, 1
    %p255 = por %p253, %p254
    %p256 = scmp.ne.s32.totalorder %s247, %s248
    %p257 = scmp.eq.s32.totalorder %s23, 0
    %p258 = por %p256, %p257
    %p259 = scmp.ne.s32.totalorder %s247, %s248
    %p260 = scmp.eq.s32.totalorder %s24, 1
    %p261 = por %p259, %p260
    %p263 = scmp.ne.s32.totalorder %s248, %s262
    %p264 = scmp.eq.s32.totalorder %s24, 0
    %p265 = por %p263, %p264
    %s266 = ssub.s32 %s18, %s25
    %p267 = scmp.eq.s32.totalorder %s266, 0
    %s269 = sadd.s32 %s268, 1
    %s270 = scalar_select %p267, %s268, %s269
    %p273 = pneg %p267
    %p274 = scmp.eq.s32.totalorder %s18, 1
    %p275 = por %p273, %p274
    %p276 = scmp.ne.s32.totalorder %s268, %s271
    %p277 = scmp.eq.s32.totalorder %s18, 0
    %p278 = por %p276, %p277
    %p279 = scmp.ne.s32.totalorder %s268, %s271
    %p280 = scmp.eq.s32.totalorder %s23, 1
    %p281 = por %p279, %p280
    %p282 = scmp.ne.s32.totalorder %s271, %s272
    %p283 = scmp.eq.s32.totalorder %s23, 0
    %p284 = por %p282, %p283
    %p285 = scmp.ne.s32.totalorder %s271, %s272
    %p286 = scmp.eq.s32.totalorder %s24, 1
    %p287 = por %p285, %p286
    %p289 = scmp.ne.s32.totalorder %s272, %s288
    %p290 = scmp.eq.s32.totalorder %s24, 0
    %p291 = por %p289, %p290
    %s292 = ssub.s32 %s18, %s25
    %p293 = scmp.eq.s32.totalorder %s292, 0
    %s295 = sadd.s32 %s294, 1
    %s296 = scalar_select %p293, %s294, %s295
    %p299 = pneg %p293
    %p300 = scmp.eq.s32.totalorder %s18, 1
    %p301 = por %p299, %p300
    %p302 = scmp.ne.s32.totalorder %s294, %s297
    %p303 = scmp.eq.s32.totalorder %s18, 0
    %p304 = por %p302, %p303
    %p305 = scmp.ne.s32.totalorder %s294, %s297
    %p306 = scmp.eq.s32.totalorder %s23, 1
    %p307 = por %p305, %p306
    %p308 = scmp.ne.s32.totalorder %s297, %s298
    %p309 = scmp.eq.s32.totalorder %s23, 0
    %p310 = por %p308, %p309
    %p311 = scmp.ne.s32.totalorder %s297, %s298
    %p312 = scmp.eq.s32.totalorder %s24, 1
    %p313 = por %p311, %p312
    %p315 = scmp.ne.s32.totalorder %s298, %s314
    %p316 = scmp.eq.s32.totalorder %s24, 0
    %p317 = por %p315, %p316
    %p318 = scmp.le.s32.totalorder 1, %s18
    %p319 = scmp.lt.s32.totalorder %s18, 3
    %p320 = pnand %p318, %p319
    %p321 = pneg %p320
    // Predicated region
    $region9: #{mmdit_forward.11} parent=5 // pred_check
      _
    $region10: #{mmdit_forward.11} parent=5 // pred_check_branch
      %323 = sbr.rel (%p320) target = $region12
    $region11: #{mmdit_forward.11} parent=5 // pred_region
      %s324 = ssub.s32 %s18, 1
      // Predicated region
      $region13: #{mmdit_forward.11} parent=11 // pred_check
        %p325 = pneg %p195
      $region14: #{mmdit_forward.11} parent=11 // pred_check_branch
        %327 = sbr.rel (%p325) target = $region16
      $region15: #{mmdit_forward.11} parent=11 // pred_region
        _
      $region16: #{mmdit_forward.11} parent=11 // pred_fallthru
        _
      // Predicated region
      $region17: #{mmdit_forward.11} parent=11 // pred_check
        %p328 = pneg %p216
      $region18: #{mmdit_forward.11} parent=11 // pred_check_branch
        %330 = sbr.rel (%p328) target = $region20
      $region19: #{mmdit_forward.11} parent=11 // pred_region
        _
      $region20: #{mmdit_forward.11} parent=11 // pred_fallthru
        _
      // Predicated region
      $region21: #{mmdit_forward.11} parent=11 // pred_check
        %p331 = pneg %p237
      $region22: #{mmdit_forward.11} parent=11 // pred_check_branch
        %333 = sbr.rel (%p331) target = $region24
      $region23: #{mmdit_forward.11} parent=11 // pred_region
        _
      $region24: #{mmdit_forward.11} parent=11 // pred_fallthru
        _
      // Predicated region
      $region25: #{mmdit_forward.11} parent=11 // pred_check
        %p334 = pneg %p258
      $region26: #{mmdit_forward.11} parent=11 // pred_check_branch
        %336 = sbr.rel (%p334) target = $region28
      $region27: #{mmdit_forward.11} parent=11 // pred_region
        _
      $region28: #{mmdit_forward.11} parent=11 // pred_fallthru
        _
    $region12: #{mmdit_forward.11} parent=5 // pred_fallthru
      _
    %p337 = scmp.lt.s32.totalorder %s18, 2
    // Predicated region
    $region29: #{mmdit_forward.11} parent=5 // pred_check
      %p338 = pneg %p337
    $region30: #{mmdit_forward.11} parent=5 // pred_check_branch
      %340 = sbr.rel (%p338) target = $region32
    $region31: #{mmdit_forward.11} parent=5 // pred_region
      // Predicated region
      $region33: #{mmdit_forward.11} parent=31 // pred_check
        %p341 = pneg %p38
      $region34: #{mmdit_forward.11} parent=31 // pred_check_branch
        %343 = sbr.rel (%p341) target = $region36
      $region35: #{mmdit_forward.11} parent=31 // pred_region
        %p344 = scmp.lt.s32.totalorder %s18, 1
        %s345 = scalar_select %p344, %s18, 1
        %s346 = smul.addr %s345, 8
        %s347 = scalar_lea.vmem %s0, %s346
      $region36: #{mmdit_forward.11} parent=31 // pred_fallthru
        _
      // Predicated region
      $region37: #{mmdit_forward.11} parent=31 // pred_check
        %p348 = pneg %p64
      $region38: #{mmdit_forward.11} parent=31 // pred_check_branch
        %350 = sbr.rel (%p348) target = $region40
      $region39: #{mmdit_forward.11} parent=31 // pred_region
        %p351 = scmp.lt.s32.totalorder %s18, 1
        %s352 = scalar_select %p351, %s18, 1
        %s353 = smul.addr %s352, 2
        %s354 = smul.addr %s353, 8
        %s355 = scalar_lea.vmem %s1, %s354
      $region40: #{mmdit_forward.11} parent=31 // pred_fallthru
        _
      // Predicated region
      $region41: #{mmdit_forward.11} parent=31 // pred_check
        %p356 = pneg %p90
      $region42: #{mmdit_forward.11} parent=31 // pred_check_branch
        %358 = sbr.rel (%p356) target = $region44
      $region43: #{mmdit_forward.11} parent=31 // pred_region
        %p359 = scmp.lt.s32.totalorder %s18, 1
        %s360 = scalar_select %p359, %s18, 1
        %s361 = scalar_lea.vmem %s2, %s360
      $region44: #{mmdit_forward.11} parent=31 // pred_fallthru
        _
      // Predicated region
      $region45: #{mmdit_forward.11} parent=31 // pred_check
        %p362 = pneg %p116
      $region46: #{mmdit_forward.11} parent=31 // pred_check_branch
        %364 = sbr.rel (%p362) target = $region48
      $region47: #{mmdit_forward.11} parent=31 // pred_region
        %p365 = scmp.lt.s32.totalorder %s18, 1
        %s366 = scalar_select %p365, %s18, 1
        %s367 = scalar_lea.vmem %s3, %s366
      $region48: #{mmdit_forward.11} parent=31 // pred_fallthru
        _
      // Predicated region
      $region49: #{mmdit_forward.11} parent=31 // pred_check
        %p368 = pneg %p142
      $region50: #{mmdit_forward.11} parent=31 // pred_check_branch
        %370 = sbr.rel (%p368) target = $region52
      $region51: #{mmdit_forward.11} parent=31 // pred_region
        %p371 = scmp.lt.s32.totalorder %s18, 1
        %s372 = scalar_select %p371, %s18, 1
        %s373 = scalar_lea.vmem %s4, %s372
      $region52: #{mmdit_forward.11} parent=31 // pred_fallthru
        _
      // Predicated region
      $region53: #{mmdit_forward.11} parent=31 // pred_check
        %p374 = pneg %p168
      $region54: #{mmdit_forward.11} parent=31 // pred_check_branch
        %376 = sbr.rel (%p374) target = $region56
      $region55: #{mmdit_forward.11} parent=31 // pred_region
        %p377 = scmp.lt.s32.totalorder %s18, 1
        %s378 = scalar_select %p377, %s18, 1
        %s379 = scalar_lea.vmem %s5, %s378
      $region56: #{mmdit_forward.11} parent=31 // pred_fallthru
        _
    $region32: #{mmdit_forward.11} parent=5 // pred_fallthru
      _
    %p380 = scmp.le.s32.totalorder 1, %s18
    %p381 = scmp.lt.s32.totalorder %s18, 3
    %p382 = pnand %p380, %p381
    %p383 = pneg %p382
    // Predicated region
    $region57: #{mmdit_forward.11} parent=5 // pred_check
      _
    $region58: #{mmdit_forward.11} parent=5 // pred_check_branch
      %385 = sbr.rel (%p382) target = $region60
    $region59: #{mmdit_forward.11} parent=5 // pred_region
      %s386 = ssub.s32 %s18, 1
      %p387 = scmp.lt.s32.totalorder %s23, 1
      %s388 = scalar_select %p387, %s23, 1
      %s389 = smul.addr %s388, 8
      %s390 = scalar_lea.vmem %s0, %s389
      %p391 = pneg %p44
      %p392 = pneg %p41
      %p393 = scmp.lt.s32.totalorder %s23, 1
      %s394 = scalar_select %p393, %s23, 1
      %s395 = smul.addr %s394, 2
      %s396 = smul.addr %s395, 8
      %s397 = scalar_lea.vmem %s1, %s396
      %p398 = pneg %p70
      %p399 = pneg %p67
      %p400 = scmp.lt.s32.totalorder %s23, 1
      %s401 = scalar_select %p400, %s23, 1
      %s402 = scalar_lea.vmem %s2, %s401
      %p403 = pneg %p96
      %p404 = pneg %p93
      %p405 = scmp.lt.s32.totalorder %s23, 1
      %s406 = scalar_select %p405, %s23, 1
      %s407 = scalar_lea.vmem %s3, %s406
      %p408 = pneg %p122
      %p409 = pneg %p119
      %p410 = scmp.lt.s32.totalorder %s23, 1
      %s411 = scalar_select %p410, %s23, 1
      %s412 = scalar_lea.vmem %s4, %s411
      %p413 = pneg %p148
      %p414 = pneg %p145
      %p415 = scmp.lt.s32.totalorder %s23, 1
      %s416 = scalar_select %p415, %s23, 1
      %s417 = scalar_lea.vmem %s5, %s416
      %p418 = pneg %p174
      %p419 = pneg %p171
      %p420 = pneg %p195
      %p421 = pneg %p192
      %p422 = pneg %p216
      %p423 = pneg %p213
      %p424 = pneg %p237
      %p425 = pneg %p234
      %p426 = pneg %p258
      %p427 = pneg %p255
      %p428 = pneg %p284
      %p429 = pneg %p281
      %p430 = scmp.lt.s32.totalorder %s23, 1
      %s431 = scalar_select %p430, %s23, 1
      %s432 = smul.addr %s431, 8
      %s433 = scalar_lea.vmem %s10, %s432
      %p434 = pneg %p310
      %p435 = pneg %p307
      %p436 = scmp.lt.s32.totalorder %s23, 1
      %s437 = scalar_select %p436, %s23, 1
      %s438 = smul.addr %s437, 2
      %s439 = smul.addr %s438, 8
      %s440 = scalar_lea.vmem %s11, %s439
      %p441 = scmp.lt.s32.totalorder %s23, 1
      %s442 = scalar_select %p441, %s23, 1
      %s443 = smul.addr %s442, 8
      %s444 = scalar_lea.vmem %s0, %s443
      %p445 = scmp.lt.s32.totalorder %s23, 1
      %s446 = scalar_select %p445, %s23, 1
      %s447 = smul.addr %s446, 2
      %s448 = smul.addr %s447, 8
      %s449 = scalar_lea.vmem %s1, %s448
      %p450 = scmp.lt.s32.totalorder %s23, 1
      %s451 = scalar_select %p450, %s23, 1
      %s452 = scalar_lea.vmem %s2, %s451
      %p453 = scmp.lt.s32.totalorder %s23, 1
      %s454 = scalar_select %p453, %s23, 1
      %s455 = scalar_lea.vmem %s3, %s454
      %p456 = scmp.lt.s32.totalorder %s23, 1
      %s457 = scalar_select %p456, %s23, 1
      %s458 = scalar_lea.vmem %s4, %s457
      %p459 = scmp.lt.s32.totalorder %s23, 1
      %s460 = scalar_select %p459, %s23, 1
      %s461 = scalar_lea.vmem %s5, %s460
      %p462 = scmp.lt.s32.totalorder %s23, 1
      %s463 = scalar_select %p462, %s23, 1
      %s464 = smul.addr %s463, 8
      %s465 = scalar_lea.vmem %s10, %s464
      %p466 = scmp.lt.s32.totalorder %s23, 1
      %s467 = scalar_select %p466, %s23, 1
      %s468 = smul.addr %s467, 2
      %s469 = smul.addr %s468, 8
      %s470 = scalar_lea.vmem %s11, %s469
      %v472 = vld [vmem:[%s444] sm:$0xff]
      %v473 = vld [vmem:[%s452] sm:$0x1]
      %vm474 = vcmask 261120
      %v475 = vsel %vm474, %v472, 0.0
      %476 = vadd.xlane.f32.xlu0 %v475
      %v477 = vpop.xlane.xlu0 %476
      %v478 = vrcp.pop 32.0
      %v479 = vmul.f32 32.0, %v478
      %v480 = vsub.f32 1.0, %v479
      %v481 = vmul.f32 %v478, %v480
      %v482 = vadd.f32 %v478, %v481
      %vm483 = vweird.f32 %v478
      %v484 = vsel %vm483, %v478, %v482
      %v485 = vmul.f32 %v477, %v484
      %v486 = vsub.f32 %v472, %v485
      %v487 = vmul.f32 %v486, %v486
      %v488 = vsel %vm474, %v487, 0.0
      %489 = vadd.xlane.f32.xlu0 %v488
      %v490 = vpop.xlane.xlu0 %489
      %v491 = vmul.f32 %v490, %v484
      %v492 = vadd.f32 %v491, 1e-05
      %v493 = vrsqrt.pop %v492
      %v494 = vmul.f32 %v493, %v492
      %v495 = vmul.f32 %v494, %v493
      %v496 = vmul.f32 0.5, %v495
      %v497 = vsub.f32 1.5, %v496
      %v498 = vmul.f32 %v493, %v497
      %vm499 = vweird.f32 %v492
      %vm500 = vweird.f32 %v493
      %vm501 = vmor %vm499, %vm500
      %v502 = vsel %vm501, %v493, %v498
      %v503 = vmul.f32 %v486, %v502
      %v505 = vperm.slane %v473, 0
      %v507 = vmul.f32 %v503, %v505
      %508 = vrot.lane.b32.xlu0 %v505, 96
      %v509 = vpop.permute.xlu0 %508
      %v511 = vadd.f32 %v507, %v509
      %v512 = vld [vmem:[%s6] sm:$0xff]
      %v513 = vld [vmem:[%s6 + $0x8] sm:$0xff]
      %v514 = vld [vmem:[%s6 + $0x10] sm:$0xff]
      %v515 = vld [vmem:[%s6 + $0x18] sm:$0xff]
      %v516 = vpack.c.bf16 %v511, %v511
      %v521 = vunpack.c.l.b16 %v512
      %v522 = vunpack.c.h.b16 %v512
      %v523 = vunpack.c.l.b16 %v513
      %v524 = vunpack.c.h.b16 %v513
      %v525 = vunpack.c.l.b16 %v514
      %v526 = vunpack.c.h.b16 %v514
      %v527 = vunpack.c.l.b16 %v515
      %v528 = vunpack.c.h.b16 %v515
      %v529 = vpack.c.b16 %v523, %v521
      %v530 = vpack.c.b16 %v524, %v522
      %v531 = vpack.c.b16 %v527, %v525
      %v532 = vpack.c.b16 %v528, %v526
      %v538 = vsel %vm474, %v516, 0
      %540 = vmatpush.bf16.msra.mxu0 0
      %541 = vmatpush.bf16.msra.mxu0 0
      %542 = vmatpush.bf16.msra.mxu0 0
      %543 = vmatpush.bf16.msra.mxu0 0
      %544 = vmatpush.bf16.msra.mxu0 0
      %545 = vmatpush.bf16.msra.mxu0 0
      %546 = vmatpush.bf16.msra.mxu0 %v531
      %547 = vmatpush.bf16.msra.mxu0 %v529
      %548 = vmatmul.bf16.gmra.mxu0 %v538
      %v549 = vpop.f32.mrf.mxu0
      %v550 = vadd.f32 0.0, %v549
      %v551 = vpop.f32.mrf.mxu0
      %552 = vdwg.mxu0
      %553 = vmatpush.bf16.msra.mxu0 0
      %554 = vmatpush.bf16.msra.mxu0 0
      %555 = vmatpush.bf16.msra.mxu0 0
      %556 = vmatpush.bf16.msra.mxu0 0
      %557 = vmatpush.bf16.msra.mxu0 0
      %558 = vmatpush.bf16.msra.mxu0 0
      %559 = vmatpush.bf16.msra.mxu0 %v532
      %560 = vmatpush.bf16.msra.mxu0 %v530
      %561 = vmatmul.bf16.gmra.mxu0 %v538
      %v562 = vpop.f32.mrf.mxu0
      %v563 = vadd.f32 0.0, %v562
      %v564 = vpop.f32.mrf.mxu0
      %565 = vdwg.mxu0
      %v566 = vld [vmem:[%s449] sm:$0xff]
      %v567 = vld [vmem:[%s449 + $0x8] sm:$0xff]
      %v568 = vld [vmem:[%s455] sm:$0x1]
      %vm569 = vcmask 523264
      %v570 = vsel %vm569, %v566, 0.0
      %571 = vadd.xlane.f32.xlu0 %v570
      %v572 = vpop.xlane.xlu0 %571
      %v573 = vsel %vm569, %v567, 0.0
      %574 = vadd.xlane.f32.xlu0 %v573
      %v575 = vpop.xlane.xlu0 %574
      %v576 = vrcp.pop 64.0
      %v577 = vmul.f32 64.0, %v576
      %v578 = vsub.f32 1.0, %v577
      %v579 = vmul.f32 %v576, %v578
      %v580 = vadd.f32 %v576, %v579
      %vm581 = vweird.f32 %v576
      %v582 = vsel %vm581, %v576, %v580
      %v583 = vmul.f32 %v572, %v582
      %v584 = vmul.f32 %v575, %v582
      %v585 = vsub.f32 %v566, %v583
      %v586 = vsub.f32 %v567, %v584
      %v587 = vmul.f32 %v585, %v585
      %v588 = vmul.f32 %v586, %v586
      %v589 = vsel %vm569, %v587, 0.0
      %590 = vadd.xlane.f32.xlu0 %v589
      %v591 = vpop.xlane.xlu0 %590
      %v592 = vsel %vm569, %v588, 0.0
      %593 = vadd.xlane.f32.xlu0 %v592
      %v594 = vpop.xlane.xlu0 %593
      %v595 = vmul.f32 %v591, %v582
      %v596 = vmul.f32 %v594, %v582
      %v597 = vadd.f32 %v595, 1e-05
      %v598 = vadd.f32 %v596, 1e-05
      %v599 = vrsqrt.pop %v597
      %v600 = vmul.f32 %v599, %v597
      %v601 = vmul.f32 %v600, %v599
      %v602 = vmul.f32 0.5, %v601
      %v603 = vsub.f32 1.5, %v602
      %v604 = vmul.f32 %v599, %v603
      %vm605 = vweird.f32 %v597
      %vm606 = vweird.f32 %v599
      %vm607 = vmor %vm605, %vm606
      %v608 = vsel %vm607, %v599, %v604
      %v609 = vrsqrt.pop %v598
      %v610 = vmul.f32 %v609, %v598
      %v611 = vmul.f32 %v610, %v609
      %v612 = vmul.f32 0.5, %v611
      %v613 = vsub.f32 1.5, %v612
      %v614 = vmul.f32 %v609, %v613
      %vm615 = vweird.f32 %v598
      %vm616 = vweird.f32 %v609
      %vm617 = vmor %vm615, %vm616
      %v618 = vsel %vm617, %v609, %v614
      %v619 = vmul.f32 %v585, %v608
      %v620 = vmul.f32 %v586, %v618
      %v622 = vperm.slane %v568, 0
      %v624 = vmul.f32 %v619, %v622
      %v625 = vmul.f32 %v620, %v622
      %626 = vrot.lane.b32.xlu0 %v622, 64
      %v627 = vpop.permute.xlu0 %626
      %v629 = vadd.f32 %v624, %v627
      %v630 = vadd.f32 %v625, %v627
      %v631 = vld [vmem:[%s7] sm:$0xff]
      %v632 = vld [vmem:[%s7 + $0x8] sm:$0xff]
      %v633 = vld [vmem:[%s7 + $0x10] sm:$0xff]
      %v634 = vld [vmem:[%s7 + $0x18] sm:$0xff]
      %v635 = vld [vmem:[%s7 + $0x20] sm:$0xff]
      %v636 = vld [vmem:[%s7 + $0x28] sm:$0xff]
      %v637 = vld [vmem:[%s7 + $0x30] sm:$0xff]
      %v638 = vld [vmem:[%s7 + $0x38] sm:$0xff]
      %v639 = vpack.c.bf16 %v630, %v629
      %v648 = vunpack.c.l.b16 %v631
      %v649 = vunpack.c.h.b16 %v631
      %v650 = vunpack.c.l.b16 %v632
      %v651 = vunpack.c.h.b16 %v632
      %v652 = vunpack.c.l.b16 %v633
      %v653 = vunpack.c.h.b16 %v633
      %v654 = vunpack.c.l.b16 %v634
      %v655 = vunpack.c.h.b16 %v634
      %v656 = vunpack.c.l.b16 %v635
      %v657 = vunpack.c.h.b16 %v635
      %v658 = vunpack.c.l.b16 %v636
      %v659 = vunpack.c.h.b16 %v636
      %v660 = vunpack.c.l.b16 %v637
      %v661 = vunpack.c.h.b16 %v637
      %v662 = vunpack.c.l.b16 %v638
      %v663 = vunpack.c.h.b16 %v638
      %v664 = vpack.c.b16 %v650, %v648
      %v665 = vpack.c.b16 %v651, %v649
      %v666 = vpack.c.b16 %v654, %v652
      %v667 = vpack.c.b16 %v655, %v653
      %v668 = vpack.c.b16 %v658, %v656
      %v669 = vpack.c.b16 %v659, %v657
      %v670 = vpack.c.b16 %v662, %v660
      %v671 = vpack.c.b16 %v663, %v661
      %v681 = vsel %vm569, %v639, 0
      %683 = vmatpush.bf16.msra.mxu0 0
      %684 = vmatpush.bf16.msra.mxu0 0
      %685 = vmatpush.bf16.msra.mxu0 0
      %686 = vmatpush.bf16.msra.mxu0 0
      %687 = vmatpush.bf16.msra.mxu0 %v670
      %688 = vmatpush.bf16.msra.mxu0 %v668
      %689 = vmatpush.bf16.msra.mxu0 %v666
      %690 = vmatpush.bf16.msra.mxu0 %v664
      %691 = vmatmul.bf16.gmra.mxu0 %v681
      %v692 = vpop.f32.mrf.mxu0
      %v693 = vadd.f32 0.0, %v692
      %v694 = vpop.f32.mrf.mxu0
      %v695 = vadd.f32 0.0, %v694
      %696 = vdwg.mxu0
      %697 = vmatpush.bf16.msra.mxu0 0
      %698 = vmatpush.bf16.msra.mxu0 0
      %699 = vmatpush.bf16.msra.mxu0 0
      %700 = vmatpush.bf16.msra.mxu0 0
      %701 = vmatpush.bf16.msra.mxu0 %v671
      %702 = vmatpush.bf16.msra.mxu0 %v669
      %703 = vmatpush.bf16.msra.mxu0 %v667
      %704 = vmatpush.bf16.msra.mxu0 %v665
      %705 = vmatmul.bf16.gmra.mxu0 %v681
      %v706 = vpop.f32.mrf.mxu0
      %v707 = vadd.f32 0.0, %v706
      %v708 = vpop.f32.mrf.mxu0
      %v709 = vadd.f32 0.0, %v708
      %710 = vdwg.mxu0
      %v711 = vmul.f32 %v550, 0.25
      %v712 = vmul.f32 %v693, 0.25
      %v713 = vmul.f32 %v695, 0.25
      %v714 = vpack.c.bf16 %v712, %v711
      %v715 = vpack.c.bf16 %v713, %v713
      %v716 = vpack.c.bf16 %v693, %v550
      %v717 = vpack.c.bf16 %v695, %v695
      %v718 = vpack.c.bf16 %v707, %v563
      %v719 = vpack.c.bf16 %v709, %v709
      %722 = vrot.lane.b32.xlu0 %v716, 64
      %v723 = vpop.permute.xlu0 %722
      %724 = vrot.lane.b32.xlu0 %v717, 64
      %v725 = vpop.permute.xlu0 %724
      %vm726 = vcmask 130048
      %v728 = vsel %vm726, %v714, 0
      %v731 = vsel %vm726, %v715, 0
      %v734 = vsel %vm726, %v723, 0
      %v737 = vsel %vm726, %v725, 0
      %739 = vmatpush.bf16.xpose.msra.mxu0 0
      %740 = vmatpush.bf16.xpose.msra.mxu0 0
      %741 = vmatpush.bf16.xpose.msra.mxu0 0
      %742 = vmatpush.bf16.xpose.msra.mxu0 0
      %743 = vmatpush.bf16.xpose.msra.mxu0 0
      %744 = vmatpush.bf16.xpose.msra.mxu0 0
      %745 = vmatpush.bf16.xpose.msra.mxu0 %v737
      %746 = vmatpush.bf16.xpose.msra.mxu0 %v734
      %747 = vmatmul.bf16.gmra.mxu0 %v728
      %v748 = vpop.f32.mrf.mxu0
      %v749 = vadd.f32 0.0, %v748
      %v750 = vpop.f32.mrf.mxu0
      %v751 = vadd.f32 0.0, %v750
      %752 = vmatmul.bf16.gmra.mxu0 %v731
      %v753 = vpop.f32.mrf.mxu0
      %v754 = vadd.f32 0.0, %v753
      %v755 = vpop.f32.mrf.mxu0
      %756 = vdwg.mxu0
      %vm757 = vcmask 195584
      %v758 = vsel %vm757, %v749, -inf
      %759 = vmax.xlane.f32.xlu0 %v758
      %v760 = vpop.xlane.xlu0 %759
      %v761 = vsel %vm757, %v751, -inf
      %762 = vmax.xlane.f32.xlu0 %v761
      %v763 = vpop.xlane.xlu0 %762
      %v764 = vsel %vm757, %v754, -inf
      %765 = vmax.xlane.f32.xlu0 %v764
      %v766 = vpop.xlane.xlu0 %765
      %v767 = vsub.f32 %v749, %v760
      %v768 = vsub.f32 %v751, %v763
      %v769 = vsub.f32 %v754, %v766
      %v770 = vmul.f32 %v767, 1.442695
      %v771 = vpow.pop %v770
      %v772 = vmul.f32 %v768, 1.442695
      %v773 = vpow.pop %v772
      %v774 = vmul.f32 %v769, 1.442695
      %v775 = vpow.pop %v774
      %v776 = vsel %vm757, %v771, 0.0
      %777 = vadd.xlane.f32.xlu0 %v776
      %v778 = vpop.xlane.xlu0 %777
      %v779 = vsel %vm757, %v773, 0.0
      %780 = vadd.xlane.f32.xlu0 %v779
      %v781 = vpop.xlane.xlu0 %780
      %v782 = vsel %vm757, %v775, 0.0
      %783 = vadd.xlane.f32.xlu0 %v782
      %v784 = vpop.xlane.xlu0 %783
      %v785 = vpack.c.bf16 %v773, %v771
      %v786 = vpack.c.bf16 %v775, %v775
      %v788 = vsel %vm757, %v785, 0
      %v791 = vsel %vm757, %v786, 0
      %vm793 = vcmask 1043456
      %v795 = vsel %vm793, %v719, 0
      %797 = vmatpush.bf16.msra.mxu0 0
      %798 = vmatpush.bf16.msra.mxu0 0
      %799 = vmatpush.bf16.msra.mxu0 0
      %800 = vmatpush.bf16.msra.mxu0 0
      %801 = vmatpush.bf16.msra.mxu0 0
      %802 = vmatpush.bf16.msra.mxu0 0
      %803 = vmatpush.bf16.msra.mxu0 %v795
      %804 = vmatpush.bf16.msra.mxu0 %v718
      %805 = vmatmul.bf16.gmra.mxu0 %v788
      %v806 = vpop.f32.mrf.mxu0
      %v807 = vadd.f32 0.0, %v806
      %v808 = vpop.f32.mrf.mxu0
      %v809 = vadd.f32 0.0, %v808
      %810 = vmatmul.bf16.gmra.mxu0 %v791
      %v811 = vpop.f32.mrf.mxu0
      %v812 = vadd.f32 0.0, %v811
      %v813 = vpop.f32.mrf.mxu0
      %814 = vdwg.mxu0
      %v815 = vrcp.pop %v778
      %v816 = vmul.f32 %v778, %v815
      %v817 = vsub.f32 1.0, %v816
      %v818 = vmul.f32 %v815, %v817
      %v819 = vadd.f32 %v815, %v818
      %vm820 = vweird.f32 %v778
      %vm821 = vweird.f32 %v815
      %vm822 = vmor %vm820, %vm821
      %v823 = vsel %vm822, %v815, %v819
      %v824 = vand.u32 2147483647, %v778
      %vm825 = vcmp.eq.f32.partialorder %v824, 8.507059e+37
      %v826 = vand.u32 %v778, 2147483648
      %v827 = vor.u32 1.1754944e-38, %v826
      %v828 = vsel %vm825, %v827, %v823
      %v829 = vrcp.pop %v781
      %v830 = vmul.f32 %v781, %v829
      %v831 = vsub.f32 1.0, %v830
      %v832 = vmul.f32 %v829, %v831
      %v833 = vadd.f32 %v829, %v832
      %vm834 = vweird.f32 %v781
      %vm835 = vweird.f32 %v829
      %vm836 = vmor %vm834, %vm835
      %v837 = vsel %vm836, %v829, %v833
      %v838 = vand.u32 2147483647, %v781
      %vm839 = vcmp.eq.f32.partialorder %v838, 8.507059e+37
      %v840 = vand.u32 %v781, 2147483648
      %v841 = vor.u32 1.1754944e-38, %v840
      %v842 = vsel %vm839, %v841, %v837
      %v843 = vrcp.pop %v784
      %v844 = vmul.f32 %v784, %v843
      %v845 = vsub.f32 1.0, %v844
      %v846 = vmul.f32 %v843, %v845
      %v847 = vadd.f32 %v843, %v846
      %vm848 = vweird.f32 %v784
      %vm849 = vweird.f32 %v843
      %vm850 = vmor %vm848, %vm849
      %v851 = vsel %vm850, %v843, %v847
      %v852 = vand.u32 2147483647, %v784
      %vm853 = vcmp.eq.f32.partialorder %v852, 8.507059e+37
      %v854 = vand.u32 %v784, 2147483648
      %v855 = vor.u32 1.1754944e-38, %v854
      %v856 = vsel %vm853, %v855, %v851
      %v857 = vmul.f32 %v807, %v828
      %v858 = vmul.f32 %v809, %v842
      %v859 = vmul.f32 %v812, %v856
      %862 = vrot.lane.b32.xlu0 %v714, 112
      %v863 = vpop.permute.xlu0 %862
      %864 = vrot.lane.b32.xlu0 %v715, 112
      %v865 = vpop.permute.xlu0 %864
      %866 = vrot.lane.b32.xlu0 %v716, 48
      %v867 = vpop.permute.xlu0 %866
      %868 = vrot.lane.b32.xlu0 %v717, 48
      %v869 = vpop.permute.xlu0 %868
      %v871 = vsel %vm726, %v863, 0
      %v874 = vsel %vm726, %v865, 0
      %v877 = vsel %vm726, %v867, 0
      %v880 = vsel %vm726, %v869, 0
      %882 = vmatpush.bf16.xpose.msra.mxu0 0
      %883 = vmatpush.bf16.xpose.msra.mxu0 0
      %884 = vmatpush.bf16.xpose.msra.mxu0 0
      %885 = vmatpush.bf16.xpose.msra.mxu0 0
      %886 = vmatpush.bf16.xpose.msra.mxu0 0
      %887 = vmatpush.bf16.xpose.msra.mxu0 0
      %888 = vmatpush.bf16.xpose.msra.mxu0 %v880
      %889 = vmatpush.bf16.xpose.msra.mxu0 %v877
      %890 = vmatmul.bf16.gmra.mxu0 %v871
      %v891 = vpop.f32.mrf.mxu0
      %v892 = vadd.f32 0.0, %v891
      %v893 = vpop.f32.mrf.mxu0
      %v894 = vadd.f32 0.0, %v893
      %895 = vmatmul.bf16.gmra.mxu0 %v874
      %v896 = vpop.f32.mrf.mxu0
      %v897 = vadd.f32 0.0, %v896
      %v898 = vpop.f32.mrf.mxu0
      %899 = vdwg.mxu0
      %v900 = vsel %vm757, %v892, -inf
      %901 = vmax.xlane.f32.xlu0 %v900
      %v902 = vpop.xlane.xlu0 %901
      %v903 = vsel %vm757, %v894, -inf
      %904 = vmax.xlane.f32.xlu0 %v903
      %v905 = vpop.xlane.xlu0 %904
      %v906 = vsel %vm757, %v897, -inf
      %907 = vmax.xlane.f32.xlu0 %v906
      %v908 = vpop.xlane.xlu0 %907
      %v909 = vsub.f32 %v892, %v902
      %v910 = vsub.f32 %v894, %v905
      %v911 = vsub.f32 %v897, %v908
      %v912 = vmul.f32 %v909, 1.442695
      %v913 = vpow.pop %v912
      %v914 = vmul.f32 %v910, 1.442695
      %v915 = vpow.pop %v914
      %v916 = vmul.f32 %v911, 1.442695
      %v917 = vpow.pop %v916
      %v918 = vsel %vm757, %v913, 0.0
      %919 = vadd.xlane.f32.xlu0 %v918
      %v920 = vpop.xlane.xlu0 %919
      %v921 = vsel %vm757, %v915, 0.0
      %922 = vadd.xlane.f32.xlu0 %v921
      %v923 = vpop.xlane.xlu0 %922
      %v924 = vsel %vm757, %v917, 0.0
      %925 = vadd.xlane.f32.xlu0 %v924
      %v926 = vpop.xlane.xlu0 %925
      %v927 = vpack.c.bf16 %v915, %v913
      %v928 = vpack.c.bf16 %v917, %v917
      %931 = vrot.lane.b32.xlu0 %v718, 112
      %v932 = vpop.permute.xlu0 %931
      %933 = vrot.lane.b32.xlu0 %v719, 112
      %v934 = vpop.permute.xlu0 %933
      %v937 = vsel %vm757, %v927, 0
      %v940 = vsel %vm757, %v928, 0
      %v943 = vsel %vm793, %v934, 0
      %945 = vmatpush.bf16.msra.mxu0 0
      %946 = vmatpush.bf16.msra.mxu0 0
      %947 = vmatpush.bf16.msra.mxu0 0
      %948 = vmatpush.bf16.msra.mxu0 0
      %949 = vmatpush.bf16.msra.mxu0 0
      %950 = vmatpush.bf16.msra.mxu0 0
      %951 = vmatpush.bf16.msra.mxu0 %v943
      %952 = vmatpush.bf16.msra.mxu0 %v932
      %953 = vmatmul.bf16.gmra.mxu0 %v937
      %v954 = vpop.f32.mrf.mxu0
      %v955 = vadd.f32 0.0, %v954
      %v956 = vpop.f32.mrf.mxu0
      %v957 = vadd.f32 0.0, %v956
      %958 = vmatmul.bf16.gmra.mxu0 %v940
      %v959 = vpop.f32.mrf.mxu0
      %v960 = vadd.f32 0.0, %v959
      %v961 = vpop.f32.mrf.mxu0
      %962 = vdwg.mxu0
      %v963 = vrcp.pop %v920
      %v964 = vmul.f32 %v920, %v963
      %v965 = vsub.f32 1.0, %v964
      %v966 = vmul.f32 %v963, %v965
      %v967 = vadd.f32 %v963, %v966
      %vm968 = vweird.f32 %v920
      %vm969 = vweird.f32 %v963
      %vm970 = vmor %vm968, %vm969
      %v971 = vsel %vm970, %v963, %v967
      %v972 = vand.u32 2147483647, %v920
      %vm973 = vcmp.eq.f32.partialorder %v972, 8.507059e+37
      %v974 = vand.u32 %v920, 2147483648
      %v975 = vor.u32 1.1754944e-38, %v974
      %v976 = vsel %vm973, %v975, %v971
      %v977 = vrcp.pop %v923
      %v978 = vmul.f32 %v923, %v977
      %v979 = vsub.f32 1.0, %v978
      %v980 = vmul.f32 %v977, %v979
      %v981 = vadd.f32 %v977, %v980
      %vm982 = vweird.f32 %v923
      %vm983 = vweird.f32 %v977
      %vm984 = vmor %vm982, %vm983
      %v985 = vsel %vm984, %v977, %v981
      %v986 = vand.u32 2147483647, %v923
      %vm987 = vcmp.eq.f32.partialorder %v986, 8.507059e+37
      %v988 = vand.u32 %v923, 2147483648
      %v989 = vor.u32 1.1754944e-38, %v988
      %v990 = vsel %vm987, %v989, %v985
      %v991 = vrcp.pop %v926
      %v992 = vmul.f32 %v926, %v991
      %v993 = vsub.f32 1.0, %v992
      %v994 = vmul.f32 %v991, %v993
      %v995 = vadd.f32 %v991, %v994
      %vm996 = vweird.f32 %v926
      %vm997 = vweird.f32 %v991
      %vm998 = vmor %vm996, %vm997
      %v999 = vsel %vm998, %v991, %v995
      %v1000 = vand.u32 2147483647, %v926
      %vm1001 = vcmp.eq.f32.partialorder %v1000, 8.507059e+37
      %v1002 = vand.u32 %v926, 2147483648
      %v1003 = vor.u32 1.1754944e-38, %v1002
      %v1004 = vsel %vm1001, %v1003, %v999
      %v1005 = vmul.f32 %v955, %v976
      %v1006 = vmul.f32 %v957, %v990
      %v1007 = vmul.f32 %v960, %v1004
      %1008 = vrot.lane.b32.xlu0 %v714, 96
      %v1009 = vpop.permute.xlu0 %1008
      %1010 = vrot.lane.b32.xlu0 %v715, 96
      %v1011 = vpop.permute.xlu0 %1010
      %1012 = vrot.lane.b32.xlu0 %v716, 32
      %v1013 = vpop.permute.xlu0 %1012
      %1014 = vrot.lane.b32.xlu0 %v717, 32
      %v1015 = vpop.permute.xlu0 %1014
      %v1017 = vsel %vm726, %v1009, 0
      %v1020 = vsel %vm726, %v1011, 0
      %v1023 = vsel %vm726, %v1013, 0
      %v1026 = vsel %vm726, %v1015, 0
      %1028 = vmatpush.bf16.xpose.msra.mxu0 0
      %1029 = vmatpush.bf16.xpose.msra.mxu0 0
      %1030 = vmatpush.bf16.xpose.msra.mxu0 0
      %1031 = vmatpush.bf16.xpose.msra.mxu0 0
      %1032 = vmatpush.bf16.xpose.msra.mxu0 0
      %1033 = vmatpush.bf16.xpose.msra.mxu0 0
      %1034 = vmatpush.bf16.xpose.msra.mxu0 %v1026
      %1035 = vmatpush.bf16.xpose.msra.mxu0 %v1023
      %1036 = vmatmul.bf16.gmra.mxu0 %v1017
      %v1037 = vpop.f32.mrf.mxu0
      %v1038 = vadd.f32 0.0, %v1037
      %v1039 = vpop.f32.mrf.mxu0
      %v1040 = vadd.f32 0.0, %v1039
      %1041 = vmatmul.bf16.gmra.mxu0 %v1020
      %v1042 = vpop.f32.mrf.mxu0
      %v1043 = vadd.f32 0.0, %v1042
      %v1044 = vpop.f32.mrf.mxu0
      %1045 = vdwg.mxu0
      %v1046 = vsel %vm757, %v1038, -inf
      %1047 = vmax.xlane.f32.xlu0 %v1046
      %v1048 = vpop.xlane.xlu0 %1047
      %v1049 = vsel %vm757, %v1040, -inf
      %1050 = vmax.xlane.f32.xlu0 %v1049
      %v1051 = vpop.xlane.xlu0 %1050
      %v1052 = vsel %vm757, %v1043, -inf
      %1053 = vmax.xlane.f32.xlu0 %v1052
      %v1054 = vpop.xlane.xlu0 %1053
      %v1055 = vsub.f32 %v1038, %v1048
      %v1056 = vsub.f32 %v1040, %v1051
      %v1057 = vsub.f32 %v1043, %v1054
      %v1058 = vmul.f32 %v1055, 1.442695
      %v1059 = vpow.pop %v1058
      %v1060 = vmul.f32 %v1056, 1.442695
      %v1061 = vpow.pop %v1060
      %v1062 = vmul.f32 %v1057, 1.442695
      %v1063 = vpow.pop %v1062
      %v1064 = vsel %vm757, %v1059, 0.0
      %1065 = vadd.xlane.f32.xlu0 %v1064
      %v1066 = vpop.xlane.xlu0 %1065
      %v1067 = vsel %vm757, %v1061, 0.0
      %1068 = vadd.xlane.f32.xlu0 %v1067
      %v1069 = vpop.xlane.xlu0 %1068
      %v1070 = vsel %vm757, %v1063, 0.0
      %1071 = vadd.xlane.f32.xlu0 %v1070
      %v1072 = vpop.xlane.xlu0 %1071
      %v1073 = vpack.c.bf16 %v1061, %v1059
      %v1074 = vpack.c.bf16 %v1063, %v1063
      %1075 = vrot.lane.b32.xlu0 %v718, 96
      %v1076 = vpop.permute.xlu0 %1075
      %1077 = vrot.lane.b32.xlu0 %v719, 96
      %v1078 = vpop.permute.xlu0 %1077
      %v1081 = vsel %vm757, %v1073, 0
      %v1084 = vsel %vm757, %v1074, 0
      %v1087 = vsel %vm793, %v1078, 0
      %1089 = vmatpush.bf16.msra.mxu0 0
      %1090 = vmatpush.bf16.msra.mxu0 0
      %1091 = vmatpush.bf16.msra.mxu0 0
      %1092 = vmatpush.bf16.msra.mxu0 0
      %1093 = vmatpush.bf16.msra.mxu0 0
      %1094 = vmatpush.bf16.msra.mxu0 0
      %1095 = vmatpush.bf16.msra.mxu0 %v1087
      %1096 = vmatpush.bf16.msra.mxu0 %v1076
      %1097 = vmatmul.bf16.gmra.mxu0 %v1081
      %v1098 = vpop.f32.mrf.mxu0
      %v1099 = vadd.f32 0.0, %v1098
      %v1100 = vpop.f32.mrf.mxu0
      %v1101 = vadd.f32 0.0, %v1100
      %1102 = vmatmul.bf16.gmra.mxu0 %v1084
      %v1103 = vpop.f32.mrf.mxu0
      %v1104 = vadd.f32 0.0, %v1103
      %v1105 = vpop.f32.mrf.mxu0
      %1106 = vdwg.mxu0
      %v1107 = vrcp.pop %v1066
      %v1108 = vmul.f32 %v1066, %v1107
      %v1109 = vsub.f32 1.0, %v1108
      %v1110 = vmul.f32 %v1107, %v1109
      %v1111 = vadd.f32 %v1107, %v1110
      %vm1112 = vweird.f32 %v1066
      %vm1113 = vweird.f32 %v1107
      %vm1114 = vmor %vm1112, %vm1113
      %v1115 = vsel %vm1114, %v1107, %v1111
      %v1116 = vand.u32 2147483647, %v1066
      %vm1117 = vcmp.eq.f32.partialorder %v1116, 8.507059e+37
      %v1118 = vand.u32 %v1066, 2147483648
      %v1119 = vor.u32 1.1754944e-38, %v1118
      %v1120 = vsel %vm1117, %v1119, %v1115
      %v1121 = vrcp.pop %v1069
      %v1122 = vmul.f32 %v1069, %v1121
      %v1123 = vsub.f32 1.0, %v1122
      %v1124 = vmul.f32 %v1121, %v1123
      %v1125 = vadd.f32 %v1121, %v1124
      %vm1126 = vweird.f32 %v1069
      %vm1127 = vweird.f32 %v1121
      %vm1128 = vmor %vm1126, %vm1127
      %v1129 = vsel %vm1128, %v1121, %v1125
      %v1130 = vand.u32 2147483647, %v1069
      %vm1131 = vcmp.eq.f32.partialorder %v1130, 8.507059e+37
      %v1132 = vand.u32 %v1069, 2147483648
      %v1133 = vor.u32 1.1754944e-38, %v1132
      %v1134 = vsel %vm1131, %v1133, %v1129
      %v1135 = vrcp.pop %v1072
      %v1136 = vmul.f32 %v1072, %v1135
      %v1137 = vsub.f32 1.0, %v1136
      %v1138 = vmul.f32 %v1135, %v1137
      %v1139 = vadd.f32 %v1135, %v1138
      %vm1140 = vweird.f32 %v1072
      %vm1141 = vweird.f32 %v1135
      %vm1142 = vmor %vm1140, %vm1141
      %v1143 = vsel %vm1142, %v1135, %v1139
      %v1144 = vand.u32 2147483647, %v1072
      %vm1145 = vcmp.eq.f32.partialorder %v1144, 8.507059e+37
      %v1146 = vand.u32 %v1072, 2147483648
      %v1147 = vor.u32 1.1754944e-38, %v1146
      %v1148 = vsel %vm1145, %v1147, %v1143
      %v1149 = vmul.f32 %v1099, %v1120
      %v1150 = vmul.f32 %v1101, %v1134
      %v1151 = vmul.f32 %v1104, %v1148
      %1152 = vrot.lane.b32.xlu0 %v714, 80
      %v1153 = vpop.permute.xlu0 %1152
      %1154 = vrot.lane.b32.xlu0 %v715, 80
      %v1155 = vpop.permute.xlu0 %1154
      %1156 = vrot.lane.b32.xlu0 %v716, 16
      %v1157 = vpop.permute.xlu0 %1156
      %1158 = vrot.lane.b32.xlu0 %v717, 16
      %v1159 = vpop.permute.xlu0 %1158
      %v1161 = vsel %vm726, %v1153, 0
      %v1164 = vsel %vm726, %v1155, 0
      %v1167 = vsel %vm726, %v1157, 0
      %v1170 = vsel %vm726, %v1159, 0
      %1172 = vmatpush.bf16.xpose.msra.mxu0 0
      %1173 = vmatpush.bf16.xpose.msra.mxu0 0
      %1174 = vmatpush.bf16.xpose.msra.mxu0 0
      %1175 = vmatpush.bf16.xpose.msra.mxu0 0
      %1176 = vmatpush.bf16.xpose.msra.mxu0 0
      %1177 = vmatpush.bf16.xpose.msra.mxu0 0
      %1178 = vmatpush.bf16.xpose.msra.mxu0 %v1170
      %1179 = vmatpush.bf16.xpose.msra.mxu0 %v1167
      %1180 = vmatmul.bf16.gmra.mxu0 %v1161
      %v1181 = vpop.f32.mrf.mxu0
      %v1182 = vadd.f32 0.0, %v1181
      %v1183 = vpop.f32.mrf.mxu0
      %v1184 = vadd.f32 0.0, %v1183
      %1185 = vmatmul.bf16.gmra.mxu0 %v1164
      %v1186 = vpop.f32.mrf.mxu0
      %v1187 = vadd.f32 0.0, %v1186
      %v1188 = vpop.f32.mrf.mxu0
      %1189 = vdwg.mxu0
      %v1190 = vsel %vm757, %v1182, -inf
      %1191 = vmax.xlane.f32.xlu0 %v1190
      %v1192 = vpop.xlane.xlu0 %1191
      %v1193 = vsel %vm757, %v1184, -inf
      %1194 = vmax.xlane.f32.xlu0 %v1193
      %v1195 = vpop.xlane.xlu0 %1194
      %v1196 = vsel %vm757, %v1187, -inf
      %1197 = vmax.xlane.f32.xlu0 %v1196
      %v1198 = vpop.xlane.xlu0 %1197
      %v1199 = vsub.f32 %v1182, %v1192
      %v1200 = vsub.f32 %v1184, %v1195
      %v1201 = vsub.f32 %v1187, %v1198
      %v1202 = vmul.f32 %v1199, 1.442695
      %v1203 = vpow.pop %v1202
      %v1204 = vmul.f32 %v1200, 1.442695
      %v1205 = vpow.pop %v1204
      %v1206 = vmul.f32 %v1201, 1.442695
      %v1207 = vpow.pop %v1206
      %v1208 = vsel %vm757, %v1203, 0.0
      %1209 = vadd.xlane.f32.xlu0 %v1208
      %v1210 = vpop.xlane.xlu0 %1209
      %v1211 = vsel %vm757, %v1205, 0.0
      %1212 = vadd.xlane.f32.xlu0 %v1211
      %v1213 = vpop.xlane.xlu0 %1212
      %v1214 = vsel %vm757, %v1207, 0.0
      %1215 = vadd.xlane.f32.xlu0 %v1214
      %v1216 = vpop.xlane.xlu0 %1215
      %v1217 = vpack.c.bf16 %v1205, %v1203
      %v1218 = vpack.c.bf16 %v1207, %v1207
      %1219 = vrot.lane.b32.xlu0 %v718, 80
      %v1220 = vpop.permute.xlu0 %1219
      %1221 = vrot.lane.b32.xlu0 %v719, 80
      %v1222 = vpop.permute.xlu0 %1221
      %v1225 = vsel %vm757, %v1217, 0
      %v1228 = vsel %vm757, %v1218, 0
      %v1231 = vsel %vm793, %v1222, 0
      %1233 = vmatpush.bf16.msra.mxu0 0
      %1234 = vmatpush.bf16.msra.mxu0 0
      %1235 = vmatpush.bf16.msra.mxu0 0
      %1236 = vmatpush.bf16.msra.mxu0 0
      %1237 = vmatpush.bf16.msra.mxu0 0
      %1238 = vmatpush.bf16.msra.mxu0 0
      %1239 = vmatpush.bf16.msra.mxu0 %v1231
      %1240 = vmatpush.bf16.msra.mxu0 %v1220
      %1241 = vmatmul.bf16.gmra.mxu0 %v1225
      %v1242 = vpop.f32.mrf.mxu0
      %v1243 = vadd.f32 0.0, %v1242
      %v1244 = vpop.f32.mrf.mxu0
      %v1245 = vadd.f32 0.0, %v1244
      %1246 = vmatmul.bf16.gmra.mxu0 %v1228
      %v1247 = vpop.f32.mrf.mxu0
      %v1248 = vadd.f32 0.0, %v1247
      %v1249 = vpop.f32.mrf.mxu0
      %1250 = vdwg.mxu0
      %v1251 = vrcp.pop %v1210
      %v1252 = vmul.f32 %v1210, %v1251
      %v1253 = vsub.f32 1.0, %v1252
      %v1254 = vmul.f32 %v1251, %v1253
      %v1255 = vadd.f32 %v1251, %v1254
      %vm1256 = vweird.f32 %v1210
      %vm1257 = vweird.f32 %v1251
      %vm1258 = vmor %vm1256, %vm1257
      %v1259 = vsel %vm1258, %v1251, %v1255
      %v1260 = vand.u32 2147483647, %v1210
      %vm1261 = vcmp.eq.f32.partialorder %v1260, 8.507059e+37
      %v1262 = vand.u32 %v1210, 2147483648
      %v1263 = vor.u32 1.1754944e-38, %v1262
      %v1264 = vsel %vm1261, %v1263, %v1259
      %v1265 = vrcp.pop %v1213
      %v1266 = vmul.f32 %v1213, %v1265
      %v1267 = vsub.f32 1.0, %v1266
      %v1268 = vmul.f32 %v1265, %v1267
      %v1269 = vadd.f32 %v1265, %v1268
      %vm1270 = vweird.f32 %v1213
      %vm1271 = vweird.f32 %v1265
      %vm1272 = vmor %vm1270, %vm1271
      %v1273 = vsel %vm1272, %v1265, %v1269
      %v1274 = vand.u32 2147483647, %v1213
      %vm1275 = vcmp.eq.f32.partialorder %v1274, 8.507059e+37
      %v1276 = vand.u32 %v1213, 2147483648
      %v1277 = vor.u32 1.1754944e-38, %v1276
      %v1278 = vsel %vm1275, %v1277, %v1273
      %v1279 = vrcp.pop %v1216
      %v1280 = vmul.f32 %v1216, %v1279
      %v1281 = vsub.f32 1.0, %v1280
      %v1282 = vmul.f32 %v1279, %v1281
      %v1283 = vadd.f32 %v1279, %v1282
      %vm1284 = vweird.f32 %v1216
      %vm1285 = vweird.f32 %v1279
      %vm1286 = vmor %vm1284, %vm1285
      %v1287 = vsel %vm1286, %v1279, %v1283
      %v1288 = vand.u32 2147483647, %v1216
      %vm1289 = vcmp.eq.f32.partialorder %v1288, 8.507059e+37
      %v1290 = vand.u32 %v1216, 2147483648
      %v1291 = vor.u32 1.1754944e-38, %v1290
      %v1292 = vsel %vm1289, %v1291, %v1287
      %v1293 = vmul.f32 %v1243, %v1264
      %v1294 = vmul.f32 %v1245, %v1278
      %v1295 = vmul.f32 %v1248, %v1292
      %1299 = vrot.lane.b32.xlu0 %v1005, 16
      %v1300 = vpop.permute.xlu0 %1299
      %1301 = vrot.lane.b32.xlu0 %v1006, 16
      %v1302 = vpop.permute.xlu0 %1301
      %1303 = vrot.lane.b32.xlu0 %v1007, 16
      %v1304 = vpop.permute.xlu0 %1303
      %1311 = vrot.lane.b32.xlu0 %v1149, 32
      %v1312 = vpop.permute.xlu0 %1311
      %1313 = vrot.lane.b32.xlu0 %v1150, 32
      %v1314 = vpop.permute.xlu0 %1313
      %1315 = vrot.lane.b32.xlu0 %v1151, 32
      %v1316 = vpop.permute.xlu0 %1315
      %1323 = vrot.lane.b32.xlu0 %v1293, 48
      %v1324 = vpop.permute.xlu0 %1323
      %1325 = vrot.lane.b32.xlu0 %v1294, 48
      %v1326 = vpop.permute.xlu0 %1325
      %1327 = vrot.lane.b32.xlu0 %v1295, 48
      %v1328 = vpop.permute.xlu0 %1327
      %v1332 = vsel %vm726, %v857, %v1300
      %v1333 = vsel %vm726, %v858, %v1302
      %v1334 = vsel %vm726, %v859, %v1304
      %v1335 = vsel %vm474, %v1332, %v1312
      %v1336 = vsel %vm474, %v1333, %v1314
      %v1337 = vsel %vm474, %v1334, %v1316
      %vm1338 = vcmask 392192
      %v1339 = vsel %vm1338, %v1335, %v1324
      %v1340 = vsel %vm1338, %v1336, %v1326
      %v1341 = vsel %vm1338, %v1337, %v1328
      %v1342 = vld [vmem:[%s8] sm:$0xf]
      %v1343 = vld [vmem:[%s8 + $0x4] sm:$0xf]
      %v1344 = vld [vmem:[%s8 + $0x8] sm:$0xf]
      %v1345 = vld [vmem:[%s8 + $0xc] sm:$0xf]
      %v1346 = vld [vmem:[%s8 + $0x10] sm:$0xf]
      %v1347 = vld [vmem:[%s8 + $0x14] sm:$0xf]
      %v1348 = vld [vmem:[%s8 + $0x18] sm:$0xf]
      %v1349 = vld [vmem:[%s8 + $0x1c] sm:$0xf]
      %v1350 = vpack.c.bf16 %v1339, %v1339
      %v1359 = vunpack.c.l.b16 %v1342
      %v1360 = vunpack.c.l.b16 %v1343
      %v1361 = vunpack.c.l.b16 %v1344
      %v1362 = vunpack.c.l.b16 %v1345
      %v1363 = vunpack.c.l.b16 %v1346
      %v1364 = vunpack.c.l.b16 %v1347
      %v1365 = vunpack.c.l.b16 %v1348
      %v1366 = vunpack.c.l.b16 %v1349
      %v1367 = vpack.c.b16 %v1360, %v1359
      %v1368 = vpack.c.b16 %v1362, %v1361
      %v1369 = vpack.c.b16 %v1364, %v1363
      %v1370 = vpack.c.b16 %v1366, %v1365
      %v1376 = vsel %vm569, %v1350, 0
      %1378 = vmatpush.bf16.msra.mxu0 0
      %1379 = vmatpush.bf16.msra.mxu0 0
      %1380 = vmatpush.bf16.msra.mxu0 0
      %1381 = vmatpush.bf16.msra.mxu0 0
      %1382 = vmatpush.bf16.msra.mxu0 %v1370
      %1383 = vmatpush.bf16.msra.mxu0 %v1369
      %1384 = vmatpush.bf16.msra.mxu0 %v1368
      %1385 = vmatpush.bf16.msra.mxu0 %v1367
      %1386 = vmatmul.bf16.gmra.mxu0 %v1376
      %v1387 = vpop.f32.mrf.mxu0
      %v1388 = vadd.f32 0.0, %v1387
      %v1389 = vpop.f32.mrf.mxu0
      %1390 = vdwg.mxu0
      %v1391 = vld [vmem:[%s458] sm:$0x1]
      %v1393 = vperm.slane %v1391, 0
      %v1395 = vmul.f32 %v1388, %v1393
      %v1396 = vadd.f32 %v1395, %v472
      %1397 = vst.msk [vmem:[%s465] sm:$0xff] %vm474, %v1396
      %v1398 = vld [vmem:[%s9] sm:$0xf]
      %v1399 = vld [vmem:[%s9 + $0x4] sm:$0xf]
      %v1400 = vld [vmem:[%s9 + $0x8] sm:$0xf]
      %v1401 = vld [vmem:[%s9 + $0xc] sm:$0xf]
      %v1402 = vld [vmem:[%s9 + $0x10] sm:$0xf]
      %v1403 = vld [vmem:[%s9 + $0x14] sm:$0xf]
      %v1404 = vld [vmem:[%s9 + $0x18] sm:$0xf]
      %v1405 = vld [vmem:[%s9 + $0x1c] sm:$0xf]
      %v1406 = vpack.c.bf16 %v1341, %v1340
      %v1415 = vunpack.c.l.b16 %v1398
      %v1416 = vunpack.c.l.b16 %v1399
      %v1417 = vunpack.c.l.b16 %v1400
      %v1418 = vunpack.c.l.b16 %v1401
      %v1419 = vunpack.c.l.b16 %v1402
      %v1420 = vunpack.c.l.b16 %v1403
      %v1421 = vunpack.c.l.b16 %v1404
      %v1422 = vunpack.c.l.b16 %v1405
      %v1423 = vpack.c.b16 %v1416, %v1415
      %v1424 = vpack.c.b16 %v1418, %v1417
      %v1425 = vpack.c.b16 %v1420, %v1419
      %v1426 = vpack.c.b16 %v1422, %v1421
      %v1432 = vsel %vm569, %v1406, 0
      %1434 = vmatpush.bf16.msra.mxu0 0
      %1435 = vmatpush.bf16.msra.mxu0 0
      %1436 = vmatpush.bf16.msra.mxu0 0
      %1437 = vmatpush.bf16.msra.mxu0 0
      %1438 = vmatpush.bf16.msra.mxu0 %v1426
      %1439 = vmatpush.bf16.msra.mxu0 %v1425
      %1440 = vmatpush.bf16.msra.mxu0 %v1424
      %1441 = vmatpush.bf16.msra.mxu0 %v1423
      %1442 = vmatmul.bf16.gmra.mxu0 %v1432
      %v1443 = vpop.f32.mrf.mxu0
      %v1444 = vadd.f32 0.0, %v1443
      %v1445 = vpop.f32.mrf.mxu0
      %v1446 = vadd.f32 0.0, %v1445
      %1447 = vdwg.mxu0
      %v1448 = vld [vmem:[%s461] sm:$0x1]
      %v1450 = vperm.slane %v1448, 0
      %v1452 = vmul.f32 %v1444, %v1450
      %v1453 = vmul.f32 %v1446, %v1450
      %v1454 = vld [vmem:[%s449] sm:$0xff]
      %v1455 = vld [vmem:[%s449 + $0x8] sm:$0xff]
      %v1456 = vadd.f32 %v1452, %v1454
      %v1457 = vadd.f32 %v1453, %v1455
      %1458 = vst.msk [vmem:[%s470] sm:$0xff] %vm569, %v1456
      %1459 = vst.msk [vmem:[%s470 + $0x8] sm:$0xff] %vm569, %v1457
      %p1460 = scmp.lt.s32.totalorder %s23, 1
      %s1461 = scalar_select %p1460, %s23, 1
      %s1462 = smul.addr %s1461, 8
      %s1463 = scalar_lea.vmem %s10, %s1462
      %p1464 = scmp.lt.s32.totalorder %s23, 1
      %s1465 = scalar_select %p1464, %s23, 1
      %s1466 = smul.addr %s1465, 2
      %s1467 = smul.addr %s1466, 8
      %s1468 = scalar_lea.vmem %s11, %s1467
      // Predicated region
      $region61: #{mmdit_forward.11} parent=59 // pred_check
        %p1469 = pneg %p281
      $region62: #{mmdit_forward.11} parent=59 // pred_check_branch
        %1471 = sbr.rel (%p1469) target = $region64
      $region63: #{mmdit_forward.11} parent=59 // pred_region
        _
      $region64: #{mmdit_forward.11} parent=59 // pred_fallthru
        _
      // Predicated region
      $region65: #{mmdit_forward.11} parent=59 // pred_check
        %p1472 = pneg %p307
      $region66: #{mmdit_forward.11} parent=59 // pred_check_branch
        %1474 = sbr.rel (%p1472) target = $region68
      $region67: #{mmdit_forward.11} parent=59 // pred_region
        _
      $region68: #{mmdit_forward.11} parent=59 // pred_fallthru
        _
    $region60: #{mmdit_forward.11} parent=5 // pred_fallthru
      _
    %p1475 = scmp.le.s32.totalorder 2, %s18
    // Predicated region
    $region69: #{mmdit_forward.11} parent=5 // pred_check
      %p1476 = pneg %p1475
    $region70: #{mmdit_forward.11} parent=5 // pred_check_branch
      %1478 = sbr.rel (%p1476) target = $region72
    $region71: #{mmdit_forward.11} parent=5 // pred_region
      %s1479 = ssub.s32 %s18, 2
      // Predicated region
      $region73: #{mmdit_forward.11} parent=71 // pred_check
        %p1480 = pneg %p287
      $region74: #{mmdit_forward.11} parent=71 // pred_check_branch
        %1482 = sbr.rel (%p1480) target = $region76
      $region75: #{mmdit_forward.11} parent=71 // pred_region
        %p1483 = scmp.lt.s32.totalorder %s24, 1
        %s1484 = scalar_select %p1483, %s24, 1
        %s1485 = smul.addr %s1484, 8
        %s1486 = scalar_lea.vmem %s10, %s1485
      $region76: #{mmdit_forward.11} parent=71 // pred_fallthru
        _
      // Predicated region
      $region77: #{mmdit_forward.11} parent=71 // pred_check
        %p1487 = pneg %p313
      $region78: #{mmdit_forward.11} parent=71 // pred_check_branch
        %1489 = sbr.rel (%p1487) target = $region80
      $region79: #{mmdit_forward.11} parent=71 // pred_region
        %p1490 = scmp.lt.s32.totalorder %s24, 1
        %s1491 = scalar_select %p1490, %s24, 1
        %s1492 = smul.addr %s1491, 2
        %s1493 = smul.addr %s1492, 8
        %s1494 = scalar_lea.vmem %s11, %s1493
      $region80: #{mmdit_forward.11} parent=71 // pred_fallthru
        _
    $region72: #{mmdit_forward.11} parent=5 // pred_fallthru
      _
  $region6: #{mmdit_forward.11} parent=0 // loop_footer
    %s22 = sadd.s32 1, %s18
  $region7: #{mmdit_forward.11} parent=0 // loop_footer_branch
    %17 = sbr.rel target = $region3
  $region8: #{mmdit_forward.11} parent=0 // loop_exit
    _

// kernel: mmdit_forward.8
$region0: #{mmdit_forward.8}
  #allocation0 [shape = 'u32[]', space=smem, size = 0x4, offset = 0x4, fixed_abs, tag = 'smem constant byte address 0x4 - core index']
  #allocation1 [shape = 'u32[72,128]{1,0:T(1,128)}', space=vmem, size = 0x9000, scoped, tag = 'internal scratch']
  %s0 = inlined_call_operand.vmem [shape: f32[2,8,32], index: 0, kind: input, shape index: {}]
  %s1 = inlined_call_operand.vmem [shape: f32[2,16,64], index: 1, kind: input, shape index: {}]
  %s2 = inlined_call_operand.vmem [shape: f32[2,1,64], index: 2, kind: input, shape index: {}]
  %s3 = inlined_call_operand.vmem [shape: f32[2,1,128], index: 3, kind: input, shape index: {}]
  %s4 = inlined_call_operand.vmem [shape: f32[2,1,32], index: 4, kind: input, shape index: {}]
  %s5 = inlined_call_operand.vmem [shape: f32[2,1,64], index: 5, kind: input, shape index: {}]
  %s6 = inlined_call_operand.vmem [shape: bf16[32,192], index: 6, kind: input, shape index: {}]
  %s7 = inlined_call_operand.hbm [shape: bf16[64,192], index: 7, kind: input, shape index: {}]
  %s8 = inlined_call_operand.vmem [shape: bf16[64,32], index: 8, kind: input, shape index: {}]
  %s9 = inlined_call_operand.hbm [shape: bf16[64,64], index: 9, kind: input, shape index: {}]
  %s10 = inlined_call_operand.vmem [shape: f32[2,8,32], index: 10, kind: output, shape index: {0}]
  %s11 = inlined_call_operand.vmem [shape: f32[2,16,64], index: 11, kind: output, shape index: {1}]
  %12 = xla_tuple %s10, %s11
  %s13 = sld [smem:[#allocation0]]
  $region89: #{mmdit_forward.8} parent=0
    _
  %s15 = ssub.s32 1, %s13
  %s16 = scalar_select 0, %s15, %s13
  $region1: #{mmdit_forward.8} parent=0
    #allocation2 [shape = 'u8[32768]{0}', space=vmem, size = 0x8000, scoped, tag = 'input window, operand 7, single buffered']
    #allocation3 [shape = 's32[2]{0}', space=sflag, size = 0x8, scoped, tag = 'scoped memory for mmdit_forward.8']
    #allocation4 [shape = 'u8[16384]{0}', space=vmem, size = 0x4000, scoped, tag = 'input window, operand 9, single buffered']
    #allocation5 [shape = 's32[1]{0}', space=sflag, size = 0x4, scoped, tag = 'scoped memory for mmdit_forward.8']
    %17 = vsyncpa [#allocation3], 0
    %18 = vsyncpa [#allocation5], 0
    loop: start=0, step=1, limit=4
    $region2: #{mmdit_forward.8} parent=1 // loop_pre_header
      _
    $region3: #{mmdit_forward.8} parent=1 // loop_header
      %s20 = sphi 0, %s24
      %p21 = scmp.ge.s32.totalorder %s20, 4
      %s30 = sphi 0, %s32
      %s33 = sphi 0, %s30
      %s34 = sphi 0, %s33
      %s50 = sphi 0, %s34
      %s56 = sphi 0, %s58
      %s59 = sphi 0, %s56
      %s60 = sphi 0, %s59
      %s76 = sphi 0, %s60
      %s82 = sphi 0, %s84
      %s85 = sphi 0, %s82
      %s86 = sphi 0, %s85
      %s102 = sphi 0, %s86
      %s108 = sphi 0, %s110
      %s111 = sphi 0, %s108
      %s112 = sphi 0, %s111
      %s128 = sphi 0, %s112
      %s134 = sphi 0, %s136
      %s137 = sphi 0, %s134
      %s138 = sphi 0, %s137
      %s154 = sphi 0, %s138
      %s160 = sphi 0, %s162
      %s163 = sphi 0, %s160
      %s164 = sphi 0, %s163
      %s180 = sphi 0, %s164
      %s184 = sphi 0, %s184
      %s186 = sphi 0, %s184
      %s187 = sphi 0, %s186
      %s201 = sphi 0, %s187
      %s205 = sphi 0, %s205
      %s207 = sphi 0, %s205
      %s208 = sphi 0, %s207
      %s222 = sphi 0, %s208
      %s226 = sphi 0, %s226
      %s228 = sphi 0, %s226
      %s229 = sphi 0, %s228
      %s243 = sphi 0, %s229
      %s247 = sphi 0, %s247
      %s249 = sphi 0, %s247
      %s250 = sphi 0, %s249
      %s264 = sphi 0, %s250
      %s270 = sphi 0, %s272
      %s273 = sphi 0, %s270
      %s274 = sphi 0, %s273
      %s290 = sphi 0, %s274
      %s296 = sphi 0, %s298
      %s299 = sphi 0, %s296
      %s300 = sphi 0, %s299
      %s316 = sphi 0, %s300
    $region4: #{mmdit_forward.8} parent=1 // loop_header_branch
      %23 = sbr.rel (%p21) target = $region8
    $region5: #{mmdit_forward.8} parent=1 // loop_body
      %s25 = ssub.s32 %s20, 1
      %s26 = ssub.s32 %s20, 2
      %s27 = sadd.s32 %s20, 1
      %s28 = ssub.s32 %s20, %s27
      %p29 = scmp.eq.s32.totalorder %s28, 0
      %s31 = sadd.s32 %s30, 1
      %s32 = scalar_select %p29, %s30, %s31
      %p35 = pneg %p29
      %p36 = scmp.eq.s32.totalorder %s20, 1
      %p37 = por %p35, %p36
      %p38 = scmp.ne.s32.totalorder %s30, %s33
      %p39 = scmp.eq.s32.totalorder %s20, 0
      %p40 = por %p38, %p39
      %p41 = scmp.ne.s32.totalorder %s30, %s33
      %p42 = scmp.eq.s32.totalorder %s25, 1
      %p43 = por %p41, %p42
      %p44 = scmp.ne.s32.totalorder %s33, %s34
      %p45 = scmp.eq.s32.totalorder %s25, 0
      %p46 = por %p44, %p45
      %p47 = scmp.ne.s32.totalorder %s33, %s34
      %p48 = scmp.eq.s32.totalorder %s26, 1
      %p49 = por %p47, %p48
      %p51 = scmp.ne.s32.totalorder %s34, %s50
      %p52 = scmp.eq.s32.totalorder %s26, 0
      %p53 = por %p51, %p52
      %s54 = ssub.s32 %s20, %s27
      %p55 = scmp.eq.s32.totalorder %s54, 0
      %s57 = sadd.s32 %s56, 1
      %s58 = scalar_select %p55, %s56, %s57
      %p61 = pneg %p55
      %p62 = scmp.eq.s32.totalorder %s20, 1
      %p63 = por %p61, %p62
      %p64 = scmp.ne.s32.totalorder %s56, %s59
      %p65 = scmp.eq.s32.totalorder %s20, 0
      %p66 = por %p64, %p65
      %p67 = scmp.ne.s32.totalorder %s56, %s59
      %p68 = scmp.eq.s32.totalorder %s25, 1
      %p69 = por %p67, %p68
      %p70 = scmp.ne.s32.totalorder %s59, %s60
      %p71 = scmp.eq.s32.totalorder %s25, 0
      %p72 = por %p70, %p71
      %p73 = scmp.ne.s32.totalorder %s59, %s60
      %p74 = scmp.eq.s32.totalorder %s26, 1
      %p75 = por %p73, %p74
      %p77 = scmp.ne.s32.totalorder %s60, %s76
      %p78 = scmp.eq.s32.totalorder %s26, 0
      %p79 = por %p77, %p78
      %s80 = ssub.s32 %s20, %s27
      %p81 = scmp.eq.s32.totalorder %s80, 0
      %s83 = sadd.s32 %s82, 1
      %s84 = scalar_select %p81, %s82, %s83
      %p87 = pneg %p81
      %p88 = scmp.eq.s32.totalorder %s20, 1
      %p89 = por %p87, %p88
      %p90 = scmp.ne.s32.totalorder %s82, %s85
      %p91 = scmp.eq.s32.totalorder %s20, 0
      %p92 = por %p90, %p91
      %p93 = scmp.ne.s32.totalorder %s82, %s85
      %p94 = scmp.eq.s32.totalorder %s25, 1
      %p95 = por %p93, %p94
      %p96 = scmp.ne.s32.totalorder %s85, %s86
      %p97 = scmp.eq.s32.totalorder %s25, 0
      %p98 = por %p96, %p97
      %p99 = scmp.ne.s32.totalorder %s85, %s86
      %p100 = scmp.eq.s32.totalorder %s26, 1
      %p101 = por %p99, %p100
      %p103 = scmp.ne.s32.totalorder %s86, %s102
      %p104 = scmp.eq.s32.totalorder %s26, 0
      %p105 = por %p103, %p104
      %s106 = ssub.s32 %s20, %s27
      %p107 = scmp.eq.s32.totalorder %s106, 0
      %s109 = sadd.s32 %s108, 1
      %s110 = scalar_select %p107, %s108, %s109
      %p113 = pneg %p107
      %p114 = scmp.eq.s32.totalorder %s20, 1
      %p115 = por %p113, %p114
      %p116 = scmp.ne.s32.totalorder %s108, %s111
      %p117 = scmp.eq.s32.totalorder %s20, 0
      %p118 = por %p116, %p117
      %p119 = scmp.ne.s32.totalorder %s108, %s111
      %p120 = scmp.eq.s32.totalorder %s25, 1
      %p121 = por %p119, %p120
      %p122 = scmp.ne.s32.totalorder %s111, %s112
      %p123 = scmp.eq.s32.totalorder %s25, 0
      %p124 = por %p122, %p123
      %p125 = scmp.ne.s32.totalorder %s111, %s112
      %p126 = scmp.eq.s32.totalorder %s26, 1
      %p127 = por %p125, %p126
      %p129 = scmp.ne.s32.totalorder %s112, %s128
      %p130 = scmp.eq.s32.totalorder %s26, 0
      %p131 = por %p129, %p130
      %s132 = ssub.s32 %s20, %s27
      %p133 = scmp.eq.s32.totalorder %s132, 0
      %s135 = sadd.s32 %s134, 1
      %s136 = scalar_select %p133, %s134, %s135
      %p139 = pneg %p133
      %p140 = scmp.eq.s32.totalorder %s20, 1
      %p141 = por %p139, %p140
      %p142 = scmp.ne.s32.totalorder %s134, %s137
      %p143 = scmp.eq.s32.totalorder %s20, 0
      %p144 = por %p142, %p143
      %p145 = scmp.ne.s32.totalorder %s134, %s137
      %p146 = scmp.eq.s32.totalorder %s25, 1
      %p147 = por %p145, %p146
      %p148 = scmp.ne.s32.totalorder %s137, %s138
      %p149 = scmp.eq.s32.totalorder %s25, 0
      %p150 = por %p148, %p149
      %p151 = scmp.ne.s32.totalorder %s137, %s138
      %p152 = scmp.eq.s32.totalorder %s26, 1
      %p153 = por %p151, %p152
      %p155 = scmp.ne.s32.totalorder %s138, %s154
      %p156 = scmp.eq.s32.totalorder %s26, 0
      %p157 = por %p155, %p156
      %s158 = ssub.s32 %s20, %s27
      %p159 = scmp.eq.s32.totalorder %s158, 0
      %s161 = sadd.s32 %s160, 1
      %s162 = scalar_select %p159, %s160, %s161
      %p165 = pneg %p159
      %p166 = scmp.eq.s32.totalorder %s20, 1
      %p167 = por %p165, %p166
      %p168 = scmp.ne.s32.totalorder %s160, %s163
      %p169 = scmp.eq.s32.totalorder %s20, 0
      %p170 = por %p168, %p169
      %p171 = scmp.ne.s32.totalorder %s160, %s163
      %p172 = scmp.eq.s32.totalorder %s25, 1
      %p173 = por %p171, %p172
      %p174 = scmp.ne.s32.totalorder %s163, %s164
      %p175 = scmp.eq.s32.totalorder %s25, 0
      %p176 = por %p174, %p175
      %p177 = scmp.ne.s32.totalorder %s163, %s164
      %p178 = scmp.eq.s32.totalorder %s26, 1
      %p179 = por %p177, %p178
      %p181 = scmp.ne.s32.totalorder %s164, %s180
      %p182 = scmp.eq.s32.totalorder %s26, 0
      %p183 = por %p181, %p182
      %s185 = sadd.s32 %s184, 1
      %p188 = scmp.eq.s32.totalorder %s20, 1
      %p189 = scmp.ne.s32.totalorder %s184, %s186
      %p190 = scmp.eq.s32.totalorder %s20, 0
      %p191 = por %p189, %p190
      %p192 = scmp.ne.s32.totalorder %s184, %s186
      %p193 = scmp.eq.s32.totalorder %s25, 1
      %p194 = por %p192, %p193
      %p195 = scmp.ne.s32.totalorder %s186, %s187
      %p196 = scmp.eq.s32.totalorder %s25, 0
      %p197 = por %p195, %p196
      %p198 = scmp.ne.s32.totalorder %s186, %s187
      %p199 = scmp.eq.s32.totalorder %s26, 1
      %p200 = por %p198, %p199
      %p202 = scmp.ne.s32.totalorder %s187, %s201
      %p203 = scmp.eq.s32.totalorder %s26, 0
      %p204 = por %p202, %p203
      %s206 = sadd.s32 %s205, 1
      %p209 = scmp.eq.s32.totalorder %s20, 1
      %p210 = scmp.ne.s32.totalorder %s205, %s207
      %p211 = scmp.eq.s32.totalorder %s20, 0
      %p212 = por %p210, %p211
      %p213 = scmp.ne.s32.totalorder %s205, %s207
      %p214 = scmp.eq.s32.totalorder %s25, 1
      %p215 = por %p213, %p214
      %p216 = scmp.ne.s32.totalorder %s207, %s208
      %p217 = scmp.eq.s32.totalorder %s25, 0
      %p218 = por %p216, %p217
      %p219 = scmp.ne.s32.totalorder %s207, %s208
      %p220 = scmp.eq.s32.totalorder %s26, 1
      %p221 = por %p219, %p220
      %p223 = scmp.ne.s32.totalorder %s208, %s222
      %p224 = scmp.eq.s32.totalorder %s26, 0
      %p225 = por %p223, %p224
      %s227 = sadd.s32 %s226, 1
      %p230 = scmp.eq.s32.totalorder %s20, 1
      %p231 = scmp.ne.s32.totalorder %s226, %s228
      %p232 = scmp.eq.s32.totalorder %s20, 0
      %p233 = por %p231, %p232
      %p234 = scmp.ne.s32.totalorder %s226, %s228
      %p235 = scmp.eq.s32.totalorder %s25, 1
      %p236 = por %p234, %p235
      %p237 = scmp.ne.s32.totalorder %s228, %s229
      %p238 = scmp.eq.s32.totalorder %s25, 0
      %p239 = por %p237, %p238
      %p240 = scmp.ne.s32.totalorder %s228, %s229
      %p241 = scmp.eq.s32.totalorder %s26, 1
      %p242 = por %p240, %p241
      %p244 = scmp.ne.s32.totalorder %s229, %s243
      %p245 = scmp.eq.s32.totalorder %s26, 0
      %p246 = por %p244, %p245
      %s248 = sadd.s32 %s247, 1
      %p251 = scmp.eq.s32.totalorder %s20, 1
      %p252 = scmp.ne.s32.totalorder %s247, %s249
      %p253 = scmp.eq.s32.totalorder %s20, 0
      %p254 = por %p252, %p253
      %p255 = scmp.ne.s32.totalorder %s247, %s249
      %p256 = scmp.eq.s32.totalorder %s25, 1
      %p257 = por %p255, %p256
      %p258 = scmp.ne.s32.totalorder %s249, %s250
      %p259 = scmp.eq.s32.totalorder %s25, 0
      %p260 = por %p258, %p259
      %p261 = scmp.ne.s32.totalorder %s249, %s250
      %p262 = scmp.eq.s32.totalorder %s26, 1
      %p263 = por %p261, %p262
      %p265 = scmp.ne.s32.totalorder %s250, %s264
      %p266 = scmp.eq.s32.totalorder %s26, 0
      %p267 = por %p265, %p266
      %s268 = ssub.s32 %s20, %s27
      %p269 = scmp.eq.s32.totalorder %s268, 0
      %s271 = sadd.s32 %s270, 1
      %s272 = scalar_select %p269, %s270, %s271
      %p275 = pneg %p269
      %p276 = scmp.eq.s32.totalorder %s20, 1
      %p277 = por %p275, %p276
      %p278 = scmp.ne.s32.totalorder %s270, %s273
      %p279 = scmp.eq.s32.totalorder %s20, 0
      %p280 = por %p278, %p279
      %p281 = scmp.ne.s32.totalorder %s270, %s273
      %p282 = scmp.eq.s32.totalorder %s25, 1
      %p283 = por %p281, %p282
      %p284 = scmp.ne.s32.totalorder %s273, %s274
      %p285 = scmp.eq.s32.totalorder %s25, 0
      %p286 = por %p284, %p285
      %p287 = scmp.ne.s32.totalorder %s273, %s274
      %p288 = scmp.eq.s32.totalorder %s26, 1
      %p289 = por %p287, %p288
      %p291 = scmp.ne.s32.totalorder %s274, %s290
      %p292 = scmp.eq.s32.totalorder %s26, 0
      %p293 = por %p291, %p292
      %s294 = ssub.s32 %s20, %s27
      %p295 = scmp.eq.s32.totalorder %s294, 0
      %s297 = sadd.s32 %s296, 1
      %s298 = scalar_select %p295, %s296, %s297
      %p301 = pneg %p295
      %p302 = scmp.eq.s32.totalorder %s20, 1
      %p303 = por %p301, %p302
      %p304 = scmp.ne.s32.totalorder %s296, %s299
      %p305 = scmp.eq.s32.totalorder %s20, 0
      %p306 = por %p304, %p305
      %p307 = scmp.ne.s32.totalorder %s296, %s299
      %p308 = scmp.eq.s32.totalorder %s25, 1
      %p309 = por %p307, %p308
      %p310 = scmp.ne.s32.totalorder %s299, %s300
      %p311 = scmp.eq.s32.totalorder %s25, 0
      %p312 = por %p310, %p311
      %p313 = scmp.ne.s32.totalorder %s299, %s300
      %p314 = scmp.eq.s32.totalorder %s26, 1
      %p315 = por %p313, %p314
      %p317 = scmp.ne.s32.totalorder %s300, %s316
      %p318 = scmp.eq.s32.totalorder %s26, 0
      %p319 = por %p317, %p318
      %p320 = scmp.le.s32.totalorder 1, %s20
      %p321 = scmp.lt.s32.totalorder %s20, 3
      %p322 = pnand %p320, %p321
      %p323 = pneg %p322
      // Predicated region
      $region9: #{mmdit_forward.8} parent=5 // pred_check
        _
      $region10: #{mmdit_forward.8} parent=5 // pred_check_branch
        %325 = sbr.rel (%p322) target = $region12
      $region11: #{mmdit_forward.8} parent=5 // pred_region
        %s326 = ssub.s32 %s20, 1
        // Predicated region
        $region13: #{mmdit_forward.8} parent=11 // pred_check
          %p327 = pneg %p197
        $region14: #{mmdit_forward.8} parent=11 // pred_check_branch
          %329 = sbr.rel (%p327) target = $region16
        $region15: #{mmdit_forward.8} parent=11 // pred_region
          _
        $region16: #{mmdit_forward.8} parent=11 // pred_fallthru
          _
        // Predicated region
        $region17: #{mmdit_forward.8} parent=11 // pred_check
          %p330 = pneg %p218
        $region18: #{mmdit_forward.8} parent=11 // pred_check_branch
          %332 = sbr.rel (%p330) target = $region20
        $region19: #{mmdit_forward.8} parent=11 // pred_region
          %334 = vsyncadd [#allocation3], 0
          %s335 = sshll.u32 %s7, 4
          %s336 = int_to_ptr.hbm [resolvable:$true] %s335
          %s337 = sshll.u32 [#allocation2], 4
          %s338 = int_to_ptr.vmem [resolvable:$true] %s337
          %343 = dma.hbm_to_vmem [thread:$0]  %s336, 1024, %s338, [#allocation3], 128, 128, 8
        $region20: #{mmdit_forward.8} parent=11 // pred_fallthru
          _
        // Predicated region
        $region21: #{mmdit_forward.8} parent=11 // pred_check
          %p344 = pneg %p239
        $region22: #{mmdit_forward.8} parent=11 // pred_check_branch
          %346 = sbr.rel (%p344) target = $region24
        $region23: #{mmdit_forward.8} parent=11 // pred_region
          _
        $region24: #{mmdit_forward.8} parent=11 // pred_fallthru
          _
        // Predicated region
        $region25: #{mmdit_forward.8} parent=11 // pred_check
          %p347 = pneg %p260
        $region26: #{mmdit_forward.8} parent=11 // pred_check_branch
          %349 = sbr.rel (%p347) target = $region28
        $region27: #{mmdit_forward.8} parent=11 // pred_region
          %351 = vsyncadd [#allocation5], 0
          %s352 = sshll.u32 %s9, 4
          %s353 = int_to_ptr.hbm [resolvable:$true] %s352
          %s354 = sshll.u32 [#allocation4], 4
          %s355 = int_to_ptr.vmem [resolvable:$true] %s354
          %360 = dma.hbm_to_vmem [thread:$0]  %s353, 512, %s355, [#allocation5], 64, 64, 4
        $region28: #{mmdit_forward.8} parent=11 // pred_fallthru
          _
      $region12: #{mmdit_forward.8} parent=5 // pred_fallthru
        _
      %p361 = scmp.lt.s32.totalorder %s20, 2
      // Predicated region
      $region29: #{mmdit_forward.8} parent=5 // pred_check
        %p362 = pneg %p361
      $region30: #{mmdit_forward.8} parent=5 // pred_check_branch
        %364 = sbr.rel (%p362) target = $region32
      $region31: #{mmdit_forward.8} parent=5 // pred_region
        // Predicated region
        $region33: #{mmdit_forward.8} parent=31 // pred_check
          %p365 = pneg %p40
        $region34: #{mmdit_forward.8} parent=31 // pred_check_branch
          %367 = sbr.rel (%p365) target = $region36
        $region35: #{mmdit_forward.8} parent=31 // pred_region
          %p368 = scmp.lt.s32.totalorder %s20, 1
          %s369 = scalar_select %p368, %s20, 1
          %s370 = smul.addr %s369, 8
          %s371 = scalar_lea.vmem %s0, %s370
        $region36: #{mmdit_forward.8} parent=31 // pred_fallthru
          _
        // Predicated region
        $region37: #{mmdit_forward.8} parent=31 // pred_check
          %p372 = pneg %p66
        $region38: #{mmdit_forward.8} parent=31 // pred_check_branch
          %374 = sbr.rel (%p372) target = $region40
        $region39: #{mmdit_forward.8} parent=31 // pred_region
          %p375 = scmp.lt.s32.totalorder %s20, 1
          %s376 = scalar_select %p375, %s20, 1
          %s377 = smul.addr %s376, 2
          %s378 = smul.addr %s377, 8
          %s379 = scalar_lea.vmem %s1, %s378
        $region40: #{mmdit_forward.8} parent=31 // pred_fallthru
          _
        // Predicated region
        $region41: #{mmdit_forward.8} parent=31 // pred_check
          %p380 = pneg %p92
        $region42: #{mmdit_forward.8} parent=31 // pred_check_branch
          %382 = sbr.rel (%p380) target = $region44
        $region43: #{mmdit_forward.8} parent=31 // pred_region
          %p383 = scmp.lt.s32.totalorder %s20, 1
          %s384 = scalar_select %p383, %s20, 1
          %s385 = scalar_lea.vmem %s2, %s384
        $region44: #{mmdit_forward.8} parent=31 // pred_fallthru
          _
        // Predicated region
        $region45: #{mmdit_forward.8} parent=31 // pred_check
          %p386 = pneg %p118
        $region46: #{mmdit_forward.8} parent=31 // pred_check_branch
          %388 = sbr.rel (%p386) target = $region48
        $region47: #{mmdit_forward.8} parent=31 // pred_region
          %p389 = scmp.lt.s32.totalorder %s20, 1
          %s390 = scalar_select %p389, %s20, 1
          %s391 = scalar_lea.vmem %s3, %s390
        $region48: #{mmdit_forward.8} parent=31 // pred_fallthru
          _
        // Predicated region
        $region49: #{mmdit_forward.8} parent=31 // pred_check
          %p392 = pneg %p144
        $region50: #{mmdit_forward.8} parent=31 // pred_check_branch
          %394 = sbr.rel (%p392) target = $region52
        $region51: #{mmdit_forward.8} parent=31 // pred_region
          %p395 = scmp.lt.s32.totalorder %s20, 1
          %s396 = scalar_select %p395, %s20, 1
          %s397 = scalar_lea.vmem %s4, %s396
        $region52: #{mmdit_forward.8} parent=31 // pred_fallthru
          _
        // Predicated region
        $region53: #{mmdit_forward.8} parent=31 // pred_check
          %p398 = pneg %p170
        $region54: #{mmdit_forward.8} parent=31 // pred_check_branch
          %400 = sbr.rel (%p398) target = $region56
        $region55: #{mmdit_forward.8} parent=31 // pred_region
          %p401 = scmp.lt.s32.totalorder %s20, 1
          %s402 = scalar_select %p401, %s20, 1
          %s403 = scalar_lea.vmem %s5, %s402
        $region56: #{mmdit_forward.8} parent=31 // pred_fallthru
          _
      $region32: #{mmdit_forward.8} parent=5 // pred_fallthru
        _
      %p404 = scmp.le.s32.totalorder 1, %s20
      %p405 = scmp.lt.s32.totalorder %s20, 3
      %p406 = pnand %p404, %p405
      %p407 = pneg %p406
      // Predicated region
      $region57: #{mmdit_forward.8} parent=5 // pred_check
        _
      $region58: #{mmdit_forward.8} parent=5 // pred_check_branch
        %409 = sbr.rel (%p406) target = $region60
      $region59: #{mmdit_forward.8} parent=5 // pred_region
        %s410 = ssub.s32 %s20, 1
        // Predicated region
        $region61: #{mmdit_forward.8} parent=59 // pred_check
          %p411 = pneg %p218
        $region62: #{mmdit_forward.8} parent=59 // pred_check_branch
          %413 = sbr.rel (%p411) target = $region64
        $region63: #{mmdit_forward.8} parent=59 // pred_region
          %415 = dma.done [#allocation3], 1024
        $region64: #{mmdit_forward.8} parent=59 // pred_fallthru
          _
        // Predicated region
        $region65: #{mmdit_forward.8} parent=59 // pred_check
          %p416 = pneg %p260
        $region66: #{mmdit_forward.8} parent=59 // pred_check_branch
          %418 = sbr.rel (%p416) target = $region68
        $region67: #{mmdit_forward.8} parent=59 // pred_region
          %420 = dma.done [#allocation5], 512
        $region68: #{mmdit_forward.8} parent=59 // pred_fallthru
          _
        %p421 = scmp.lt.s32.totalorder %s25, 1
        %s422 = scalar_select %p421, %s25, 1
        %s423 = smul.addr %s422, 8
        %s424 = scalar_lea.vmem %s0, %s423
        %p425 = pneg %p46
        %p426 = pneg %p43
        %p427 = scmp.lt.s32.totalorder %s25, 1
        %s428 = scalar_select %p427, %s25, 1
        %s429 = smul.addr %s428, 2
        %s430 = smul.addr %s429, 8
        %s431 = scalar_lea.vmem %s1, %s430
        %p432 = pneg %p72
        %p433 = pneg %p69
        %p434 = scmp.lt.s32.totalorder %s25, 1
        %s435 = scalar_select %p434, %s25, 1
        %s436 = scalar_lea.vmem %s2, %s435
        %p437 = pneg %p98
        %p438 = pneg %p95
        %p439 = scmp.lt.s32.totalorder %s25, 1
        %s440 = scalar_select %p439, %s25, 1
        %s441 = scalar_lea.vmem %s3, %s440
        %p442 = pneg %p124
        %p443 = pneg %p121
        %p444 = scmp.lt.s32.totalorder %s25, 1
        %s445 = scalar_select %p444, %s25, 1
        %s446 = scalar_lea.vmem %s4, %s445
        %p447 = pneg %p150
        %p448 = pneg %p147
        %p449 = scmp.lt.s32.totalorder %s25, 1
        %s450 = scalar_select %p449, %s25, 1
        %s451 = scalar_lea.vmem %s5, %s450
        %p452 = pneg %p176
        %p453 = pneg %p173
        %p454 = pneg %p197
        %p455 = pneg %p194
        %p456 = pneg %p218
        %p457 = pneg %p215
        %p458 = pneg %p239
        %p459 = pneg %p236
        %p460 = pneg %p260
        %p461 = pneg %p257
        %p462 = pneg %p286
        %p463 = pneg %p283
        %p464 = scmp.lt.s32.totalorder %s25, 1
        %s465 = scalar_select %p464, %s25, 1
        %s466 = smul.addr %s465, 8
        %s467 = scalar_lea.vmem %s10, %s466
        %p468 = pneg %p312
        %p469 = pneg %p309
        %p470 = scmp.lt.s32.totalorder %s25, 1
        %s471 = scalar_select %p470, %s25, 1
        %s472 = smul.addr %s471, 2
        %s473 = smul.addr %s472, 8
        %s474 = scalar_lea.vmem %s11, %s473
        %p475 = scmp.lt.s32.totalorder %s25, 1
        %s476 = scalar_select %p475, %s25, 1
        %s477 = smul.addr %s476, 8
        %s478 = scalar_lea.vmem %s0, %s477
        %p479 = scmp.lt.s32.totalorder %s25, 1
        %s480 = scalar_select %p479, %s25, 1
        %s481 = smul.addr %s480, 2
        %s482 = smul.addr %s481, 8
        %s483 = scalar_lea.vmem %s1, %s482
        %p484 = scmp.lt.s32.totalorder %s25, 1
        %s485 = scalar_select %p484, %s25, 1
        %s486 = scalar_lea.vmem %s2, %s485
        %p487 = scmp.lt.s32.totalorder %s25, 1
        %s488 = scalar_select %p487, %s25, 1
        %s489 = scalar_lea.vmem %s3, %s488
        %p490 = scmp.lt.s32.totalorder %s25, 1
        %s491 = scalar_select %p490, %s25, 1
        %s492 = scalar_lea.vmem %s4, %s491
        %p493 = scmp.lt.s32.totalorder %s25, 1
        %s494 = scalar_select %p493, %s25, 1
        %s495 = scalar_lea.vmem %s5, %s494
        %p496 = scmp.lt.s32.totalorder %s25, 1
        %s497 = scalar_select %p496, %s25, 1
        %s498 = smul.addr %s497, 8
        %s499 = scalar_lea.vmem %s10, %s498
        %p500 = scmp.lt.s32.totalorder %s25, 1
        %s501 = scalar_select %p500, %s25, 1
        %s502 = smul.addr %s501, 2
        %s503 = smul.addr %s502, 8
        %s504 = scalar_lea.vmem %s11, %s503
        %v506 = vld [vmem:[%s478] sm:$0xff]
        %v507 = vld [vmem:[%s486] sm:$0x1]
        %vm508 = vcmask 261120
        %v509 = vsel %vm508, %v506, 0.0
        %510 = vadd.xlane.f32.xlu0 %v509
        %v511 = vpop.xlane.xlu0 %510
        %v512 = vrcp.pop 32.0
        %v513 = vmul.f32 32.0, %v512
        %v514 = vsub.f32 1.0, %v513
        %v515 = vmul.f32 %v512, %v514
        %v516 = vadd.f32 %v512, %v515
        %vm517 = vweird.f32 %v512
        %v518 = vsel %vm517, %v512, %v516
        %v519 = vmul.f32 %v511, %v518
        %v520 = vsub.f32 %v506, %v519
        %v521 = vmul.f32 %v520, %v520
        %v522 = vsel %vm508, %v521, 0.0
        %523 = vadd.xlane.f32.xlu0 %v522
        %v524 = vpop.xlane.xlu0 %523
        %v525 = vmul.f32 %v524, %v518
        %v526 = vadd.f32 %v525, 1e-05
        %v527 = vrsqrt.pop %v526
        %v528 = vmul.f32 %v527, %v526
        %v529 = vmul.f32 %v528, %v527
        %v530 = vmul.f32 0.5, %v529
        %v531 = vsub.f32 1.5, %v530
        %v532 = vmul.f32 %v527, %v531
        %vm533 = vweird.f32 %v526
        %vm534 = vweird.f32 %v527
        %vm535 = vmor %vm533, %vm534
        %v536 = vsel %vm535, %v527, %v532
        %v537 = vmul.f32 %v520, %v536
        %v539 = vperm.slane %v507, 0
        %v541 = vmul.f32 %v537, %v539
        %542 = vrot.lane.b32.xlu0 %v539, 96
        %v543 = vpop.permute.xlu0 %542
        %v545 = vadd.f32 %v541, %v543
        %v546 = vld [vmem:[%s6] sm:$0xff]
        %v547 = vld [vmem:[%s6 + $0x8] sm:$0xff]
        %v548 = vld [vmem:[%s6 + $0x10] sm:$0xff]
        %v549 = vld [vmem:[%s6 + $0x18] sm:$0xff]
        %v550 = vpack.c.bf16 %v545, %v545
        %v555 = vunpack.c.l.b16 %v546
        %v556 = vunpack.c.h.b16 %v546
        %v557 = vunpack.c.l.b16 %v547
        %v558 = vunpack.c.h.b16 %v547
        %v559 = vunpack.c.l.b16 %v548
        %v560 = vunpack.c.h.b16 %v548
        %v561 = vunpack.c.l.b16 %v549
        %v562 = vunpack.c.h.b16 %v549
        %v563 = vpack.c.b16 %v557, %v555
        %v564 = vpack.c.b16 %v558, %v556
        %v565 = vpack.c.b16 %v561, %v559
        %v566 = vpack.c.b16 %v562, %v560
        %v572 = vsel %vm508, %v550, 0
        %574 = vmatpush.bf16.msra.mxu0 0
        %575 = vmatpush.bf16.msra.mxu0 0
        %576 = vmatpush.bf16.msra.mxu0 0
        %577 = vmatpush.bf16.msra.mxu0 0
        %578 = vmatpush.bf16.msra.mxu0 0
        %579 = vmatpush.bf16.msra.mxu0 0
        %580 = vmatpush.bf16.msra.mxu0 %v565
        %581 = vmatpush.bf16.msra.mxu0 %v563
        %582 = vmatmul.bf16.gmra.mxu0 %v572
        %v583 = vpop.f32.mrf.mxu0
        %v584 = vadd.f32 0.0, %v583
        %v585 = vpop.f32.mrf.mxu0
        %586 = vdwg.mxu0
        %587 = vmatpush.bf16.msra.mxu0 0
        %588 = vmatpush.bf16.msra.mxu0 0
        %589 = vmatpush.bf16.msra.mxu0 0
        %590 = vmatpush.bf16.msra.mxu0 0
        %591 = vmatpush.bf16.msra.mxu0 0
        %592 = vmatpush.bf16.msra.mxu0 0
        %593 = vmatpush.bf16.msra.mxu0 %v566
        %594 = vmatpush.bf16.msra.mxu0 %v564
        %595 = vmatmul.bf16.gmra.mxu0 %v572
        %v596 = vpop.f32.mrf.mxu0
        %v597 = vadd.f32 0.0, %v596
        %v598 = vpop.f32.mrf.mxu0
        %599 = vdwg.mxu0
        %v600 = vld [vmem:[%s483] sm:$0xff]
        %v601 = vld [vmem:[%s483 + $0x8] sm:$0xff]
        %v602 = vld [vmem:[%s489] sm:$0x1]
        %vm603 = vcmask 523264
        %v604 = vsel %vm603, %v600, 0.0
        %605 = vadd.xlane.f32.xlu0 %v604
        %v606 = vpop.xlane.xlu0 %605
        %v607 = vsel %vm603, %v601, 0.0
        %608 = vadd.xlane.f32.xlu0 %v607
        %v609 = vpop.xlane.xlu0 %608
        %v610 = vrcp.pop 64.0
        %v611 = vmul.f32 64.0, %v610
        %v612 = vsub.f32 1.0, %v611
        %v613 = vmul.f32 %v610, %v612
        %v614 = vadd.f32 %v610, %v613
        %vm615 = vweird.f32 %v610
        %v616 = vsel %vm615, %v610, %v614
        %v617 = vmul.f32 %v606, %v616
        %v618 = vmul.f32 %v609, %v616
        %v619 = vsub.f32 %v600, %v617
        %v620 = vsub.f32 %v601, %v618
        %v621 = vmul.f32 %v619, %v619
        %v622 = vmul.f32 %v620, %v620
        %v623 = vsel %vm603, %v621, 0.0
        %624 = vadd.xlane.f32.xlu0 %v623
        %v625 = vpop.xlane.xlu0 %624
        %v626 = vsel %vm603, %v622, 0.0
        %627 = vadd.xlane.f32.xlu0 %v626
        %v628 = vpop.xlane.xlu0 %627
        %v629 = vmul.f32 %v625, %v616
        %v630 = vmul.f32 %v628, %v616
        %v631 = vadd.f32 %v629, 1e-05
        %v632 = vadd.f32 %v630, 1e-05
        %v633 = vrsqrt.pop %v631
        %v634 = vmul.f32 %v633, %v631
        %v635 = vmul.f32 %v634, %v633
        %v636 = vmul.f32 0.5, %v635
        %v637 = vsub.f32 1.5, %v636
        %v638 = vmul.f32 %v633, %v637
        %vm639 = vweird.f32 %v631
        %vm640 = vweird.f32 %v633
        %vm641 = vmor %vm639, %vm640
        %v642 = vsel %vm641, %v633, %v638
        %v643 = vrsqrt.pop %v632
        %v644 = vmul.f32 %v643, %v632
        %v645 = vmul.f32 %v644, %v643
        %v646 = vmul.f32 0.5, %v645
        %v647 = vsub.f32 1.5, %v646
        %v648 = vmul.f32 %v643, %v647
        %vm649 = vweird.f32 %v632
        %vm650 = vweird.f32 %v643
        %vm651 = vmor %vm649, %vm650
        %v652 = vsel %vm651, %v643, %v648
        %v653 = vmul.f32 %v619, %v642
        %v654 = vmul.f32 %v620, %v652
        %v656 = vperm.slane %v602, 0
        %v658 = vmul.f32 %v653, %v656
        %v659 = vmul.f32 %v654, %v656
        %660 = vrot.lane.b32.xlu0 %v656, 64
        %v661 = vpop.permute.xlu0 %660
        %v663 = vadd.f32 %v658, %v661
        %v664 = vadd.f32 %v659, %v661
        %v665 = vld [vmem:[#allocation2] sm:$0xff]
        %v666 = vld [vmem:[#allocation2 + $0x8] sm:$0xff]
        %v667 = vld [vmem:[#allocation2 + $0x10] sm:$0xff]
        %v668 = vld [vmem:[#allocation2 + $0x18] sm:$0xff]
        %v669 = vld [vmem:[#allocation2 + $0x20] sm:$0xff]
        %v670 = vld [vmem:[#allocation2 + $0x28] sm:$0xff]
        %v671 = vld [vmem:[#allocation2 + $0x30] sm:$0xff]
        %v672 = vld [vmem:[#allocation2 + $0x38] sm:$0xff]
        %v673 = vpack.c.bf16 %v664, %v663
        %v682 = vunpack.c.l.b16 %v665
        %v683 = vunpack.c.h.b16 %v665
        %v684 = vunpack.c.l.b16 %v666
        %v685 = vunpack.c.h.b16 %v666
        %v686 = vunpack.c.l.b16 %v667
        %v687 = vunpack.c.h.b16 %v667
        %v688 = vunpack.c.l.b16 %v668
        %v689 = vunpack.c.h.b16 %v668
        %v690 = vunpack.c.l.b16 %v669
        %v691 = vunpack.c.h.b16 %v669
        %v692 = vunpack.c.l.b16 %v670
        %v693 = vunpack.c.h.b16 %v670
        %v694 = vunpack.c.l.b16 %v671
        %v695 = vunpack.c.h.b16 %v671
        %v696 = vunpack.c.l.b16 %v672
        %v697 = vunpack.c.h.b16 %v672
        %v698 = vpack.c.b16 %v684, %v682
        %v699 = vpack.c.b16 %v685, %v683
        %v700 = vpack.c.b16 %v688, %v686
        %v701 = vpack.c.b16 %v689, %v687
        %v702 = vpack.c.b16 %v692, %v690
        %v703 = vpack.c.b16 %v693, %v691
        %v704 = vpack.c.b16 %v696, %v694
        %v705 = vpack.c.b16 %v697, %v695
        %v715 = vsel %vm603, %v673, 0
        %717 = vmatpush.bf16.msra.mxu0 0
        %718 = vmatpush.bf16.msra.mxu0 0
        %719 = vmatpush.bf16.msra.mxu0 0
        %720 = vmatpush.bf16.msra.mxu0 0
        %721 = vmatpush.bf16.msra.mxu0 %v704
        %722 = vmatpush.bf16.msra.mxu0 %v702
        %723 = vmatpush.bf16.msra.mxu0 %v700
        %724 = vmatpush.bf16.msra.mxu0 %v698
        %725 = vmatmul.bf16.gmra.mxu0 %v715
        %v726 = vpop.f32.mrf.mxu0
        %v727 = vadd.f32 0.0, %v726
        %v728 = vpop.f32.mrf.mxu0
        %v729 = vadd.f32 0.0, %v728
        %730 = vdwg.mxu0
        %731 = vmatpush.bf16.msra.mxu0 0
        %732 = vmatpush.bf16.msra.mxu0 0
        %733 = vmatpush.bf16.msra.mxu0 0
        %734 = vmatpush.bf16.msra.mxu0 0
        %735 = vmatpush.bf16.msra.mxu0 %v705
        %736 = vmatpush.bf16.msra.mxu0 %v703
        %737 = vmatpush.bf16.msra.mxu0 %v701
        %738 = vmatpush.bf16.msra.mxu0 %v699
        %739 = vmatmul.bf16.gmra.mxu0 %v715
        %v740 = vpop.f32.mrf.mxu0
        %v741 = vadd.f32 0.0, %v740
        %v742 = vpop.f32.mrf.mxu0
        %v743 = vadd.f32 0.0, %v742
        %744 = vdwg.mxu0
        %v745 = vmul.f32 %v584, 0.25
        %v746 = vmul.f32 %v727, 0.25
        %v747 = vmul.f32 %v729, 0.25
        %v748 = vpack.c.bf16 %v746, %v745
        %v749 = vpack.c.bf16 %v747, %v747
        %v750 = vpack.c.bf16 %v727, %v584
        %v751 = vpack.c.bf16 %v729, %v729
        %v752 = vpack.c.bf16 %v741, %v597
        %v753 = vpack.c.bf16 %v743, %v743
        %756 = vrot.lane.b32.xlu0 %v750, 64
        %v757 = vpop.permute.xlu0 %756
        %758 = vrot.lane.b32.xlu0 %v751, 64
        %v759 = vpop.permute.xlu0 %758
        %vm760 = vcmask 130048
        %v762 = vsel %vm760, %v748, 0
        %v765 = vsel %vm760, %v749, 0
        %v768 = vsel %vm760, %v757, 0
        %v771 = vsel %vm760, %v759, 0
        %773 = vmatpush.bf16.xpose.msra.mxu0 0
        %774 = vmatpush.bf16.xpose.msra.mxu0 0
        %775 = vmatpush.bf16.xpose.msra.mxu0 0
        %776 = vmatpush.bf16.xpose.msra.mxu0 0
        %777 = vmatpush.bf16.xpose.msra.mxu0 0
        %778 = vmatpush.bf16.xpose.msra.mxu0 0
        %779 = vmatpush.bf16.xpose.msra.mxu0 %v771
        %780 = vmatpush.bf16.xpose.msra.mxu0 %v768
        %781 = vmatmul.bf16.gmra.mxu0 %v762
        %v782 = vpop.f32.mrf.mxu0
        %v783 = vadd.f32 0.0, %v782
        %v784 = vpop.f32.mrf.mxu0
        %v785 = vadd.f32 0.0, %v784
        %786 = vmatmul.bf16.gmra.mxu0 %v765
        %v787 = vpop.f32.mrf.mxu0
        %v788 = vadd.f32 0.0, %v787
        %v789 = vpop.f32.mrf.mxu0
        %790 = vdwg.mxu0
        %vm791 = vcmask 195584
        %v792 = vsel %vm791, %v783, -inf
        %793 = vmax.xlane.f32.xlu0 %v792
        %v794 = vpop.xlane.xlu0 %793
        %v795 = vsel %vm791, %v785, -inf
        %796 = vmax.xlane.f32.xlu0 %v795
        %v797 = vpop.xlane.xlu0 %796
        %v798 = vsel %vm791, %v788, -inf
        %799 = vmax.xlane.f32.xlu0 %v798
        %v800 = vpop.xlane.xlu0 %799
        %v801 = vsub.f32 %v783, %v794
        %v802 = vsub.f32 %v785, %v797
        %v803 = vsub.f32 %v788, %v800
        %v804 = vmul.f32 %v801, 1.442695
        %v805 = vpow.pop %v804
        %v806 = vmul.f32 %v802, 1.442695
        %v807 = vpow.pop %v806
        %v808 = vmul.f32 %v803, 1.442695
        %v809 = vpow.pop %v808
        %v810 = vsel %vm791, %v805, 0.0
        %811 = vadd.xlane.f32.xlu0 %v810
        %v812 = vpop.xlane.xlu0 %811
        %v813 = vsel %vm791, %v807, 0.0
        %814 = vadd.xlane.f32.xlu0 %v813
        %v815 = vpop.xlane.xlu0 %814
        %v816 = vsel %vm791, %v809, 0.0
        %817 = vadd.xlane.f32.xlu0 %v816
        %v818 = vpop.xlane.xlu0 %817
        %v819 = vpack.c.bf16 %v807, %v805
        %v820 = vpack.c.bf16 %v809, %v809
        %v822 = vsel %vm791, %v819, 0
        %v825 = vsel %vm791, %v820, 0
        %vm827 = vcmask 1043456
        %v829 = vsel %vm827, %v753, 0
        %831 = vmatpush.bf16.msra.mxu0 0
        %832 = vmatpush.bf16.msra.mxu0 0
        %833 = vmatpush.bf16.msra.mxu0 0
        %834 = vmatpush.bf16.msra.mxu0 0
        %835 = vmatpush.bf16.msra.mxu0 0
        %836 = vmatpush.bf16.msra.mxu0 0
        %837 = vmatpush.bf16.msra.mxu0 %v829
        %838 = vmatpush.bf16.msra.mxu0 %v752
        %839 = vmatmul.bf16.gmra.mxu0 %v822
        %v840 = vpop.f32.mrf.mxu0
        %v841 = vadd.f32 0.0, %v840
        %v842 = vpop.f32.mrf.mxu0
        %v843 = vadd.f32 0.0, %v842
        %844 = vmatmul.bf16.gmra.mxu0 %v825
        %v845 = vpop.f32.mrf.mxu0
        %v846 = vadd.f32 0.0, %v845
        %v847 = vpop.f32.mrf.mxu0
        %848 = vdwg.mxu0
        %v849 = vrcp.pop %v812
        %v850 = vmul.f32 %v812, %v849
        %v851 = vsub.f32 1.0, %v850
        %v852 = vmul.f32 %v849, %v851
        %v853 = vadd.f32 %v849, %v852
        %vm854 = vweird.f32 %v812
        %vm855 = vweird.f32 %v849
        %vm856 = vmor %vm854, %vm855
        %v857 = vsel %vm856, %v849, %v853
        %v858 = vand.u32 2147483647, %v812
        %vm859 = vcmp.eq.f32.partialorder %v858, 8.507059e+37
        %v860 = vand.u32 %v812, 2147483648
        %v861 = vor.u32 1.1754944e-38, %v860
        %v862 = vsel %vm859, %v861, %v857
        %v863 = vrcp.pop %v815
        %v864 = vmul.f32 %v815, %v863
        %v865 = vsub.f32 1.0, %v864
        %v866 = vmul.f32 %v863, %v865
        %v867 = vadd.f32 %v863, %v866
        %vm868 = vweird.f32 %v815
        %vm869 = vweird.f32 %v863
        %vm870 = vmor %vm868, %vm869
        %v871 = vsel %vm870, %v863, %v867
        %v872 = vand.u32 2147483647, %v815
        %vm873 = vcmp.eq.f32.partialorder %v872, 8.507059e+37
        %v874 = vand.u32 %v815, 2147483648
        %v875 = vor.u32 1.1754944e-38, %v874
        %v876 = vsel %vm873, %v875, %v871
        %v877 = vrcp.pop %v818
        %v878 = vmul.f32 %v818, %v877
        %v879 = vsub.f32 1.0, %v878
        %v880 = vmul.f32 %v877, %v879
        %v881 = vadd.f32 %v877, %v880
        %vm882 = vweird.f32 %v818
        %vm883 = vweird.f32 %v877
        %vm884 = vmor %vm882, %vm883
        %v885 = vsel %vm884, %v877, %v881
        %v886 = vand.u32 2147483647, %v818
        %vm887 = vcmp.eq.f32.partialorder %v886, 8.507059e+37
        %v888 = vand.u32 %v818, 2147483648
        %v889 = vor.u32 1.1754944e-38, %v888
        %v890 = vsel %vm887, %v889, %v885
        %v891 = vmul.f32 %v841, %v862
        %v892 = vmul.f32 %v843, %v876
        %v893 = vmul.f32 %v846, %v890
        %896 = vrot.lane.b32.xlu0 %v748, 112
        %v897 = vpop.permute.xlu0 %896
        %898 = vrot.lane.b32.xlu0 %v749, 112
        %v899 = vpop.permute.xlu0 %898
        %900 = vrot.lane.b32.xlu0 %v750, 48
        %v901 = vpop.permute.xlu0 %900
        %902 = vrot.lane.b32.xlu0 %v751, 48
        %v903 = vpop.permute.xlu0 %902
        %v905 = vsel %vm760, %v897, 0
        %v908 = vsel %vm760, %v899, 0
        %v911 = vsel %vm760, %v901, 0
        %v914 = vsel %vm760, %v903, 0
        %916 = vmatpush.bf16.xpose.msra.mxu0 0
        %917 = vmatpush.bf16.xpose.msra.mxu0 0
        %918 = vmatpush.bf16.xpose.msra.mxu0 0
        %919 = vmatpush.bf16.xpose.msra.mxu0 0
        %920 = vmatpush.bf16.xpose.msra.mxu0 0
        %921 = vmatpush.bf16.xpose.msra.mxu0 0
        %922 = vmatpush.bf16.xpose.msra.mxu0 %v914
        %923 = vmatpush.bf16.xpose.msra.mxu0 %v911
        %924 = vmatmul.bf16.gmra.mxu0 %v905
        %v925 = vpop.f32.mrf.mxu0
        %v926 = vadd.f32 0.0, %v925
        %v927 = vpop.f32.mrf.mxu0
        %v928 = vadd.f32 0.0, %v927
        %929 = vmatmul.bf16.gmra.mxu0 %v908
        %v930 = vpop.f32.mrf.mxu0
        %v931 = vadd.f32 0.0, %v930
        %v932 = vpop.f32.mrf.mxu0
        %933 = vdwg.mxu0
        %v934 = vsel %vm791, %v926, -inf
        %935 = vmax.xlane.f32.xlu0 %v934
        %v936 = vpop.xlane.xlu0 %935
        %v937 = vsel %vm791, %v928, -inf
        %938 = vmax.xlane.f32.xlu0 %v937
        %v939 = vpop.xlane.xlu0 %938
        %v940 = vsel %vm791, %v931, -inf
        %941 = vmax.xlane.f32.xlu0 %v940
        %v942 = vpop.xlane.xlu0 %941
        %v943 = vsub.f32 %v926, %v936
        %v944 = vsub.f32 %v928, %v939
        %v945 = vsub.f32 %v931, %v942
        %v946 = vmul.f32 %v943, 1.442695
        %v947 = vpow.pop %v946
        %v948 = vmul.f32 %v944, 1.442695
        %v949 = vpow.pop %v948
        %v950 = vmul.f32 %v945, 1.442695
        %v951 = vpow.pop %v950
        %v952 = vsel %vm791, %v947, 0.0
        %953 = vadd.xlane.f32.xlu0 %v952
        %v954 = vpop.xlane.xlu0 %953
        %v955 = vsel %vm791, %v949, 0.0
        %956 = vadd.xlane.f32.xlu0 %v955
        %v957 = vpop.xlane.xlu0 %956
        %v958 = vsel %vm791, %v951, 0.0
        %959 = vadd.xlane.f32.xlu0 %v958
        %v960 = vpop.xlane.xlu0 %959
        %v961 = vpack.c.bf16 %v949, %v947
        %v962 = vpack.c.bf16 %v951, %v951
        %965 = vrot.lane.b32.xlu0 %v752, 112
        %v966 = vpop.permute.xlu0 %965
        %967 = vrot.lane.b32.xlu0 %v753, 112
        %v968 = vpop.permute.xlu0 %967
        %v971 = vsel %vm791, %v961, 0
        %v974 = vsel %vm791, %v962, 0
        %v977 = vsel %vm827, %v968, 0
        %979 = vmatpush.bf16.msra.mxu0 0
        %980 = vmatpush.bf16.msra.mxu0 0
        %981 = vmatpush.bf16.msra.mxu0 0
        %982 = vmatpush.bf16.msra.mxu0 0
        %983 = vmatpush.bf16.msra.mxu0 0
        %984 = vmatpush.bf16.msra.mxu0 0
        %985 = vmatpush.bf16.msra.mxu0 %v977
        %986 = vmatpush.bf16.msra.mxu0 %v966
        %987 = vmatmul.bf16.gmra.mxu0 %v971
        %v988 = vpop.f32.mrf.mxu0
        %v989 = vadd.f32 0.0, %v988
        %v990 = vpop.f32.mrf.mxu0
        %v991 = vadd.f32 0.0, %v990
        %992 = vmatmul.bf16.gmra.mxu0 %v974
        %v993 = vpop.f32.mrf.mxu0
        %v994 = vadd.f32 0.0, %v993
        %v995 = vpop.f32.mrf.mxu0
        %996 = vdwg.mxu0
        %v997 = vrcp.pop %v954
        %v998 = vmul.f32 %v954, %v997
        %v999 = vsub.f32 1.0, %v998
        %v1000 = vmul.f32 %v997, %v999
        %v1001 = vadd.f32 %v997, %v1000
        %vm1002 = vweird.f32 %v954
        %vm1003 = vweird.f32 %v997
        %vm1004 = vmor %vm1002, %vm1003
        %v1005 = vsel %vm1004, %v997, %v1001
        %v1006 = vand.u32 2147483647, %v954
        %vm1007 = vcmp.eq.f32.partialorder %v1006, 8.507059e+37
        %v1008 = vand.u32 %v954, 2147483648
        %v1009 = vor.u32 1.1754944e-38, %v1008
        %v1010 = vsel %vm1007, %v1009, %v1005
        %v1011 = vrcp.pop %v957
        %v1012 = vmul.f32 %v957, %v1011
        %v1013 = vsub.f32 1.0, %v1012
        %v1014 = vmul.f32 %v1011, %v1013
        %v1015 = vadd.f32 %v1011, %v1014
        %vm1016 = vweird.f32 %v957
        %vm1017 = vweird.f32 %v1011
        %vm1018 = vmor %vm1016, %vm1017
        %v1019 = vsel %vm1018, %v1011, %v1015
        %v1020 = vand.u32 2147483647, %v957
        %vm1021 = vcmp.eq.f32.partialorder %v1020, 8.507059e+37
        %v1022 = vand.u32 %v957, 2147483648
        %v1023 = vor.u32 1.1754944e-38, %v1022
        %v1024 = vsel %vm1021, %v1023, %v1019
        %v1025 = vrcp.pop %v960
        %v1026 = vmul.f32 %v960, %v1025
        %v1027 = vsub.f32 1.0, %v1026
        %v1028 = vmul.f32 %v1025, %v1027
        %v1029 = vadd.f32 %v1025, %v1028
        %vm1030 = vweird.f32 %v960
        %vm1031 = vweird.f32 %v1025
        %vm1032 = vmor %vm1030, %vm1031
        %v1033 = vsel %vm1032, %v1025, %v1029
        %v1034 = vand.u32 2147483647, %v960
        %vm1035 = vcmp.eq.f32.partialorder %v1034, 8.507059e+37
        %v1036 = vand.u32 %v960, 2147483648
        %v1037 = vor.u32 1.1754944e-38, %v1036
        %v1038 = vsel %vm1035, %v1037, %v1033
        %v1039 = vmul.f32 %v989, %v1010
        %v1040 = vmul.f32 %v991, %v1024
        %v1041 = vmul.f32 %v994, %v1038
        %1042 = vrot.lane.b32.xlu0 %v748, 96
        %v1043 = vpop.permute.xlu0 %1042
        %1044 = vrot.lane.b32.xlu0 %v749, 96
        %v1045 = vpop.permute.xlu0 %1044
        %1046 = vrot.lane.b32.xlu0 %v750, 32
        %v1047 = vpop.permute.xlu0 %1046
        %1048 = vrot.lane.b32.xlu0 %v751, 32
        %v1049 = vpop.permute.xlu0 %1048
        %v1051 = vsel %vm760, %v1043, 0
        %v1054 = vsel %vm760, %v1045, 0
        %v1057 = vsel %vm760, %v1047, 0
        %v1060 = vsel %vm760, %v1049, 0
        %1062 = vmatpush.bf16.xpose.msra.mxu0 0
        %1063 = vmatpush.bf16.xpose.msra.mxu0 0
        %1064 = vmatpush.bf16.xpose.msra.mxu0 0
        %1065 = vmatpush.bf16.xpose.msra.mxu0 0
        %1066 = vmatpush.bf16.xpose.msra.mxu0 0
        %1067 = vmatpush.bf16.xpose.msra.mxu0 0
        %1068 = vmatpush.bf16.xpose.msra.mxu0 %v1060
        %1069 = vmatpush.bf16.xpose.msra.mxu0 %v1057
        %1070 = vmatmul.bf16.gmra.mxu0 %v1051
        %v1071 = vpop.f32.mrf.mxu0
        %v1072 = vadd.f32 0.0, %v1071
        %v1073 = vpop.f32.mrf.mxu0
        %v1074 = vadd.f32 0.0, %v1073
        %1075 = vmatmul.bf16.gmra.mxu0 %v1054
        %v1076 = vpop.f32.mrf.mxu0
        %v1077 = vadd.f32 0.0, %v1076
        %v1078 = vpop.f32.mrf.mxu0
        %1079 = vdwg.mxu0
        %v1080 = vsel %vm791, %v1072, -inf
        %1081 = vmax.xlane.f32.xlu0 %v1080
        %v1082 = vpop.xlane.xlu0 %1081
        %v1083 = vsel %vm791, %v1074, -inf
        %1084 = vmax.xlane.f32.xlu0 %v1083
        %v1085 = vpop.xlane.xlu0 %1084
        %v1086 = vsel %vm791, %v1077, -inf
        %1087 = vmax.xlane.f32.xlu0 %v1086
        %v1088 = vpop.xlane.xlu0 %1087
        %v1089 = vsub.f32 %v1072, %v1082
        %v1090 = vsub.f32 %v1074, %v1085
        %v1091 = vsub.f32 %v1077, %v1088
        %v1092 = vmul.f32 %v1089, 1.442695
        %v1093 = vpow.pop %v1092
        %v1094 = vmul.f32 %v1090, 1.442695
        %v1095 = vpow.pop %v1094
        %v1096 = vmul.f32 %v1091, 1.442695
        %v1097 = vpow.pop %v1096
        %v1098 = vsel %vm791, %v1093, 0.0
        %1099 = vadd.xlane.f32.xlu0 %v1098
        %v1100 = vpop.xlane.xlu0 %1099
        %v1101 = vsel %vm791, %v1095, 0.0
        %1102 = vadd.xlane.f32.xlu0 %v1101
        %v1103 = vpop.xlane.xlu0 %1102
        %v1104 = vsel %vm791, %v1097, 0.0
        %1105 = vadd.xlane.f32.xlu0 %v1104
        %v1106 = vpop.xlane.xlu0 %1105
        %v1107 = vpack.c.bf16 %v1095, %v1093
        %v1108 = vpack.c.bf16 %v1097, %v1097
        %1109 = vrot.lane.b32.xlu0 %v752, 96
        %v1110 = vpop.permute.xlu0 %1109
        %1111 = vrot.lane.b32.xlu0 %v753, 96
        %v1112 = vpop.permute.xlu0 %1111
        %v1115 = vsel %vm791, %v1107, 0
        %v1118 = vsel %vm791, %v1108, 0
        %v1121 = vsel %vm827, %v1112, 0
        %1123 = vmatpush.bf16.msra.mxu0 0
        %1124 = vmatpush.bf16.msra.mxu0 0
        %1125 = vmatpush.bf16.msra.mxu0 0
        %1126 = vmatpush.bf16.msra.mxu0 0
        %1127 = vmatpush.bf16.msra.mxu0 0
        %1128 = vmatpush.bf16.msra.mxu0 0
        %1129 = vmatpush.bf16.msra.mxu0 %v1121
        %1130 = vmatpush.bf16.msra.mxu0 %v1110
        %1131 = vmatmul.bf16.gmra.mxu0 %v1115
        %v1132 = vpop.f32.mrf.mxu0
        %v1133 = vadd.f32 0.0, %v1132
        %v1134 = vpop.f32.mrf.mxu0
        %v1135 = vadd.f32 0.0, %v1134
        %1136 = vmatmul.bf16.gmra.mxu0 %v1118
        %v1137 = vpop.f32.mrf.mxu0
        %v1138 = vadd.f32 0.0, %v1137
        %v1139 = vpop.f32.mrf.mxu0
        %1140 = vdwg.mxu0
        %v1141 = vrcp.pop %v1100
        %v1142 = vmul.f32 %v1100, %v1141
        %v1143 = vsub.f32 1.0, %v1142
        %v1144 = vmul.f32 %v1141, %v1143
        %v1145 = vadd.f32 %v1141, %v1144
        %vm1146 = vweird.f32 %v1100
        %vm1147 = vweird.f32 %v1141
        %vm1148 = vmor %vm1146, %vm1147
        %v1149 = vsel %vm1148, %v1141, %v1145
        %v1150 = vand.u32 2147483647, %v1100
        %vm1151 = vcmp.eq.f32.partialorder %v1150, 8.507059e+37
        %v1152 = vand.u32 %v1100, 2147483648
        %v1153 = vor.u32 1.1754944e-38, %v1152
        %v1154 = vsel %vm1151, %v1153, %v1149
        %v1155 = vrcp.pop %v1103
        %v1156 = vmul.f32 %v1103, %v1155
        %v1157 = vsub.f32 1.0, %v1156
        %v1158 = vmul.f32 %v1155, %v1157
        %v1159 = vadd.f32 %v1155, %v1158
        %vm1160 = vweird.f32 %v1103
        %vm1161 = vweird.f32 %v1155
        %vm1162 = vmor %vm1160, %vm1161
        %v1163 = vsel %vm1162, %v1155, %v1159
        %v1164 = vand.u32 2147483647, %v1103
        %vm1165 = vcmp.eq.f32.partialorder %v1164, 8.507059e+37
        %v1166 = vand.u32 %v1103, 2147483648
        %v1167 = vor.u32 1.1754944e-38, %v1166
        %v1168 = vsel %vm1165, %v1167, %v1163
        %v1169 = vrcp.pop %v1106
        %v1170 = vmul.f32 %v1106, %v1169
        %v1171 = vsub.f32 1.0, %v1170
        %v1172 = vmul.f32 %v1169, %v1171
        %v1173 = vadd.f32 %v1169, %v1172
        %vm1174 = vweird.f32 %v1106
        %vm1175 = vweird.f32 %v1169
        %vm1176 = vmor %vm1174, %vm1175
        %v1177 = vsel %vm1176, %v1169, %v1173
        %v1178 = vand.u32 2147483647, %v1106
        %vm1179 = vcmp.eq.f32.partialorder %v1178, 8.507059e+37
        %v1180 = vand.u32 %v1106, 2147483648
        %v1181 = vor.u32 1.1754944e-38, %v1180
        %v1182 = vsel %vm1179, %v1181, %v1177
        %v1183 = vmul.f32 %v1133, %v1154
        %v1184 = vmul.f32 %v1135, %v1168
        %v1185 = vmul.f32 %v1138, %v1182
        %1186 = vrot.lane.b32.xlu0 %v748, 80
        %v1187 = vpop.permute.xlu0 %1186
        %1188 = vrot.lane.b32.xlu0 %v749, 80
        %v1189 = vpop.permute.xlu0 %1188
        %1190 = vrot.lane.b32.xlu0 %v750, 16
        %v1191 = vpop.permute.xlu0 %1190
        %1192 = vrot.lane.b32.xlu0 %v751, 16
        %v1193 = vpop.permute.xlu0 %1192
        %v1195 = vsel %vm760, %v1187, 0
        %v1198 = vsel %vm760, %v1189, 0
        %v1201 = vsel %vm760, %v1191, 0
        %v1204 = vsel %vm760, %v1193, 0
        %1206 = vmatpush.bf16.xpose.msra.mxu0 0
        %1207 = vmatpush.bf16.xpose.msra.mxu0 0
        %1208 = vmatpush.bf16.xpose.msra.mxu0 0
        %1209 = vmatpush.bf16.xpose.msra.mxu0 0
        %1210 = vmatpush.bf16.xpose.msra.mxu0 0
        %1211 = vmatpush.bf16.xpose.msra.mxu0 0
        %1212 = vmatpush.bf16.xpose.msra.mxu0 %v1204
        %1213 = vmatpush.bf16.xpose.msra.mxu0 %v1201
        %1214 = vmatmul.bf16.gmra.mxu0 %v1195
        %v1215 = vpop.f32.mrf.mxu0
        %v1216 = vadd.f32 0.0, %v1215
        %v1217 = vpop.f32.mrf.mxu0
        %v1218 = vadd.f32 0.0, %v1217
        %1219 = vmatmul.bf16.gmra.mxu0 %v1198
        %v1220 = vpop.f32.mrf.mxu0
        %v1221 = vadd.f32 0.0, %v1220
        %v1222 = vpop.f32.mrf.mxu0
        %1223 = vdwg.mxu0
        %v1224 = vsel %vm791, %v1216, -inf
        %1225 = vmax.xlane.f32.xlu0 %v1224
        %v1226 = vpop.xlane.xlu0 %1225
        %v1227 = vsel %vm791, %v1218, -inf
        %1228 = vmax.xlane.f32.xlu0 %v1227
        %v1229 = vpop.xlane.xlu0 %1228
        %v1230 = vsel %vm791, %v1221, -inf
        %1231 = vmax.xlane.f32.xlu0 %v1230
        %v1232 = vpop.xlane.xlu0 %1231
        %v1233 = vsub.f32 %v1216, %v1226
        %v1234 = vsub.f32 %v1218, %v1229
        %v1235 = vsub.f32 %v1221, %v1232
        %v1236 = vmul.f32 %v1233, 1.442695
        %v1237 = vpow.pop %v1236
        %v1238 = vmul.f32 %v1234, 1.442695
        %v1239 = vpow.pop %v1238
        %v1240 = vmul.f32 %v1235, 1.442695
        %v1241 = vpow.pop %v1240
        %v1242 = vsel %vm791, %v1237, 0.0
        %1243 = vadd.xlane.f32.xlu0 %v1242
        %v1244 = vpop.xlane.xlu0 %1243
        %v1245 = vsel %vm791, %v1239, 0.0
        %1246 = vadd.xlane.f32.xlu0 %v1245
        %v1247 = vpop.xlane.xlu0 %1246
        %v1248 = vsel %vm791, %v1241, 0.0
        %1249 = vadd.xlane.f32.xlu0 %v1248
        %v1250 = vpop.xlane.xlu0 %1249
        %v1251 = vpack.c.bf16 %v1239, %v1237
        %v1252 = vpack.c.bf16 %v1241, %v1241
        %1253 = vrot.lane.b32.xlu0 %v752, 80
        %v1254 = vpop.permute.xlu0 %1253
        %1255 = vrot.lane.b32.xlu0 %v753, 80
        %v1256 = vpop.permute.xlu0 %1255
        %v1259 = vsel %vm791, %v1251, 0
        %v1262 = vsel %vm791, %v1252, 0
        %v1265 = vsel %vm827, %v1256, 0
        %1267 = vmatpush.bf16.msra.mxu0 0
        %1268 = vmatpush.bf16.msra.mxu0 0
        %1269 = vmatpush.bf16.msra.mxu0 0
        %1270 = vmatpush.bf16.msra.mxu0 0
        %1271 = vmatpush.bf16.msra.mxu0 0
        %1272 = vmatpush.bf16.msra.mxu0 0
        %1273 = vmatpush.bf16.msra.mxu0 %v1265
        %1274 = vmatpush.bf16.msra.mxu0 %v1254
        %1275 = vmatmul.bf16.gmra.mxu0 %v1259
        %v1276 = vpop.f32.mrf.mxu0
        %v1277 = vadd.f32 0.0, %v1276
        %v1278 = vpop.f32.mrf.mxu0
        %v1279 = vadd.f32 0.0, %v1278
        %1280 = vmatmul.bf16.gmra.mxu0 %v1262
        %v1281 = vpop.f32.mrf.mxu0
        %v1282 = vadd.f32 0.0, %v1281
        %v1283 = vpop.f32.mrf.mxu0
        %1284 = vdwg.mxu0
        %v1285 = vrcp.pop %v1244
        %v1286 = vmul.f32 %v1244, %v1285
        %v1287 = vsub.f32 1.0, %v1286
        %v1288 = vmul.f32 %v1285, %v1287
        %v1289 = vadd.f32 %v1285, %v1288
        %vm1290 = vweird.f32 %v1244
        %vm1291 = vweird.f32 %v1285
        %vm1292 = vmor %vm1290, %vm1291
        %v1293 = vsel %vm1292, %v1285, %v1289
        %v1294 = vand.u32 2147483647, %v1244
        %vm1295 = vcmp.eq.f32.partialorder %v1294, 8.507059e+37
        %v1296 = vand.u32 %v1244, 2147483648
        %v1297 = vor.u32 1.1754944e-38, %v1296
        %v1298 = vsel %vm1295, %v1297, %v1293
        %v1299 = vrcp.pop %v1247
        %v1300 = vmul.f32 %v1247, %v1299
        %v1301 = vsub.f32 1.0, %v1300
        %v1302 = vmul.f32 %v1299, %v1301
        %v1303 = vadd.f32 %v1299, %v1302
        %vm1304 = vweird.f32 %v1247
        %vm1305 = vweird.f32 %v1299
        %vm1306 = vmor %vm1304, %vm1305
        %v1307 = vsel %vm1306, %v1299, %v1303
        %v1308 = vand.u32 2147483647, %v1247
        %vm1309 = vcmp.eq.f32.partialorder %v1308, 8.507059e+37
        %v1310 = vand.u32 %v1247, 2147483648
        %v1311 = vor.u32 1.1754944e-38, %v1310
        %v1312 = vsel %vm1309, %v1311, %v1307
        %v1313 = vrcp.pop %v1250
        %v1314 = vmul.f32 %v1250, %v1313
        %v1315 = vsub.f32 1.0, %v1314
        %v1316 = vmul.f32 %v1313, %v1315
        %v1317 = vadd.f32 %v1313, %v1316
        %vm1318 = vweird.f32 %v1250
        %vm1319 = vweird.f32 %v1313
        %vm1320 = vmor %vm1318, %vm1319
        %v1321 = vsel %vm1320, %v1313, %v1317
        %v1322 = vand.u32 2147483647, %v1250
        %vm1323 = vcmp.eq.f32.partialorder %v1322, 8.507059e+37
        %v1324 = vand.u32 %v1250, 2147483648
        %v1325 = vor.u32 1.1754944e-38, %v1324
        %v1326 = vsel %vm1323, %v1325, %v1321
        %v1327 = vmul.f32 %v1277, %v1298
        %v1328 = vmul.f32 %v1279, %v1312
        %v1329 = vmul.f32 %v1282, %v1326
        %1333 = vrot.lane.b32.xlu0 %v1039, 16
        %v1334 = vpop.permute.xlu0 %1333
        %1335 = vrot.lane.b32.xlu0 %v1040, 16
        %v1336 = vpop.permute.xlu0 %1335
        %1337 = vrot.lane.b32.xlu0 %v1041, 16
        %v1338 = vpop.permute.xlu0 %1337
        %1345 = vrot.lane.b32.xlu0 %v1183, 32
        %v1346 = vpop.permute.xlu0 %1345
        %1347 = vrot.lane.b32.xlu0 %v1184, 32
        %v1348 = vpop.permute.xlu0 %1347
        %1349 = vrot.lane.b32.xlu0 %v1185, 32
        %v1350 = vpop.permute.xlu0 %1349
        %1357 = vrot.lane.b32.xlu0 %v1327, 48
        %v1358 = vpop.permute.xlu0 %1357
        %1359 = vrot.lane.b32.xlu0 %v1328, 48
        %v1360 = vpop.permute.xlu0 %1359
        %1361 = vrot.lane.b32.xlu0 %v1329, 48
        %v1362 = vpop.permute.xlu0 %1361
        %v1366 = vsel %vm760, %v891, %v1334
        %v1367 = vsel %vm760, %v892, %v1336
        %v1368 = vsel %vm760, %v893, %v1338
        %v1369 = vsel %vm508, %v1366, %v1346
        %v1370 = vsel %vm508, %v1367, %v1348
        %v1371 = vsel %vm508, %v1368, %v1350
        %vm1372 = vcmask 392192
        %v1373 = vsel %vm1372, %v1369, %v1358
        %v1374 = vsel %vm1372, %v1370, %v1360
        %v1375 = vsel %vm1372, %v1371, %v1362
        %v1376 = vld [vmem:[%s8] sm:$0xf]
        %v1377 = vld [vmem:[%s8 + $0x4] sm:$0xf]
        %v1378 = vld [vmem:[%s8 + $0x8] sm:$0xf]
        %v1379 = vld [vmem:[%s8 + $0xc] sm:$0xf]
        %v1380 = vld [vmem:[%s8 + $0x10] sm:$0xf]
        %v1381 = vld [vmem:[%s8 + $0x14] sm:$0xf]
        %v1382 = vld [vmem:[%s8 + $0x18] sm:$0xf]
        %v1383 = vld [vmem:[%s8 + $0x1c] sm:$0xf]
        %v1384 = vpack.c.bf16 %v1373, %v1373
        %v1393 = vunpack.c.l.b16 %v1376
        %v1394 = vunpack.c.l.b16 %v1377
        %v1395 = vunpack.c.l.b16 %v1378
        %v1396 = vunpack.c.l.b16 %v1379
        %v1397 = vunpack.c.l.b16 %v1380
        %v1398 = vunpack.c.l.b16 %v1381
        %v1399 = vunpack.c.l.b16 %v1382
        %v1400 = vunpack.c.l.b16 %v1383
        %v1401 = vpack.c.b16 %v1394, %v1393
        %v1402 = vpack.c.b16 %v1396, %v1395
        %v1403 = vpack.c.b16 %v1398, %v1397
        %v1404 = vpack.c.b16 %v1400, %v1399
        %v1410 = vsel %vm603, %v1384, 0
        %1412 = vmatpush.bf16.msra.mxu0 0
        %1413 = vmatpush.bf16.msra.mxu0 0
        %1414 = vmatpush.bf16.msra.mxu0 0
        %1415 = vmatpush.bf16.msra.mxu0 0
        %1416 = vmatpush.bf16.msra.mxu0 %v1404
        %1417 = vmatpush.bf16.msra.mxu0 %v1403
        %1418 = vmatpush.bf16.msra.mxu0 %v1402
        %1419 = vmatpush.bf16.msra.mxu0 %v1401
        %1420 = vmatmul.bf16.gmra.mxu0 %v1410
        %v1421 = vpop.f32.mrf.mxu0
        %v1422 = vadd.f32 0.0, %v1421
        %v1423 = vpop.f32.mrf.mxu0
        %1424 = vdwg.mxu0
        %v1425 = vld [vmem:[%s492] sm:$0x1]
        %v1427 = vperm.slane %v1425, 0
        %v1429 = vmul.f32 %v1422, %v1427
        %v1430 = vadd.f32 %v1429, %v506
        %1431 = vst.msk [vmem:[%s499] sm:$0xff] %vm508, %v1430
        %v1432 = vld [vmem:[#allocation4] sm:$0xf]
        %v1433 = vld [vmem:[#allocation4 + $0x4] sm:$0xf]
        %v1434 = vld [vmem:[#allocation4 + $0x8] sm:$0xf]
        %v1435 = vld [vmem:[#allocation4 + $0xc] sm:$0xf]
        %v1436 = vld [vmem:[#allocation4 + $0x10] sm:$0xf]
        %v1437 = vld [vmem:[#allocation4 + $0x14] sm:$0xf]
        %v1438 = vld [vmem:[#allocation4 + $0x18] sm:$0xf]
        %v1439 = vld [vmem:[#allocation4 + $0x1c] sm:$0xf]
        %v1440 = vpack.c.bf16 %v1375, %v1374
        %v1449 = vunpack.c.l.b16 %v1432
        %v1450 = vunpack.c.l.b16 %v1433
        %v1451 = vunpack.c.l.b16 %v1434
        %v1452 = vunpack.c.l.b16 %v1435
        %v1453 = vunpack.c.l.b16 %v1436
        %v1454 = vunpack.c.l.b16 %v1437
        %v1455 = vunpack.c.l.b16 %v1438
        %v1456 = vunpack.c.l.b16 %v1439
        %v1457 = vpack.c.b16 %v1450, %v1449
        %v1458 = vpack.c.b16 %v1452, %v1451
        %v1459 = vpack.c.b16 %v1454, %v1453
        %v1460 = vpack.c.b16 %v1456, %v1455
        %v1466 = vsel %vm603, %v1440, 0
        %1468 = vmatpush.bf16.msra.mxu0 0
        %1469 = vmatpush.bf16.msra.mxu0 0
        %1470 = vmatpush.bf16.msra.mxu0 0
        %1471 = vmatpush.bf16.msra.mxu0 0
        %1472 = vmatpush.bf16.msra.mxu0 %v1460
        %1473 = vmatpush.bf16.msra.mxu0 %v1459
        %1474 = vmatpush.bf16.msra.mxu0 %v1458
        %1475 = vmatpush.bf16.msra.mxu0 %v1457
        %1476 = vmatmul.bf16.gmra.mxu0 %v1466
        %v1477 = vpop.f32.mrf.mxu0
        %v1478 = vadd.f32 0.0, %v1477
        %v1479 = vpop.f32.mrf.mxu0
        %v1480 = vadd.f32 0.0, %v1479
        %1481 = vdwg.mxu0
        %v1482 = vld [vmem:[%s495] sm:$0x1]
        %v1484 = vperm.slane %v1482, 0
        %v1486 = vmul.f32 %v1478, %v1484
        %v1487 = vmul.f32 %v1480, %v1484
        %v1488 = vld [vmem:[%s483] sm:$0xff]
        %v1489 = vld [vmem:[%s483 + $0x8] sm:$0xff]
        %v1490 = vadd.f32 %v1486, %v1488
        %v1491 = vadd.f32 %v1487, %v1489
        %1492 = vst.msk [vmem:[%s504] sm:$0xff] %vm603, %v1490
        %1493 = vst.msk [vmem:[%s504 + $0x8] sm:$0xff] %vm603, %v1491
        %p1494 = scmp.lt.s32.totalorder %s25, 1
        %s1495 = scalar_select %p1494, %s25, 1
        %s1496 = smul.addr %s1495, 8
        %s1497 = scalar_lea.vmem %s10, %s1496
        %p1498 = scmp.lt.s32.totalorder %s25, 1
        %s1499 = scalar_select %p1498, %s25, 1
        %s1500 = smul.addr %s1499, 2
        %s1501 = smul.addr %s1500, 8
        %s1502 = scalar_lea.vmem %s11, %s1501
        // Predicated region
        $region69: #{mmdit_forward.8} parent=59 // pred_check
          %p1503 = pneg %p283
        $region70: #{mmdit_forward.8} parent=59 // pred_check_branch
          %1505 = sbr.rel (%p1503) target = $region72
        $region71: #{mmdit_forward.8} parent=59 // pred_region
          _
        $region72: #{mmdit_forward.8} parent=59 // pred_fallthru
          _
        // Predicated region
        $region73: #{mmdit_forward.8} parent=59 // pred_check
          %p1506 = pneg %p309
        $region74: #{mmdit_forward.8} parent=59 // pred_check_branch
          %1508 = sbr.rel (%p1506) target = $region76
        $region75: #{mmdit_forward.8} parent=59 // pred_region
          _
        $region76: #{mmdit_forward.8} parent=59 // pred_fallthru
          _
      $region60: #{mmdit_forward.8} parent=5 // pred_fallthru
        _
      %p1509 = scmp.le.s32.totalorder 2, %s20
      // Predicated region
      $region77: #{mmdit_forward.8} parent=5 // pred_check
        %p1510 = pneg %p1509
      $region78: #{mmdit_forward.8} parent=5 // pred_check_branch
        %1512 = sbr.rel (%p1510) target = $region80
      $region79: #{mmdit_forward.8} parent=5 // pred_region
        %s1513 = ssub.s32 %s20, 2
        // Predicated region
        $region81: #{mmdit_forward.8} parent=79 // pred_check
          %p1514 = pneg %p289
        $region82: #{mmdit_forward.8} parent=79 // pred_check_branch
          %1516 = sbr.rel (%p1514) target = $region84
        $region83: #{mmdit_forward.8} parent=79 // pred_region
          %p1517 = scmp.lt.s32.totalorder %s26, 1
          %s1518 = scalar_select %p1517, %s26, 1
          %s1519 = smul.addr %s1518, 8
          %s1520 = scalar_lea.vmem %s10, %s1519
        $region84: #{mmdit_forward.8} parent=79 // pred_fallthru
          _
        // Predicated region
        $region85: #{mmdit_forward.8} parent=79 // pred_check
          %p1521 = pneg %p315
        $region86: #{mmdit_forward.8} parent=79 // pred_check_branch
          %1523 = sbr.rel (%p1521) target = $region88
        $region87: #{mmdit_forward.8} parent=79 // pred_region
          %p1524 = scmp.lt.s32.totalorder %s26, 1
          %s1525 = scalar_select %p1524, %s26, 1
          %s1526 = smul.addr %s1525, 2
          %s1527 = smul.addr %s1526, 8
          %s1528 = scalar_lea.vmem %s11, %s1527
        $region88: #{mmdit_forward.8} parent=79 // pred_fallthru
          _
      $region80: #{mmdit_forward.8} parent=5 // pred_fallthru
        _
    $region6: #{mmdit_forward.8} parent=1 // loop_footer
      %s24 = sadd.s32 1, %s20
    $region7: #{mmdit_forward.8} parent=1 // loop_footer_branch
      %19 = sbr.rel target = $region3
    $region8: #{mmdit_forward.8} parent=1 // loop_exit
      _
    %1529 = vsyncpa [#allocation3], 1
    %s1530 = scalar_lea.sflag [#allocation3], 1
    %1531 = vsyncpa %s1530, 1
    %1532 = vsyncpa [#allocation5], 1

// kernel: mmdit_forward.15
$region0: #{mmdit_forward.15}
  #allocation0 [shape = 'u32[]', space=smem, size = 0x4, offset = 0x4, fixed_abs, tag = 'smem constant byte address 0x4 - core index']
  #allocation1 [shape = 'u32[72,128]{1,0:T(1,128)}', space=vmem, size = 0x9000, scoped, tag = 'internal scratch']
  %s0 = inlined_call_operand.vmem [shape: f32[2,16,64], index: 0, kind: input, shape index: {}]
  %s1 = inlined_call_operand.vmem [shape: f32[1,64], index: 1, kind: input, shape index: {}]
  %s2 = inlined_call_operand.hbm [shape: f32[2,16,64], index: 2, kind: output, shape index: {}]
  %s3 = sld [smem:[#allocation0]]
  $region41: #{mmdit_forward.15} parent=0
    _
  %s5 = ssub.s32 1, %s3
  %s6 = scalar_select 0, %s5, %s3
  $region1: #{mmdit_forward.15} parent=0
    #allocation2 [shape = 'u8[16384]{0}', space=vmem, size = 0x4000, scoped, tag = 'output window, operand 0']
    #allocation3 [shape = 's32[2]{0}', space=sflag, size = 0x8, scoped, tag = 'scoped memory for mmdit_forward.15']
    %7 = vsyncpa [#allocation3], 0
    %s8 = scalar_lea.sflag [#allocation3], 1
    %9 = vsyncpa %s8, 0
    loop: start=0, step=1, limit=4
    $region2: #{mmdit_forward.15} parent=1 // loop_pre_header
      _
    $region3: #{mmdit_forward.15} parent=1 // loop_header
      %s11 = sphi 0, %s15
      %p12 = scmp.ge.s32.totalorder %s11, 4
      %s21 = sphi 0, %s23
      %s24 = sphi 0, %s21
      %s25 = sphi 0, %s24
      %s41 = sphi 0, %s25
      %s45 = sphi 0, %s45
      %s47 = sphi 0, %s45
      %s48 = sphi 0, %s47
      %s62 = sphi 0, %s48
      %s68 = sphi 0, %s70
      %s71 = sphi 0, %s68
      %s72 = sphi 0, %s71
      %s88 = sphi 0, %s72
    $region4: #{mmdit_forward.15} parent=1 // loop_header_branch
      %14 = sbr.rel (%p12) target = $region8
    $region5: #{mmdit_forward.15} parent=1 // loop_body
      %s16 = ssub.s32 %s11, 1
      %s17 = ssub.s32 %s11, 2
      %s18 = sadd.s32 %s11, 1
      %s19 = ssub.s32 %s11, %s18
      %p20 = scmp.eq.s32.totalorder %s19, 0
      %s22 = sadd.s32 %s21, 1
      %s23 = scalar_select %p20, %s21, %s22
      %p26 = pneg %p20
      %p27 = scmp.eq.s32.totalorder %s11, 1
      %p28 = por %p26, %p27
      %p29 = scmp.ne.s32.totalorder %s21, %s24
      %p30 = scmp.eq.s32.totalorder %s11, 0
      %p31 = por %p29, %p30
      %p32 = scmp.ne.s32.totalorder %s21, %s24
      %p33 = scmp.eq.s32.totalorder %s16, 1
      %p34 = por %p32, %p33
      %p35 = scmp.ne.s32.totalorder %s24, %s25
      %p36 = scmp.eq.s32.totalorder %s16, 0
      %p37 = por %p35, %p36
      %p38 = scmp.ne.s32.totalorder %s24, %s25
      %p39 = scmp.eq.s32.totalorder %s17, 1
      %p40 = por %p38, %p39
      %p42 = scmp.ne.s32.totalorder %s25, %s41
      %p43 = scmp.eq.s32.totalorder %s17, 0
      %p44 = por %p42, %p43
      %s46 = sadd.s32 %s45, 1
      %p49 = scmp.eq.s32.totalorder %s11, 1
      %p50 = scmp.ne.s32.totalorder %s45, %s47
      %p51 = scmp.eq.s32.totalorder %s11, 0
      %p52 = por %p50, %p51
      %p53 = scmp.ne.s32.totalorder %s45, %s47
      %p54 = scmp.eq.s32.totalorder %s16, 1
      %p55 = por %p53, %p54
      %p56 = scmp.ne.s32.totalorder %s47, %s48
      %p57 = scmp.eq.s32.totalorder %s16, 0
      %p58 = por %p56, %p57
      %p59 = scmp.ne.s32.totalorder %s47, %s48
      %p60 = scmp.eq.s32.totalorder %s17, 1
      %p61 = por %p59, %p60
      %p63 = scmp.ne.s32.totalorder %s48, %s62
      %p64 = scmp.eq.s32.totalorder %s17, 0
      %p65 = por %p63, %p64
      %s66 = ssub.s32 %s11, %s18
      %p67 = scmp.eq.s32.totalorder %s66, 0
      %s69 = sadd.s32 %s68, 1
      %s70 = scalar_select %p67, %s68, %s69
      %p73 = pneg %p67
      %p74 = scmp.eq.s32.totalorder %s11, 1
      %p75 = por %p73, %p74
      %p76 = scmp.ne.s32.totalorder %s68, %s71
      %p77 = scmp.eq.s32.totalorder %s11, 0
      %p78 = por %p76, %p77
      %p79 = scmp.ne.s32.totalorder %s68, %s71
      %p80 = scmp.eq.s32.totalorder %s16, 1
      %p81 = por %p79, %p80
      %p82 = scmp.ne.s32.totalorder %s71, %s72
      %p83 = scmp.eq.s32.totalorder %s16, 0
      %p84 = por %p82, %p83
      %p85 = scmp.ne.s32.totalorder %s71, %s72
      %p86 = scmp.eq.s32.totalorder %s17, 1
      %p87 = por %p85, %p86
      %p89 = scmp.ne.s32.totalorder %s72, %s88
      %p90 = scmp.eq.s32.totalorder %s17, 0
      %p91 = por %p89, %p90
      %p92 = scmp.le.s32.totalorder 1, %s11
      %p93 = scmp.lt.s32.totalorder %s11, 3
      %p94 = pnand %p92, %p93
      %p95 = pneg %p94
      // Predicated region
      $region9: #{mmdit_forward.15} parent=5 // pred_check
        _
      $region10: #{mmdit_forward.15} parent=5 // pred_check_branch
        %97 = sbr.rel (%p94) target = $region12
      $region11: #{mmdit_forward.15} parent=5 // pred_region
        %s98 = ssub.s32 %s11, 1
        // Predicated region
        $region13: #{mmdit_forward.15} parent=11 // pred_check
          %p99 = pneg %p58
        $region14: #{mmdit_forward.15} parent=11 // pred_check_branch
          %101 = sbr.rel (%p99) target = $region16
        $region15: #{mmdit_forward.15} parent=11 // pred_region
          _
        $region16: #{mmdit_forward.15} parent=11 // pred_fallthru
          _
      $region12: #{mmdit_forward.15} parent=5 // pred_fallthru
        _
      %p102 = scmp.lt.s32.totalorder %s11, 2
      // Predicated region
      $region17: #{mmdit_forward.15} parent=5 // pred_check
        %p103 = pneg %p102
      $region18: #{mmdit_forward.15} parent=5 // pred_check_branch
        %105 = sbr.rel (%p103) target = $region20
      $region19: #{mmdit_forward.15} parent=5 // pred_region
        // Predicated region
        $region21: #{mmdit_forward.15} parent=19 // pred_check
          %p106 = pneg %p31
        $region22: #{mmdit_forward.15} parent=19 // pred_check_branch
          %108 = sbr.rel (%p106) target = $region24
        $region23: #{mmdit_forward.15} parent=19 // pred_region
          %p109 = scmp.lt.s32.totalorder %s11, 1
          %s110 = scalar_select %p109, %s11, 1
          %s111 = smul.addr %s110, 2
          %s112 = smul.addr %s111, 8
          %s113 = scalar_lea.vmem %s0, %s112
        $region24: #{mmdit_forward.15} parent=19 // pred_fallthru
          _
      $region20: #{mmdit_forward.15} parent=5 // pred_fallthru
        _
      %p114 = scmp.le.s32.totalorder 1, %s11
      %p115 = scmp.lt.s32.totalorder %s11, 3
      %p116 = pnand %p114, %p115
      %p117 = pneg %p116
      // Predicated region
      $region25: #{mmdit_forward.15} parent=5 // pred_check
        _
      $region26: #{mmdit_forward.15} parent=5 // pred_check_branch
        %119 = sbr.rel (%p116) target = $region28
      $region27: #{mmdit_forward.15} parent=5 // pred_region
        %s120 = ssub.s32 %s11, 1
        %p121 = scmp.lt.s32.totalorder %s16, 1
        %s122 = scalar_select %p121, %s16, 1
        %s123 = smul.addr %s122, 2
        %s124 = smul.addr %s123, 8
        %s125 = scalar_lea.vmem %s0, %s124
        %p126 = pneg %p37
        %p127 = pneg %p34
        %p128 = pneg %p58
        %p129 = pneg %p55
        %p130 = pneg %p84
        %p131 = pneg %p81
        %s132 = sand.u32 %s71, 1
        %s133 = scalar_lea.sflag [#allocation3], %s132
        %s134 = sand.u32 %s71, 1
        %s135 = smul.addr %s134, 16
        %s136 = scalar_lea.vmem [#allocation2], %s135
        %p137 = scmp.lt.s32.totalorder %s16, 1
        %s138 = scalar_select %p137, %s16, 1
        %s139 = smul.addr %s138, 2
        %s140 = smul.addr %s139, 8
        %s141 = scalar_lea.vmem %s0, %s140
        %v142 = vld [vmem:[%s141] sm:$0xff]
        %v143 = vld [vmem:[%s141 + $0x8] sm:$0xff]
        %v144 = vmul.f32 %v142, %v142
        %v145 = vmul.f32 %v143, %v143
        %vm146 = vcmask 523264
        %v147 = vsel %vm146, %v144, 0.0
        %148 = vadd.xlane.f32.xlu0 %v147
        %v149 = vpop.xlane.xlu0 %148
        %v150 = vsel %vm146, %v145, 0.0
        %151 = vadd.xlane.f32.xlu0 %v150
        %v152 = vpop.xlane.xlu0 %151
        %v153 = vrsqrt.pop %v149
        %v154 = vmul.f32 %v153, %v149
        %v155 = vmul.f32 %v154, %v153
        %v156 = vmul.f32 0.5, %v155
        %v157 = vsub.f32 1.5, %v156
        %v158 = vmul.f32 %v153, %v157
        %v159 = vmul.f32 %v149, %v158
        %vm160 = vcmp.eq.f32.partialorder %v149, inf
        %v161 = vsel %vm160, %v149, %v159
        %vm162 = vcmp.eq.f32.partialorder %v149, 0.0
        %v163 = vand.u32 %v149, 2147483648
        %v164 = vsel %vm162, %v163, %v161
        %v165 = vrsqrt.pop %v152
        %v166 = vmul.f32 %v165, %v152
        %v167 = vmul.f32 %v166, %v165
        %v168 = vmul.f32 0.5, %v167
        %v169 = vsub.f32 1.5, %v168
        %v170 = vmul.f32 %v165, %v169
        %v171 = vmul.f32 %v152, %v170
        %vm172 = vcmp.eq.f32.partialorder %v152, inf
        %v173 = vsel %vm172, %v152, %v171
        %vm174 = vcmp.eq.f32.partialorder %v152, 0.0
        %v175 = vand.u32 %v152, 2147483648
        %v176 = vsel %vm174, %v175, %v173
        %v177 = vmax.f32 %v164, 1e-12
        %v178 = vmax.f32 %v176, 1e-12
        %v179 = vrcp.pop %v177
        %v180 = vmul.f32 %v177, %v179
        %v181 = vsub.f32 1.0, %v180
        %v182 = vmul.f32 %v179, %v181
        %v183 = vadd.f32 %v179, %v182
        %vm184 = vweird.f32 %v177
        %vm185 = vweird.f32 %v179
        %vm186 = vmor %vm184, %vm185
        %v187 = vsel %vm186, %v179, %v183
        %v188 = vand.u32 2147483647, %v177
        %vm189 = vcmp.eq.f32.partialorder %v188, 8.507059e+37
        %v190 = vand.u32 %v177, 2147483648
        %v191 = vor.u32 1.1754944e-38, %v190
        %v192 = vsel %vm189, %v191, %v187
        %v193 = vmul.f32 %v142, %v192
        %v194 = vrcp.pop %v178
        %v195 = vmul.f32 %v178, %v194
        %v196 = vsub.f32 1.0, %v195
        %v197 = vmul.f32 %v194, %v196
        %v198 = vadd.f32 %v194, %v197
        %vm199 = vweird.f32 %v178
        %vm200 = vweird.f32 %v194
        %vm201 = vmor %vm199, %vm200
        %v202 = vsel %vm201, %v194, %v198
        %v203 = vand.u32 2147483647, %v178
        %vm204 = vcmp.eq.f32.partialorder %v203, 8.507059e+37
        %v205 = vand.u32 %v178, 2147483648
        %v206 = vor.u32 1.1754944e-38, %v205
        %v207 = vsel %vm204, %v206, %v202
        %v208 = vmul.f32 %v143, %v207
        %v209 = vmul.f32 %v193, 8.0
        %v210 = vmul.f32 %v208, 8.0
        %v211 = vld [vmem:[%s1] sm:$0x1]
        %v212 = vadd.f32 %v211, 1.0
        %v214 = vperm.slane %v212, 0
        %v216 = vmul.f32 %v209, %v214
        %v217 = vmul.f32 %v210, %v214
        %218 = vst.msk [vmem:[%s136] sm:$0xff] %vm146, %v216
        %219 = vst.msk [vmem:[%s136 + $0x8] sm:$0xff] %vm146, %v217
        %s220 = sand.u32 %s71, 1
        %s221 = scalar_lea.sflag [#allocation3], %s220
        %s222 = sand.u32 %s71, 1
        %s223 = smul.addr %s222, 16
        %s224 = scalar_lea.vmem [#allocation2], %s223
        // Predicated region
        $region29: #{mmdit_forward.15} parent=27 // pred_check
          %p225 = pneg %p81
        $region30: #{mmdit_forward.15} parent=27 // pred_check_branch
          %227 = sbr.rel (%p225) target = $region32
        $region31: #{mmdit_forward.15} parent=27 // pred_region
          %229 = vsyncadd %s221, 0
          %s230 = smul.addr %s16, 2
          %s231 = smul.addr %s230, 8
          %s232 = scalar_lea.hbm %s2, %s231
          %s233 = sshll.u32 %s224, 4
          %s234 = int_to_ptr.vmem [resolvable:$true] %s233
          %s235 = sshll.u32 %s232, 4
          %s236 = int_to_ptr.hbm [resolvable:$true] %s235
          %241 = dma.vmem_to_hbm [thread:$0]  %s234, 256, %s236, %s221, 128, 128, 8
        $region32: #{mmdit_forward.15} parent=27 // pred_fallthru
          _
      $region28: #{mmdit_forward.15} parent=5 // pred_fallthru
        _
      %p242 = scmp.le.s32.totalorder 2, %s11
      // Predicated region
      $region33: #{mmdit_forward.15} parent=5 // pred_check
        %p243 = pneg %p242
      $region34: #{mmdit_forward.15} parent=5 // pred_check_branch
        %245 = sbr.rel (%p243) target = $region36
      $region35: #{mmdit_forward.15} parent=5 // pred_region
        %s246 = ssub.s32 %s11, 2
        // Predicated region
        $region37: #{mmdit_forward.15} parent=35 // pred_check
          %p247 = pneg %p87
        $region38: #{mmdit_forward.15} parent=35 // pred_check_branch
          %249 = sbr.rel (%p247) target = $region40
        $region39: #{mmdit_forward.15} parent=35 // pred_region
          %s250 = sand.u32 %s72, 1
          %s251 = scalar_lea.sflag [#allocation3], %s250
          %s252 = sand.u32 %s72, 1
          %s253 = smul.addr %s252, 16
          %s254 = scalar_lea.vmem [#allocation2], %s253
          %256 = dma.done %s251, 256
        $region40: #{mmdit_forward.15} parent=35 // pred_fallthru
          _
      $region36: #{mmdit_forward.15} parent=5 // pred_fallthru
        _
    $region6: #{mmdit_forward.15} parent=1 // loop_footer
      %s15 = sadd.s32 1, %s11
    $region7: #{mmdit_forward.15} parent=1 // loop_footer_branch
      %10 = sbr.rel target = $region3
    $region8: #{mmdit_forward.15} parent=1 // loop_exit
      _
    %257 = vsyncpa [#allocation3], 1
    %s258 = scalar_lea.sflag [#allocation3], 1
    %259 = vsyncpa %s258, 1

// kernel: mmdit_forward.14
$region0: #{mmdit_forward.14}
  #allocation0 [shape = 'u32[]', space=smem, size = 0x4, offset = 0x4, fixed_abs, tag = 'smem constant byte address 0x4 - core index']
  #allocation1 [shape = 'u32[72,128]{1,0:T(1,128)}', space=vmem, size = 0x9000, scoped, tag = 'internal scratch']
  %s0 = inlined_call_operand.vmem [shape: f32[2,8,32], index: 0, kind: input, shape index: {}]
  %s1 = inlined_call_operand.vmem [shape: f32[1,32], index: 1, kind: input, shape index: {}]
  %s2 = inlined_call_operand.hbm [shape: f32[2,8,32], index: 2, kind: output, shape index: {}]
  %s3 = sld [smem:[#allocation0]]
  $region41: #{mmdit_forward.14} parent=0
    _
  %s5 = ssub.s32 1, %s3
  %s6 = scalar_select 0, %s5, %s3
  $region1: #{mmdit_forward.14} parent=0
    #allocation2 [shape = 'u8[8192]{0}', space=vmem, size = 0x2000, scoped, tag = 'output window, operand 0']
    #allocation3 [shape = 's32[2]{0}', space=sflag, size = 0x8, scoped, tag = 'scoped memory for mmdit_forward.14']
    %7 = vsyncpa [#allocation3], 0
    %s8 = scalar_lea.sflag [#allocation3], 1
    %9 = vsyncpa %s8, 0
    loop: start=0, step=1, limit=4
    $region2: #{mmdit_forward.14} parent=1 // loop_pre_header
      _
    $region3: #{mmdit_forward.14} parent=1 // loop_header
      %s11 = sphi 0, %s15
      %p12 = scmp.ge.s32.totalorder %s11, 4
      %s21 = sphi 0, %s23
      %s24 = sphi 0, %s21
      %s25 = sphi 0, %s24
      %s41 = sphi 0, %s25
      %s45 = sphi 0, %s45
      %s47 = sphi 0, %s45
      %s48 = sphi 0, %s47
      %s62 = sphi 0, %s48
      %s68 = sphi 0, %s70
      %s71 = sphi 0, %s68
      %s72 = sphi 0, %s71
      %s88 = sphi 0, %s72
    $region4: #{mmdit_forward.14} parent=1 // loop_header_branch
      %14 = sbr.rel (%p12) target = $region8
    $region5: #{mmdit_forward.14} parent=1 // loop_body
      %s16 = ssub.s32 %s11, 1
      %s17 = ssub.s32 %s11, 2
      %s18 = sadd.s32 %s11, 1
      %s19 = ssub.s32 %s11, %s18
      %p20 = scmp.eq.s32.totalorder %s19, 0
      %s22 = sadd.s32 %s21, 1
      %s23 = scalar_select %p20, %s21, %s22
      %p26 = pneg %p20
      %p27 = scmp.eq.s32.totalorder %s11, 1
      %p28 = por %p26, %p27
      %p29 = scmp.ne.s32.totalorder %s21, %s24
      %p30 = scmp.eq.s32.totalorder %s11, 0
      %p31 = por %p29, %p30
      %p32 = scmp.ne.s32.totalorder %s21, %s24
      %p33 = scmp.eq.s32.totalorder %s16, 1
      %p34 = por %p32, %p33
      %p35 = scmp.ne.s32.totalorder %s24, %s25
      %p36 = scmp.eq.s32.totalorder %s16, 0
      %p37 = por %p35, %p36
      %p38 = scmp.ne.s32.totalorder %s24, %s25
      %p39 = scmp.eq.s32.totalorder %s17, 1
      %p40 = por %p38, %p39
      %p42 = scmp.ne.s32.totalorder %s25, %s41
      %p43 = scmp.eq.s32.totalorder %s17, 0
      %p44 = por %p42, %p43
      %s46 = sadd.s32 %s45, 1
      %p49 = scmp.eq.s32.totalorder %s11, 1
      %p50 = scmp.ne.s32.totalorder %s45, %s47
      %p51 = scmp.eq.s32.totalorder %s11, 0
      %p52 = por %p50, %p51
      %p53 = scmp.ne.s32.totalorder %s45, %s47
      %p54 = scmp.eq.s32.totalorder %s16, 1
      %p55 = por %p53, %p54
      %p56 = scmp.ne.s32.totalorder %s47, %s48
      %p57 = scmp.eq.s32.totalorder %s16, 0
      %p58 = por %p56, %p57
      %p59 = scmp.ne.s32.totalorder %s47, %s48
      %p60 = scmp.eq.s32.totalorder %s17, 1
      %p61 = por %p59, %p60
      %p63 = scmp.ne.s32.totalorder %s48, %s62
      %p64 = scmp.eq.s32.totalorder %s17, 0
      %p65 = por %p63, %p64
      %s66 = ssub.s32 %s11, %s18
      %p67 = scmp.eq.s32.totalorder %s66, 0
      %s69 = sadd.s32 %s68, 1
      %s70 = scalar_select %p67, %s68, %s69
      %p73 = pneg %p67
      %p74 = scmp.eq.s32.totalorder %s11, 1
      %p75 = por %p73, %p74
      %p76 = scmp.ne.s32.totalorder %s68, %s71
      %p77 = scmp.eq.s32.totalorder %s11, 0
      %p78 = por %p76, %p77
      %p79 = scmp.ne.s32.totalorder %s68, %s71
      %p80 = scmp.eq.s32.totalorder %s16, 1
      %p81 = por %p79, %p80
      %p82 = scmp.ne.s32.totalorder %s71, %s72
      %p83 = scmp.eq.s32.totalorder %s16, 0
      %p84 = por %p82, %p83
      %p85 = scmp.ne.s32.totalorder %s71, %s72
      %p86 = scmp.eq.s32.totalorder %s17, 1
      %p87 = por %p85, %p86
      %p89 = scmp.ne.s32.totalorder %s72, %s88
      %p90 = scmp.eq.s32.totalorder %s17, 0
      %p91 = por %p89, %p90
      %p92 = scmp.le.s32.totalorder 1, %s11
      %p93 = scmp.lt.s32.totalorder %s11, 3
      %p94 = pnand %p92, %p93
      %p95 = pneg %p94
      // Predicated region
      $region9: #{mmdit_forward.14} parent=5 // pred_check
        _
      $region10: #{mmdit_forward.14} parent=5 // pred_check_branch
        %97 = sbr.rel (%p94) target = $region12
      $region11: #{mmdit_forward.14} parent=5 // pred_region
        %s98 = ssub.s32 %s11, 1
        // Predicated region
        $region13: #{mmdit_forward.14} parent=11 // pred_check
          %p99 = pneg %p58
        $region14: #{mmdit_forward.14} parent=11 // pred_check_branch
          %101 = sbr.rel (%p99) target = $region16
        $region15: #{mmdit_forward.14} parent=11 // pred_region
          _
        $region16: #{mmdit_forward.14} parent=11 // pred_fallthru
          _
      $region12: #{mmdit_forward.14} parent=5 // pred_fallthru
        _
      %p102 = scmp.lt.s32.totalorder %s11, 2
      // Predicated region
      $region17: #{mmdit_forward.14} parent=5 // pred_check
        %p103 = pneg %p102
      $region18: #{mmdit_forward.14} parent=5 // pred_check_branch
        %105 = sbr.rel (%p103) target = $region20
      $region19: #{mmdit_forward.14} parent=5 // pred_region
        // Predicated region
        $region21: #{mmdit_forward.14} parent=19 // pred_check
          %p106 = pneg %p31
        $region22: #{mmdit_forward.14} parent=19 // pred_check_branch
          %108 = sbr.rel (%p106) target = $region24
        $region23: #{mmdit_forward.14} parent=19 // pred_region
          %p109 = scmp.lt.s32.totalorder %s11, 1
          %s110 = scalar_select %p109, %s11, 1
          %s111 = smul.addr %s110, 8
          %s112 = scalar_lea.vmem %s0, %s111
        $region24: #{mmdit_forward.14} parent=19 // pred_fallthru
          _
      $region20: #{mmdit_forward.14} parent=5 // pred_fallthru
        _
      %p113 = scmp.le.s32.totalorder 1, %s11
      %p114 = scmp.lt.s32.totalorder %s11, 3
      %p115 = pnand %p113, %p114
      %p116 = pneg %p115
      // Predicated region
      $region25: #{mmdit_forward.14} parent=5 // pred_check
        _
      $region26: #{mmdit_forward.14} parent=5 // pred_check_branch
        %118 = sbr.rel (%p115) target = $region28
      $region27: #{mmdit_forward.14} parent=5 // pred_region
        %s119 = ssub.s32 %s11, 1
        %p120 = scmp.lt.s32.totalorder %s16, 1
        %s121 = scalar_select %p120, %s16, 1
        %s122 = smul.addr %s121, 8
        %s123 = scalar_lea.vmem %s0, %s122
        %p124 = pneg %p37
        %p125 = pneg %p34
        %p126 = pneg %p58
        %p127 = pneg %p55
        %p128 = pneg %p84
        %p129 = pneg %p81
        %s130 = sand.u32 %s71, 1
        %s131 = scalar_lea.sflag [#allocation3], %s130
        %s132 = sand.u32 %s71, 1
        %s133 = smul.addr %s132, 8
        %s134 = scalar_lea.vmem [#allocation2], %s133
        %p135 = scmp.lt.s32.totalorder %s16, 1
        %s136 = scalar_select %p135, %s16, 1
        %s137 = smul.addr %s136, 8
        %s138 = scalar_lea.vmem %s0, %s137
        %v139 = vld [vmem:[%s138] sm:$0xff]
        %v140 = vmul.f32 %v139, %v139
        %vm141 = vcmask 261120
        %v142 = vsel %vm141, %v140, 0.0
        %143 = vadd.xlane.f32.xlu0 %v142
        %v144 = vpop.xlane.xlu0 %143
        %v145 = vrsqrt.pop %v144
        %v146 = vmul.f32 %v145, %v144
        %v147 = vmul.f32 %v146, %v145
        %v148 = vmul.f32 0.5, %v147
        %v149 = vsub.f32 1.5, %v148
        %v150 = vmul.f32 %v145, %v149
        %v151 = vmul.f32 %v144, %v150
        %vm152 = vcmp.eq.f32.partialorder %v144, inf
        %v153 = vsel %vm152, %v144, %v151
        %vm154 = vcmp.eq.f32.partialorder %v144, 0.0
        %v155 = vand.u32 %v144, 2147483648
        %v156 = vsel %vm154, %v155, %v153
        %v157 = vmax.f32 %v156, 1e-12
        %v158 = vrcp.pop %v157
        %v159 = vmul.f32 %v157, %v158
        %v160 = vsub.f32 1.0, %v159
        %v161 = vmul.f32 %v158, %v160
        %v162 = vadd.f32 %v158, %v161
        %vm163 = vweird.f32 %v157
        %vm164 = vweird.f32 %v158
        %vm165 = vmor %vm163, %vm164
        %v166 = vsel %vm165, %v158, %v162
        %v167 = vand.u32 2147483647, %v157
        %vm168 = vcmp.eq.f32.partialorder %v167, 8.507059e+37
        %v169 = vand.u32 %v157, 2147483648
        %v170 = vor.u32 1.1754944e-38, %v169
        %v171 = vsel %vm168, %v170, %v166
        %v172 = vmul.f32 %v139, %v171
        %v173 = vmul.f32 %v172, 5.656854
        %v174 = vld [vmem:[%s1] sm:$0x1]
        %v175 = vadd.f32 %v174, 1.0
        %v177 = vperm.slane %v175, 0
        %v179 = vmul.f32 %v173, %v177
        %180 = vst.msk [vmem:[%s134] sm:$0xff] %vm141, %v179
        %s181 = sand.u32 %s71, 1
        %s182 = scalar_lea.sflag [#allocation3], %s181
        %s183 = sand.u32 %s71, 1
        %s184 = smul.addr %s183, 8
        %s185 = scalar_lea.vmem [#allocation2], %s184
        // Predicated region
        $region29: #{mmdit_forward.14} parent=27 // pred_check
          %p186 = pneg %p81
        $region30: #{mmdit_forward.14} parent=27 // pred_check_branch
          %188 = sbr.rel (%p186) target = $region32
        $region31: #{mmdit_forward.14} parent=27 // pred_region
          %190 = vsyncadd %s182, 0
          %s191 = smul.addr %s16, 8
          %s192 = scalar_lea.hbm %s2, %s191
          %s194 = sshll.u32 %s185, 4
          %s195 = int_to_ptr.vmem [resolvable:$true] %s194
          %s196 = sshll.u32 %s192, 4
          %s197 = int_to_ptr.hbm [resolvable:$true] %s196
          %199 = dma.vmem_to_hbm [thread:$0]  %s195, 128, %s197, %s182
        $region32: #{mmdit_forward.14} parent=27 // pred_fallthru
          _
      $region28: #{mmdit_forward.14} parent=5 // pred_fallthru
        _
      %p200 = scmp.le.s32.totalorder 2, %s11
      // Predicated region
      $region33: #{mmdit_forward.14} parent=5 // pred_check
        %p201 = pneg %p200
      $region34: #{mmdit_forward.14} parent=5 // pred_check_branch
        %203 = sbr.rel (%p201) target = $region36
      $region35: #{mmdit_forward.14} parent=5 // pred_region
        %s204 = ssub.s32 %s11, 2
        // Predicated region
        $region37: #{mmdit_forward.14} parent=35 // pred_check
          %p205 = pneg %p87
        $region38: #{mmdit_forward.14} parent=35 // pred_check_branch
          %207 = sbr.rel (%p205) target = $region40
        $region39: #{mmdit_forward.14} parent=35 // pred_region
          %s208 = sand.u32 %s72, 1
          %s209 = scalar_lea.sflag [#allocation3], %s208
          %s210 = sand.u32 %s72, 1
          %s211 = smul.addr %s210, 8
          %s212 = scalar_lea.vmem [#allocation2], %s211
          %214 = dma.done %s209, 128
        $region40: #{mmdit_forward.14} parent=35 // pred_fallthru
          _
      $region36: #{mmdit_forward.14} parent=5 // pred_fallthru
        _
    $region6: #{mmdit_forward.14} parent=1 // loop_footer
      %s15 = sadd.s32 1, %s11
    $region7: #{mmdit_forward.14} parent=1 // loop_footer_branch
      %10 = sbr.rel target = $region3
    $region8: #{mmdit_forward.14} parent=1 // loop_exit
      _
    %215 = vsyncpa [#allocation3], 1
    %s216 = scalar_lea.sflag [#allocation3], 1
    %217 = vsyncpa %s216, 1

</llo_original>
